<compile_context>
chip_gen: v7x
topology: tpu7x:2x2x1
jax: 0.10.0
libtpu: 0.0.40
codegen_flags: <defaults>
</compile_context>

<pallas_src>
import functools

import jax
import jax.numpy as jnp
from jax import lax
from jax.experimental import pallas as pl
from jax.experimental.pallas import tpu as pltpu

BN_EPS = 1e-5
LANE = 128


# --------------------------------------------------------------------------- #
# small helpers
# --------------------------------------------------------------------------- #
def _round_up(n, m=LANE):
    return ((n + m - 1) // m) * m


def _pad_axis(a, axis, to):
    pad = to - a.shape[axis]
    if pad == 0:
        return a
    widths = [(0, 0)] * a.ndim
    widths[axis] = (0, pad)
    return jnp.pad(a, widths)


@functools.lru_cache(maxsize=None)
def _vmem_limit_bytes():
    # Never request the full physical VMEM (v7x: 64 MiB/TC); leave headroom
    # for compiler scratch and the BlockSpec double buffers.
    try:
        cap = int(pltpu.get_tpu_info().vmem_capacity_bytes)
    except Exception:
        cap = 64 * 1024 * 1024
    return max(cap - 16 * 1024 * 1024, 32 * 1024 * 1024)


def _cparams():
    return pltpu.CompilerParams(
        dimension_semantics=("parallel",),          # shard tiles across v7x TCs
        vmem_limit_bytes=_vmem_limit_bytes())


def _cost(flops, bytes_accessed):
    return pl.CostEstimate(flops=int(flops), transcendentals=0,
                           bytes_accessed=int(bytes_accessed))


def _pick_tile_b(B, HW, target_rows=512):
    """Images per tile: biggest divisor of B with ~target_rows rows, but keep
    at least 2 tiles so the grid can use both v7x TensorCores."""
    best = 1
    for d in range(1, B + 1):
        if B % d == 0 and d * HW <= target_rows:
            best = d
    if B >= 2 and B // best < 2:
        cands = [d for d in range(1, B) if B % d == 0 and B // d >= 2]
        best = max(cands) if cands else 1
    return best


def _adaptive_avg_pool2d_nchw(x, out_hw):
    B, C, H, W = x.shape
    if H == out_hw and W == out_hw:
        return x
    # TODO(synk): only the evenly-divisible adaptive-pool case is implemented.
    kh, kw = H // out_hw, W // out_hw
    return x.reshape(B, C, out_hw, kh, out_hw, kw).mean(axis=(3, 5))


def _fold_bn(stats, gamma, beta, count):
    """Fold batch stats + affine into per-channel scale/shift (plain JAX)."""
    s = jnp.sum(stats, axis=0)                                  # [2, C]
    mean = s[0:1] / count                                       # [1, C]
    var = jnp.maximum(s[1:2] / count - mean * mean, 0.0)        # guard rsqrt
    scale = gamma * lax.rsqrt(var + BN_EPS)
    shift = beta - mean * scale
    return scale, shift


# --------------------------------------------------------------------------- #
# kernels
# --------------------------------------------------------------------------- #
def _store_stats(st_ref, y):
    s1 = jnp.sum(y, axis=0, keepdims=True)
    s2 = jnp.sum(y * y, axis=0, keepdims=True)
    st_ref[...] = jnp.concatenate([s1, s2], axis=0)[None]       # (1, 2, C)


def _bn_relu(y_ref, sc_ref, sh_ref):
    # folded BatchNorm (scale/shift precomputed from batch stats) + ReLU, f32
    return jnp.maximum(y_ref[...].astype(jnp.float32) * sc_ref[...] + sh_ref[...], 0.0)


def _conv1x1_stats_kernel(x_ref, w_ref, y_ref, st_ref):
    """stage 1, pass 1: y1_pre = x @ w1, per-channel sum/sumsq partials."""
    y = jnp.dot(x_ref[...], w_ref[...], preferred_element_type=jnp.float32)
    _store_stats(st_ref, y)
    y_ref[...] = y.astype(y_ref.dtype)


def _bn_conv3x3_stats_kernel(y1_ref, sc_ref, sh_ref, w2_ref, y_ref, st_ref,
                             *, TB, H, W, C):
    """stage 2: BN1+ReLU, conv3x3 (3 accumulating row-group matmuls), stats."""
    rows = TB * H * W
    # bf16 *before* building the shifted patches -> halves the im2col slab.
    y1 = _bn_relu(y1_ref, sc_ref, sh_ref).astype(jnp.bfloat16).reshape(TB, H, W, C)

    def shift_h(a, s):
        if s > 0:
            return jnp.concatenate([a[:, s:], jnp.zeros((TB, s, W, C), a.dtype)], axis=1)
        if s < 0:
            return jnp.concatenate([jnp.zeros((TB, -s, W, C), a.dtype), a[:, :H + s]], axis=1)
        return a

    def shift_w(a, s):
        if s > 0:
            return jnp.concatenate([a[:, :, s:], jnp.zeros((TB, H, s, C), a.dtype)], axis=2)
        if s < 0:
            return jnp.concatenate([jnp.zeros((TB, H, -s, C), a.dtype), a[:, :, :W + s]], axis=2)
        return a

    # One accumulating K=3*C matmul per kernel row dy (peak im2col 3x smaller
    # than a single K=9*C matmul; K=3*C still fills the MXU at real widths).
    acc = jnp.zeros((rows, C), jnp.float32)
    for g, dy in enumerate((-1, 0, 1)):
        band = shift_h(y1, dy)
        cols = jnp.concatenate([shift_w(band, dx) for dx in (-1, 0, 1)], axis=3)
        acc = acc + jnp.dot(cols.reshape(rows, 3 * C), w2_ref[g],
                            preferred_element_type=jnp.float32)
    _store_stats(st_ref, acc)
    y_ref[...] = acc.astype(y_ref.dtype)


def _bn_conv1x1_stats_kernel(y2_ref, sc_ref, sh_ref, w_ref, y_ref, st_ref):
    """stage 3: BN2+ReLU, conv1x1(mid -> t_n), stats."""
    y2 = _bn_relu(y2_ref, sc_ref, sh_ref).astype(jnp.bfloat16)
    y3 = jnp.dot(y2, w_ref[...], preferred_element_type=jnp.float32)
    _store_stats(st_ref, y3)
    y_ref[...] = y3.astype(y_ref.dtype)


def _bn_pool_cls_kernel(y3_ref, sc_ref, sh_ref, wc_ref, bc_ref,
                        trans_ref, pred_ref, *, TB, HW, C):
    """stage 4: BN3+ReLU -> trans (bf16), avg-pool, reused teacher classifier."""
    y3 = _bn_relu(y3_ref, sc_ref, sh_ref)
    trans_ref[...] = y3.astype(trans_ref.dtype)
    pooled = jnp.sum(y3.reshape(TB, HW, C), axis=1) * jnp.float32(1.0 / HW)
    pred = jnp.dot(pooled.astype(jnp.bfloat16), wc_ref[...],
                   preferred_element_type=jnp.float32) + bc_ref[...]
    pred_ref[...] = pred[None].astype(pred_ref.dtype)


# --------------------------------------------------------------------------- #
# parameter packing (done ONCE, outside the jitted forward)
# --------------------------------------------------------------------------- #
def pack_params(*, w1, w2, w3, g1, b1, g2, b2, g3, b3, wc, bc):
    """PyTorch-layout f32 weights -> lane-padded bf16 kernel layouts."""
    mid, s_n = w1.shape[0], w1.shape[1]
    t_n = w3.shape[0]
    n_cls = wc.shape[0]
    s_np, midp, t_np, n_clsp = map(_round_up, (s_n, mid, t_n, n_cls))

    # conv1x1 (s_n -> mid): OIHW [mid, s_n, 1, 1] -> [s_n_p, mid_p]
    w1m = _pad_axis(_pad_axis(w1[:, :, 0, 0].T, 0, s_np), 1, midp)
    # conv3x3 (mid -> mid): OIHW -> [ky, kx, Cin, Cout] -> row-group [3, 3*mid_p, mid_p]
    w2m = jnp.transpose(w2, (2, 3, 1, 0))
    w2m = _pad_axis(_pad_axis(w2m, 2, midp), 3, midp).reshape(3, 3 * midp, midp)
    # conv1x1 (mid -> t_n): OIHW [t_n, mid, 1, 1] -> [mid_p, t_n_p]
    w3m = _pad_axis(_pad_axis(w3[:, :, 0, 0].T, 0, midp), 1, t_np)
    # reused teacher classifier nn.Linear(t_n, n_cls): [n_cls, t_n] -> [t_n_p, n_cls_p]
    wcm = _pad_axis(_pad_axis(wc.T, 0, t_np), 1, n_clsp)

    def bnp(g, b, cp):
        return (_pad_axis(jnp.asarray(g, jnp.float32).reshape(1, -1), 1, cp),
                _pad_axis(jnp.asarray(b, jnp.float32).reshape(1, -1), 1, cp))

    g1p, b1p = bnp(g1, b1, midp)
    g2p, b2p = bnp(g2, b2, midp)
    g3p, b3p = bnp(g3, b3, t_np)
    bcp = _pad_axis(jnp.asarray(bc, jnp.float32).reshape(1, -1), 1, n_clsp)

    return dict(w1=w1m.astype(jnp.bfloat16), w2=w2m.astype(jnp.bfloat16),
                w3=w3m.astype(jnp.bfloat16), wc=wcm.astype(jnp.bfloat16),
                g1=g1p, b1=b1p, g2=g2p, b2=b2p, g3=g3p, b3=b3p, bc=bcp)


# --------------------------------------------------------------------------- #
# forward
# --------------------------------------------------------------------------- #
@functools.partial(jax.jit, static_argnames=("t_n", "n_cls"))
def simkd_forward(feat_s, feat_t, params, *, t_n, n_cls):
    # spatial alignment (plain-JAX glue, same branch logic as the PyTorch code)
    s_H, t_H = feat_s.shape[2], feat_t.shape[2]
    if s_H > t_H:
        source = _adaptive_avg_pool2d_nchw(feat_s, t_H)
        target = feat_t
    else:
        source = feat_s
        target = _adaptive_avg_pool2d_nchw(feat_t, s_H)
    trans_feat_t = target

    B, s_n, H, W = source.shape
    HW = H * W
    M = B * HW

    s_np, midp = params["w1"].shape
    t_np = params["w3"].shape[1]
    n_clsp = params["wc"].shape[1]
    assert s_np >= s_n

    TB = _pick_tile_b(B, HW)
    nb = B // TB
    rows = TB * HW
    assert rows % 8 == 0, "tile rows must be a multiple of 8 (sublane constraint)"

    # NCHW -> NHWC -> [M, s_n] bf16, zero-padded to 128 lanes (fused XLA op).
    x = jnp.transpose(source, (0, 2, 3, 1)).reshape(M, s_n).astype(jnp.bfloat16)
    if s_np != s_n:
        x = jnp.pad(x, ((0, 0), (0, s_np - s_n)))

    cp = _cparams()

    def row_spec(c):
        return pl.BlockSpec((rows, c), lambda i: (i, 0))

    def full_spec(shape):
        nd = len(shape)
        return pl.BlockSpec(shape, lambda i: (0,) * nd)

    stat_mid = pl.BlockSpec((1, 2, midp), lambda i: (i, 0, 0))
    stat_t = pl.BlockSpec((1, 2, t_np), lambda i: (i, 0, 0))

    # ---- stage 1: conv1x1(s_n -> mid) + BN1 stats --------------------------
    y1_pre, st1 = pl.pallas_call(
        _conv1x1_stats_kernel, grid=(nb,),
        in_specs=[row_spec(s_np), full_spec((s_np, midp))],
        out_specs=(row_spec(midp), stat_mid),
        out_shape=(jax.ShapeDtypeStruct((M, midp), jnp.bfloat16),
                   jax.ShapeDtypeStruct((nb, 2, midp), jnp.float32)),
        compiler_params=cp,
        cost_estimate=_cost(2 * M * s_np * midp,
                            2 * M * (s_np + midp) + 2 * s_np * midp),
    )(x, params["w1"])
    sc1, sh1 = _fold_bn(st1, params["g1"], params["b1"], M)

    # ---- stage 2: BN1+ReLU, conv3x3(mid -> mid) + BN2 stats ----------------
    y2_pre, st2 = pl.pallas_call(
        functools.partial(_bn_conv3x3_stats_kernel, TB=TB, H=H, W=W, C=midp),
        grid=(nb,),
        in_specs=[row_spec(midp), full_spec((1, midp)), full_spec((1, midp)),
                  full_spec((3, 3 * midp, midp))],
        out_specs=(row_spec(midp), stat_mid),
        out_shape=(jax.ShapeDtypeStruct((M, midp), jnp.bfloat16),
                   jax.ShapeDtypeStruct((nb, 2, midp), jnp.float32)),
        compiler_params=cp,
        cost_estimate=_cost(2 * M * 9 * midp * midp + 4 * M * midp,
                            4 * M * midp + 18 * midp * midp),
    )(y1_pre, sc1, sh1, params["w2"])
    sc2, sh2 = _fold_bn(st2, params["g2"], params["b2"], M)

    # ---- stage 3: BN2+ReLU, conv1x1(mid -> t_n) + BN3 stats ----------------
    y3_pre, st3 = pl.pallas_call(
        _bn_conv1x1_stats_kernel, grid=(nb,),
        in_specs=[row_spec(midp), full_spec((1, midp)), full_spec((1, midp)),
                  full_spec((midp, t_np))],
        out_specs=(row_spec(t_np), stat_t),
        out_shape=(jax.ShapeDtypeStruct((M, t_np), jnp.bfloat16),
                   jax.ShapeDtypeStruct((nb, 2, t_np), jnp.float32)),
        compiler_params=cp,
        cost_estimate=_cost(2 * M * midp * t_np,
                            2 * M * (midp + t_np) + 2 * midp * t_np),
    )(y2_pre, sc2, sh2, params["w3"])
    sc3, sh3 = _fold_bn(st3, params["g3"], params["b3"], M)

    # ---- stage 4: BN3+ReLU -> trans, avg-pool, reused teacher classifier ---
    trans_flat, pred = pl.pallas_call(
        functools.partial(_bn_pool_cls_kernel, TB=TB, HW=HW, C=t_np),
        grid=(nb,),
        in_specs=[row_spec(t_np), full_spec((1, t_np)), full_spec((1, t_np)),
                  full_spec((t_np, n_clsp)), full_spec((1, n_clsp))],
        out_specs=(row_spec(t_np),
                   pl.BlockSpec((1, TB, n_clsp), lambda i: (i, 0, 0))),
        out_shape=(jax.ShapeDtypeStruct((M, t_np), jnp.bfloat16),
                   jax.ShapeDtypeStruct((nb, TB, n_clsp), jnp.float32)),
        compiler_params=cp,
        cost_estimate=_cost(2 * B * t_np * n_clsp + 4 * M * t_np,
                            4 * M * t_np + 2 * t_np * n_clsp),
    )(y3_pre, sc3, sh3, params["wc"], params["bc"])

    # Kernel emits trans as bf16 NHWC; the NCHW/f32 relayout is kept only for
    # PyTorch output parity (one fused XLA transpose+cast).
    # TODO(synk): let the downstream distillation loss consume bf16 NHWC
    # directly to save this extra HBM pass over the largest tensor.
    trans = trans_flat[:, :t_n].reshape(B, H, W, t_n)
    trans_feat_s = jnp.transpose(trans, (0, 3, 1, 2)).astype(jnp.float32)
    pred_feat_s = pred.reshape(B, n_clsp)[:, :n_cls]
    return trans_feat_s, trans_feat_t, pred_feat_s


# --------------------------------------------------------------------------- #
# demo
# --------------------------------------------------------------------------- #
if __name__ == "__main__":
    B, s_n, t_n, factor = 2, 16, 32, 2
    Hs = Ht = 8
    n_cls = 10
    mid = t_n // factor

    key = jax.random.PRNGKey(0)
    ks = jax.random.split(key, 13)

    feat_s = jax.random.normal(ks[0], (B, s_n, Hs, Hs), jnp.float32)
    feat_t = jax.random.normal(ks[1], (B, t_n, Ht, Ht), jnp.float32)

    # PyTorch-layout weights (OIHW convs, nn.Linear [out, in]); converted to
    # padded bf16 kernel layouts ONCE, outside the jitted forward.
    w1 = 0.2 * jax.random.normal(ks[2], (mid, s_n, 1, 1), jnp.float32)
    w2 = 0.1 * jax.random.normal(ks[3], (mid, mid, 3, 3), jnp.float32)
    w3 = 0.2 * jax.random.normal(ks[4], (t_n, mid, 1, 1), jnp.float32)
    g1 = 1.0 + 0.1 * jax.random.normal(ks[5], (mid,), jnp.float32)
    b1 = 0.1 * jax.random.normal(ks[6], (mid,), jnp.float32)
    g2 = 1.0 + 0.1 * jax.random.normal(ks[7], (mid,), jnp.float32)
    b2 = 0.1 * jax.random.normal(ks[8], (mid,), jnp.float32)
    g3 = 1.0 + 0.1 * jax.random.normal(ks[9], (t_n,), jnp.float32)
    b3 = 0.1 * jax.random.normal(ks[10], (t_n,), jnp.float32)
    wc = 0.2 * jax.random.normal(ks[11], (n_cls, t_n), jnp.float32)
    bc = 0.05 * jax.random.normal(ks[12], (n_cls,), jnp.float32)

    params = pack_params(w1=w1, w2=w2, w3=w3, g1=g1, b1=b1, g2=g2, b2=b2,
                         g3=g3, b3=b3, wc=wc, bc=bc)

    trans_feat_s, trans_feat_t, pred_feat_s = simkd_forward(
        feat_s, feat_t, params, t_n=t_n, n_cls=n_cls)
    jax.block_until_ready((trans_feat_s, trans_feat_t, pred_feat_s))

    assert trans_feat_s.shape == (B, t_n, Hs, Hs)
    assert trans_feat_t.shape == (B, t_n, Ht, Ht)
    assert pred_feat_s.shape == (B, n_cls)
    assert bool(jnp.all(jnp.isfinite(trans_feat_s)))
    assert bool(jnp.all(jnp.isfinite(pred_feat_s)))
    print("KERNEL_OK")
</pallas_src>

<mosaic_0001>
module attributes {stable_mosaic.version = 11 : i64} {
  func.func @_conv1x1_stats_kernel(%arg0: i32, %arg1: memref<64x128xbf16, #tpu.memory_space<vmem>>, %arg2: memref<128x128xbf16, #tpu.memory_space<vmem>>, %arg3: memref<64x128xbf16, #tpu.memory_space<vmem>>, %arg4: memref<1x2x128xf32, #tpu.memory_space<vmem>>) attributes {dimension_semantics = [#tpu.dimension_semantics<parallel>], iteration_bounds = array<i64: 2>, scalar_prefetch = 0 : i64, scratch_operands = 0 : i64, tpu.core_type = #tpu.core_type<tc>, window_params = [{transform_indices = @transform_0, window_bounds = array<i64: 64, 128>}, {pipeline_mode = #tpu.pipeline_mode<synchronous>, transform_indices = @transform_1, window_bounds = array<i64: 128, 128>}, {transform_indices = @transform_2, window_bounds = array<i64: 64, 128>}, {transform_indices = @transform_3, window_bounds = array<i64: 1, 2, 128>}]} {
    %c0 = arith.constant 0 : index
    %c0_0 = arith.constant 0 : index
    %0 = vector.load %arg1[%c0, %c0_0] : memref<64x128xbf16, #tpu.memory_space<vmem>>, vector<64x128xbf16>
    %c0_1 = arith.constant 0 : index
    %c0_2 = arith.constant 0 : index
    %1 = vector.load %arg2[%c0_1, %c0_2] : memref<128x128xbf16, #tpu.memory_space<vmem>>, vector<128x128xbf16>
    %cst = arith.constant dense<0.000000e+00> : vector<64x128xf32>
    %2 = tpu.matmul %0, %1, %cst {dimension_numbers = #tpu.dot_dimension_numbers<[1], [0], [0], [1], [0, 0, 1, 1], [], []>} : vector<64x128xbf16>, vector<128x128xbf16>, vector<64x128xf32> -> vector<64x128xf32>
    %cst_3 = arith.constant dense<0.000000e+00> : vector<128xf32>
    %3 = vector.multi_reduction <add>, %2, %cst_3 [0] : vector<64x128xf32> to vector<128xf32>
    %4 = vector.shape_cast %3 : vector<128xf32> to vector<1x128xf32>
    %5 = arith.mulf %2, %2 : vector<64x128xf32>
    %cst_4 = arith.constant dense<0.000000e+00> : vector<128xf32>
    %6 = vector.multi_reduction <add>, %5, %cst_4 [0] : vector<64x128xf32> to vector<128xf32>
    %7 = vector.shape_cast %6 : vector<128xf32> to vector<1x128xf32>
    %8 = tpu.concatenate %4, %7 in 0 : vector<1x128xf32>, vector<1x128xf32> -> vector<2x128xf32>
    %9 = vector.shape_cast %8 : vector<2x128xf32> to vector<1x2x128xf32>
    %c0_5 = arith.constant 0 : index
    %c0_6 = arith.constant 0 : index
    %c0_7 = arith.constant 0 : index
    %10 = vector.load %arg4[%c0_5, %c0_6, %c0_7] : memref<1x2x128xf32, #tpu.memory_space<vmem>>, vector<1x2x128xf32>
    tpu.vector_store %arg4[%c0_5, %c0_6, %c0_7], %9 {strides = array<i32>} : memref<1x2x128xf32, #tpu.memory_space<vmem>>, vector<1x2x128xf32>,
    %11 = arith.truncf %2 : vector<64x128xf32> to vector<64x128xbf16>
    %c0_8 = arith.constant 0 : index
    %c0_9 = arith.constant 0 : index
    %12 = vector.load %arg3[%c0_8, %c0_9] : memref<64x128xbf16, #tpu.memory_space<vmem>>, vector<64x128xbf16>
    tpu.vector_store %arg3[%c0_8, %c0_9], %11 {strides = array<i32>} : memref<64x128xbf16, #tpu.memory_space<vmem>>, vector<64x128xbf16>,
    return
  }
  func.func @transform_0(%arg0: i32) -> (i32, i32) {
    %c0_i32 = arith.constant 0 : i32
    %c0_i32_0 = arith.constant 0 : i32
    return %arg0, %c0_i32 : i32, i32
  }
  func.func @transform_1(%arg0: i32) -> (i32, i32) {
    %c0_i32 = arith.constant 0 : i32
    %c0_i32_0 = arith.constant 0 : i32
    %c0_i32_1 = arith.constant 0 : i32
    return %c0_i32, %c0_i32_0 : i32, i32
  }
  func.func @transform_2(%arg0: i32) -> (i32, i32) {
    %c0_i32 = arith.constant 0 : i32
    %c0_i32_0 = arith.constant 0 : i32
    return %arg0, %c0_i32 : i32, i32
  }
  func.func @transform_3(%arg0: i32) -> (i32, i32, i32) {
    %c0_i32 = arith.constant 0 : i32
    %c0_i32_0 = arith.constant 0 : i32
    %c0_i32_1 = arith.constant 0 : i32
    return %arg0, %c0_i32, %c0_i32_0 : i32, i32, i32
  }
}

module attributes {stable_mosaic.version = 11 : i64} {
  func.func @_bn_conv1x1_stats_kernel(%arg0: i32, %arg1: memref<64x128xbf16, #tpu.memory_space<vmem>>, %arg2: memref<1x128xf32, #tpu.memory_space<vmem>>, %arg3: memref<1x128xf32, #tpu.memory_space<vmem>>, %arg4: memref<128x128xbf16, #tpu.memory_space<vmem>>, %arg5: memref<64x128xbf16, #tpu.memory_space<vmem>>, %arg6: memref<1x2x128xf32, #tpu.memory_space<vmem>>) attributes {dimension_semantics = [#tpu.dimension_semantics<parallel>], iteration_bounds = array<i64: 2>, scalar_prefetch = 0 : i64, scratch_operands = 0 : i64, tpu.core_type = #tpu.core_type<tc>, window_params = [{transform_indices = @transform_0, window_bounds = array<i64: 64, 128>}, {pipeline_mode = #tpu.pipeline_mode<synchronous>, transform_indices = @transform_1, window_bounds = array<i64: 1, 128>}, {pipeline_mode = #tpu.pipeline_mode<synchronous>, transform_indices = @transform_2, window_bounds = array<i64: 1, 128>}, {pipeline_mode = #tpu.pipeline_mode<synchronous>, transform_indices = @transform_3, window_bounds = array<i64: 128, 128>}, {transform_indices = @transform_4, window_bounds = array<i64: 64, 128>}, {transform_indices = @transform_5, window_bounds = array<i64: 1, 2, 128>}]} {
    %c0 = arith.constant 0 : index
    %c0_0 = arith.constant 0 : index
    %0 = vector.load %arg1[%c0, %c0_0] : memref<64x128xbf16, #tpu.memory_space<vmem>>, vector<64x128xbf16>
    %1 = arith.extf %0 : vector<64x128xbf16> to vector<64x128xf32>
    %c0_1 = arith.constant 0 : index
    %c0_2 = arith.constant 0 : index
    %2 = vector.load %arg2[%c0_1, %c0_2] : memref<1x128xf32, #tpu.memory_space<vmem>>, vector<1x128xf32>
    %3 = vector.broadcast %2 : vector<1x128xf32> to vector<64x128xf32>
    %4 = arith.mulf %1, %3 : vector<64x128xf32>
    %c0_3 = arith.constant 0 : index
    %c0_4 = arith.constant 0 : index
    %5 = vector.load %arg3[%c0_3, %c0_4] : memref<1x128xf32, #tpu.memory_space<vmem>>, vector<1x128xf32>
    %6 = vector.broadcast %5 : vector<1x128xf32> to vector<64x128xf32>
    %7 = arith.addf %4, %6 : vector<64x128xf32>
    %cst = arith.constant 0.000000e+00 : f32
    %8 = vector.broadcast %cst : f32 to vector<64x128xf32>
    %9 = arith.maximumf %7, %8 : vector<64x128xf32>
    %10 = arith.truncf %9 : vector<64x128xf32> to vector<64x128xbf16>
    %c0_5 = arith.constant 0 : index
    %c0_6 = arith.constant 0 : index
    %11 = vector.load %arg4[%c0_5, %c0_6] : memref<128x128xbf16, #tpu.memory_space<vmem>>, vector<128x128xbf16>
    %cst_7 = arith.constant dense<0.000000e+00> : vector<64x128xf32>
    %12 = tpu.matmul %10, %11, %cst_7 {dimension_numbers = #tpu.dot_dimension_numbers<[1], [0], [0], [1], [0, 0, 1, 1], [], []>} : vector<64x128xbf16>, vector<128x128xbf16>, vector<64x128xf32> -> vector<64x128xf32>
    %cst_8 = arith.constant dense<0.000000e+00> : vector<128xf32>
    %13 = vector.multi_reduction <add>, %12, %cst_8 [0] : vector<64x128xf32> to vector<128xf32>
    %14 = vector.shape_cast %13 : vector<128xf32> to vector<1x128xf32>
    %15 = arith.mulf %12, %12 : vector<64x128xf32>
    %cst_9 = arith.constant dense<0.000000e+00> : vector<128xf32>
    %16 = vector.multi_reduction <add>, %15, %cst_9 [0] : vector<64x128xf32> to vector<128xf32>
    %17 = vector.shape_cast %16 : vector<128xf32> to vector<1x128xf32>
    %18 = tpu.concatenate %14, %17 in 0 : vector<1x128xf32>, vector<1x128xf32> -> vector<2x128xf32>
    %19 = vector.shape_cast %18 : vector<2x128xf32> to vector<1x2x128xf32>
    %c0_10 = arith.constant 0 : index
    %c0_11 = arith.constant 0 : index
    %c0_12 = arith.constant 0 : index
    %20 = vector.load %arg6[%c0_10, %c0_11, %c0_12] : memref<1x2x128xf32, #tpu.memory_space<vmem>>, vector<1x2x128xf32>
    tpu.vector_store %arg6[%c0_10, %c0_11, %c0_12], %19 {strides = array<i32>} : memref<1x2x128xf32, #tpu.memory_space<vmem>>, vector<1x2x128xf32>,
    %21 = arith.truncf %12 : vector<64x128xf32> to vector<64x128xbf16>
    %c0_13 = arith.constant 0 : index
    %c0_14 = arith.constant 0 : index
    %22 = vector.load %arg5[%c0_13, %c0_14] : memref<64x128xbf16, #tpu.memory_space<vmem>>, vector<64x128xbf16>
    tpu.vector_store %arg5[%c0_13, %c0_14], %21 {strides = array<i32>} : memref<64x128xbf16, #tpu.memory_space<vmem>>, vector<64x128xbf16>,
    return
  }
  func.func @transform_0(%arg0: i32) -> (i32, i32) {
    %c0_i32 = arith.constant 0 : i32
    %c0_i32_0 = arith.constant 0 : i32
    return %arg0, %c0_i32 : i32, i32
  }
  func.func @transform_1(%arg0: i32) -> (i32, i32) {
    %c0_i32 = arith.constant 0 : i32
    %c0_i32_0 = arith.constant 0 : i32
    %c0_i32_1 = arith.constant 0 : i32
    return %c0_i32, %c0_i32_0 : i32, i32
  }
  func.func @transform_2(%arg0: i32) -> (i32, i32) {
    %c0_i32 = arith.constant 0 : i32
    %c0_i32_0 = arith.constant 0 : i32
    %c0_i32_1 = arith.constant 0 : i32
    return %c0_i32, %c0_i32_0 : i32, i32
  }
  func.func @transform_3(%arg0: i32) -> (i32, i32) {
    %c0_i32 = arith.constant 0 : i32
    %c0_i32_0 = arith.constant 0 : i32
    %c0_i32_1 = arith.constant 0 : i32
    return %c0_i32, %c0_i32_0 : i32, i32
  }
  func.func @transform_4(%arg0: i32) -> (i32, i32) {
    %c0_i32 = arith.constant 0 : i32
    %c0_i32_0 = arith.constant 0 : i32
    return %arg0, %c0_i32 : i32, i32
  }
  func.func @transform_5(%arg0: i32) -> (i32, i32, i32) {
    %c0_i32 = arith.constant 0 : i32
    %c0_i32_0 = arith.constant 0 : i32
    %c0_i32_1 = arith.constant 0 : i32
    return %arg0, %c0_i32, %c0_i32_0 : i32, i32, i32
  }
}

module attributes {stable_mosaic.version = 11 : i64} {
  func.func @_bn_conv3x3_stats_kernel(%arg0: i32, %arg1: memref<64x128xbf16, #tpu.memory_space<vmem>>, %arg2: memref<1x128xf32, #tpu.memory_space<vmem>>, %arg3: memref<1x128xf32, #tpu.memory_space<vmem>>, %arg4: memref<3x384x128xbf16, #tpu.memory_space<vmem>>, %arg5: memref<64x128xbf16, #tpu.memory_space<vmem>>, %arg6: memref<1x2x128xf32, #tpu.memory_space<vmem>>) attributes {dimension_semantics = [#tpu.dimension_semantics<parallel>], iteration_bounds = array<i64: 2>, scalar_prefetch = 0 : i64, scratch_operands = 0 : i64, tpu.core_type = #tpu.core_type<tc>, window_params = [{transform_indices = @transform_0, window_bounds = array<i64: 64, 128>}, {pipeline_mode = #tpu.pipeline_mode<synchronous>, transform_indices = @transform_1, window_bounds = array<i64: 1, 128>}, {pipeline_mode = #tpu.pipeline_mode<synchronous>, transform_indices = @transform_2, window_bounds = array<i64: 1, 128>}, {pipeline_mode = #tpu.pipeline_mode<synchronous>, transform_indices = @transform_3, window_bounds = array<i64: 3, 384, 128>}, {transform_indices = @transform_4, window_bounds = array<i64: 64, 128>}, {transform_indices = @transform_5, window_bounds = array<i64: 1, 2, 128>}]} {
    %c0 = arith.constant 0 : index
    %c0_0 = arith.constant 0 : index
    %0 = vector.load %arg1[%c0, %c0_0] : memref<64x128xbf16, #tpu.memory_space<vmem>>, vector<64x128xbf16>
    %1 = arith.extf %0 : vector<64x128xbf16> to vector<64x128xf32>
    %c0_1 = arith.constant 0 : index
    %c0_2 = arith.constant 0 : index
    %2 = vector.load %arg2[%c0_1, %c0_2] : memref<1x128xf32, #tpu.memory_space<vmem>>, vector<1x128xf32>
    %3 = vector.broadcast %2 : vector<1x128xf32> to vector<64x128xf32>
    %4 = arith.mulf %1, %3 : vector<64x128xf32>
    %c0_3 = arith.constant 0 : index
    %c0_4 = arith.constant 0 : index
    %5 = vector.load %arg3[%c0_3, %c0_4] : memref<1x128xf32, #tpu.memory_space<vmem>>, vector<1x128xf32>
    %6 = vector.broadcast %5 : vector<1x128xf32> to vector<64x128xf32>
    %7 = arith.addf %4, %6 : vector<64x128xf32>
    %cst = arith.constant 0.000000e+00 : f32
    %8 = vector.broadcast %cst : f32 to vector<64x128xf32>
    %9 = arith.maximumf %7, %8 : vector<64x128xf32>
    %10 = arith.truncf %9 : vector<64x128xf32> to vector<64x128xbf16>
    %11 = vector.shape_cast %10 : vector<64x128xbf16> to vector<1x8x8x128xbf16>
    %cst_5 = arith.constant 0.000000e+00 : f32
    %12 = vector.broadcast %cst_5 : f32 to vector<64x128xf32>
    %cst_6 = arith.constant 0.000000e+00 : bf16
    %13 = vector.broadcast %cst_6 : bf16 to vector<1x1x8x128xbf16>
    %14 = vector.extract_strided_slice %11 {offsets = [0, 0, 0, 0], sizes = [1, 7, 8, 128], strides = [1, 1, 1, 1]} : vector<1x8x8x128xbf16> to vector<1x7x8x128xbf16>
    %15 = tpu.concatenate %13, %14 in 1 : vector<1x1x8x128xbf16>, vector<1x7x8x128xbf16> -> vector<1x8x8x128xbf16>
    %cst_7 = arith.constant 0.000000e+00 : bf16
    %16 = vector.broadcast %cst_7 : bf16 to vector<1x8x1x128xbf16>
    %17 = vector.extract_strided_slice %15 {offsets = [0, 0, 0, 0], sizes = [1, 8, 7, 128], strides = [1, 1, 1, 1]} : vector<1x8x8x128xbf16> to vector<1x8x7x128xbf16>
    %18 = tpu.concatenate %16, %17 in 2 : vector<1x8x1x128xbf16>, vector<1x8x7x128xbf16> -> vector<1x8x8x128xbf16>
    %19 = vector.extract_strided_slice %15 {offsets = [0, 0, 1, 0], sizes = [1, 8, 7, 128], strides = [1, 1, 1, 1]} : vector<1x8x8x128xbf16> to vector<1x8x7x128xbf16>
    %cst_8 = arith.constant 0.000000e+00 : bf16
    %20 = vector.broadcast %cst_8 : bf16 to vector<1x8x1x128xbf16>
    %21 = tpu.concatenate %19, %20 in 2 : vector<1x8x7x128xbf16>, vector<1x8x1x128xbf16> -> vector<1x8x8x128xbf16>
    %22 = tpu.concatenate %18, %15, %21 in 3 : vector<1x8x8x128xbf16>, vector<1x8x8x128xbf16>, vector<1x8x8x128xbf16> -> vector<1x8x8x384xbf16>
    %23 = vector.shape_cast %22 : vector<1x8x8x384xbf16> to vector<64x384xbf16>
    %c0_9 = arith.constant 0 : index
    %c0_10 = arith.constant 0 : index
    %c0_11 = arith.constant 0 : index
    %24 = vector.load %arg4[%c0_9, %c0_10, %c0_11] : memref<3x384x128xbf16, #tpu.memory_space<vmem>>, vector<1x384x128xbf16>
    %25 = vector.shape_cast %24 : vector<1x384x128xbf16> to vector<384x128xbf16>
    %cst_12 = arith.constant dense<0.000000e+00> : vector<64x128xf32>
    %26 = tpu.matmul %23, %25, %cst_12 {dimension_numbers = #tpu.dot_dimension_numbers<[1], [0], [0], [1], [0, 0, 1, 1], [], []>} : vector<64x384xbf16>, vector<384x128xbf16>, vector<64x128xf32> -> vector<64x128xf32>
    %27 = arith.addf %12, %26 : vector<64x128xf32>
    %cst_13 = arith.constant 0.000000e+00 : bf16
    %28 = vector.broadcast %cst_13 : bf16 to vector<1x8x1x128xbf16>
    %29 = vector.extract_strided_slice %11 {offsets = [0, 0, 0, 0], sizes = [1, 8, 7, 128], strides = [1, 1, 1, 1]} : vector<1x8x8x128xbf16> to vector<1x8x7x128xbf16>
    %30 = tpu.concatenate %28, %29 in 2 : vector<1x8x1x128xbf16>, vector<1x8x7x128xbf16> -> vector<1x8x8x128xbf16>
    %31 = vector.extract_strided_slice %11 {offsets = [0, 0, 1, 0], sizes = [1, 8, 7, 128], strides = [1, 1, 1, 1]} : vector<1x8x8x128xbf16> to vector<1x8x7x128xbf16>
    %cst_14 = arith.constant 0.000000e+00 : bf16
    %32 = vector.broadcast %cst_14 : bf16 to vector<1x8x1x128xbf16>
    %33 = tpu.concatenate %31, %32 in 2 : vector<1x8x7x128xbf16>, vector<1x8x1x128xbf16> -> vector<1x8x8x128xbf16>
    %34 = tpu.concatenate %30, %11, %33 in 3 : vector<1x8x8x128xbf16>, vector<1x8x8x128xbf16>, vector<1x8x8x128xbf16> -> vector<1x8x8x384xbf16>
    %35 = vector.shape_cast %34 : vector<1x8x8x384xbf16> to vector<64x384xbf16>
    %c1 = arith.constant 1 : index
    %c0_15 = arith.constant 0 : index
    %c0_16 = arith.constant 0 : index
    %36 = vector.load %arg4[%c1, %c0_15, %c0_16] : memref<3x384x128xbf16, #tpu.memory_space<vmem>>, vector<1x384x128xbf16>
    %37 = vector.shape_cast %36 : vector<1x384x128xbf16> to vector<384x128xbf16>
    %cst_17 = arith.constant dense<0.000000e+00> : vector<64x128xf32>
    %38 = tpu.matmul %35, %37, %cst_17 {dimension_numbers = #tpu.dot_dimension_numbers<[1], [0], [0], [1], [0, 0, 1, 1], [], []>} : vector<64x384xbf16>, vector<384x128xbf16>, vector<64x128xf32> -> vector<64x128xf32>
    %39 = arith.addf %27, %38 : vector<64x128xf32>
    %40 = vector.extract_strided_slice %11 {offsets = [0, 1, 0, 0], sizes = [1, 7, 8, 128], strides = [1, 1, 1, 1]} : vector<1x8x8x128xbf16> to vector<1x7x8x128xbf16>
    %cst_18 = arith.constant 0.000000e+00 : bf16
    %41 = vector.broadcast %cst_18 : bf16 to vector<1x1x8x128xbf16>
    %42 = tpu.concatenate %40, %41 in 1 : vector<1x7x8x128xbf16>, vector<1x1x8x128xbf16> -> vector<1x8x8x128xbf16>
    %cst_19 = arith.constant 0.000000e+00 : bf16
    %43 = vector.broadcast %cst_19 : bf16 to vector<1x8x1x128xbf16>
    %44 = vector.extract_strided_slice %42 {offsets = [0, 0, 0, 0], sizes = [1, 8, 7, 128], strides = [1, 1, 1, 1]} : vector<1x8x8x128xbf16> to vector<1x8x7x128xbf16>
    %45 = tpu.concatenate %43, %44 in 2 : vector<1x8x1x128xbf16>, vector<1x8x7x128xbf16> -> vector<1x8x8x128xbf16>
    %46 = vector.extract_strided_slice %42 {offsets = [0, 0, 1, 0], sizes = [1, 8, 7, 128], strides = [1, 1, 1, 1]} : vector<1x8x8x128xbf16> to vector<1x8x7x128xbf16>
    %cst_20 = arith.constant 0.000000e+00 : bf16
    %47 = vector.broadcast %cst_20 : bf16 to vector<1x8x1x128xbf16>
    %48 = tpu.concatenate %46, %47 in 2 : vector<1x8x7x128xbf16>, vector<1x8x1x128xbf16> -> vector<1x8x8x128xbf16>
    %49 = tpu.concatenate %45, %42, %48 in 3 : vector<1x8x8x128xbf16>, vector<1x8x8x128xbf16>, vector<1x8x8x128xbf16> -> vector<1x8x8x384xbf16>
    %50 = vector.shape_cast %49 : vector<1x8x8x384xbf16> to vector<64x384xbf16>
    %c2 = arith.constant 2 : index
    %c0_21 = arith.constant 0 : index
    %c0_22 = arith.constant 0 : index
    %51 = vector.load %arg4[%c2, %c0_21, %c0_22] : memref<3x384x128xbf16, #tpu.memory_space<vmem>>, vector<1x384x128xbf16>
    %52 = vector.shape_cast %51 : vector<1x384x128xbf16> to vector<384x128xbf16>
    %cst_23 = arith.constant dense<0.000000e+00> : vector<64x128xf32>
    %53 = tpu.matmul %50, %52, %cst_23 {dimension_numbers = #tpu.dot_dimension_numbers<[1], [0], [0], [1], [0, 0, 1, 1], [], []>} : vector<64x384xbf16>, vector<384x128xbf16>, vector<64x128xf32> -> vector<64x128xf32>
    %54 = arith.addf %39, %53 : vector<64x128xf32>
    %cst_24 = arith.constant dense<0.000000e+00> : vector<128xf32>
    %55 = vector.multi_reduction <add>, %54, %cst_24 [0] : vector<64x128xf32> to vector<128xf32>
    %56 = vector.shape_cast %55 : vector<128xf32> to vector<1x128xf32>
    %57 = arith.mulf %54, %54 : vector<64x128xf32>
    %cst_25 = arith.constant dense<0.000000e+00> : vector<128xf32>
    %58 = vector.multi_reduction <add>, %57, %cst_25 [0] : vector<64x128xf32> to vector<128xf32>
    %59 = vector.shape_cast %58 : vector<128xf32> to vector<1x128xf32>
    %60 = tpu.concatenate %56, %59 in 0 : vector<1x128xf32>, vector<1x128xf32> -> vector<2x128xf32>
    %61 = vector.shape_cast %60 : vector<2x128xf32> to vector<1x2x128xf32>
    %c0_26 = arith.constant 0 : index
    %c0_27 = arith.constant 0 : index
    %c0_28 = arith.constant 0 : index
    %62 = vector.load %arg6[%c0_26, %c0_27, %c0_28] : memref<1x2x128xf32, #tpu.memory_space<vmem>>, vector<1x2x128xf32>
    tpu.vector_store %arg6[%c0_26, %c0_27, %c0_28], %61 {strides = array<i32>} : memref<1x2x128xf32, #tpu.memory_space<vmem>>, vector<1x2x128xf32>,
    %63 = arith.truncf %54 : vector<64x128xf32> to vector<64x128xbf16>
    %c0_29 = arith.constant 0 : index
    %c0_30 = arith.constant 0 : index
    %64 = vector.load %arg5[%c0_29, %c0_30] : memref<64x128xbf16, #tpu.memory_space<vmem>>, vector<64x128xbf16>
    tpu.vector_store %arg5[%c0_29, %c0_30], %63 {strides = array<i32>} : memref<64x128xbf16, #tpu.memory_space<vmem>>, vector<64x128xbf16>,
    return
  }
  func.func @transform_0(%arg0: i32) -> (i32, i32) {
    %c0_i32 = arith.constant 0 : i32
    %c0_i32_0 = arith.constant 0 : i32
    return %arg0, %c0_i32 : i32, i32
  }
  func.func @transform_1(%arg0: i32) -> (i32, i32) {
    %c0_i32 = arith.constant 0 : i32
    %c0_i32_0 = arith.constant 0 : i32
    %c0_i32_1 = arith.constant 0 : i32
    return %c0_i32, %c0_i32_0 : i32, i32
  }
  func.func @transform_2(%arg0: i32) -> (i32, i32) {
    %c0_i32 = arith.constant 0 : i32
    %c0_i32_0 = arith.constant 0 : i32
    %c0_i32_1 = arith.constant 0 : i32
    return %c0_i32, %c0_i32_0 : i32, i32
  }
  func.func @transform_3(%arg0: i32) -> (i32, i32, i32) {
    %c0_i32 = arith.constant 0 : i32
    %c0_i32_0 = arith.constant 0 : i32
    %c0_i32_1 = arith.constant 0 : i32
    %c0_i32_2 = arith.constant 0 : i32
    return %c0_i32, %c0_i32_0, %c0_i32_1 : i32, i32, i32
  }
  func.func @transform_4(%arg0: i32) -> (i32, i32) {
    %c0_i32 = arith.constant 0 : i32
    %c0_i32_0 = arith.constant 0 : i32
    return %arg0, %c0_i32 : i32, i32
  }
  func.func @transform_5(%arg0: i32) -> (i32, i32, i32) {
    %c0_i32 = arith.constant 0 : i32
    %c0_i32_0 = arith.constant 0 : i32
    %c0_i32_1 = arith.constant 0 : i32
    return %arg0, %c0_i32, %c0_i32_0 : i32, i32, i32
  }
}

module attributes {stable_mosaic.version = 11 : i64} {
  func.func @_bn_pool_cls_kernel(%arg0: i32, %arg1: memref<64x128xbf16, #tpu.memory_space<vmem>>, %arg2: memref<1x128xf32, #tpu.memory_space<vmem>>, %arg3: memref<1x128xf32, #tpu.memory_space<vmem>>, %arg4: memref<128x128xbf16, #tpu.memory_space<vmem>>, %arg5: memref<1x128xf32, #tpu.memory_space<vmem>>, %arg6: memref<64x128xbf16, #tpu.memory_space<vmem>>, %arg7: memref<1x1x128xf32, #tpu.memory_space<vmem>>) attributes {dimension_semantics = [#tpu.dimension_semantics<parallel>], iteration_bounds = array<i64: 2>, scalar_prefetch = 0 : i64, scratch_operands = 0 : i64, tpu.core_type = #tpu.core_type<tc>, window_params = [{transform_indices = @transform_0, window_bounds = array<i64: 64, 128>}, {pipeline_mode = #tpu.pipeline_mode<synchronous>, transform_indices = @transform_1, window_bounds = array<i64: 1, 128>}, {pipeline_mode = #tpu.pipeline_mode<synchronous>, transform_indices = @transform_2, window_bounds = array<i64: 1, 128>}, {pipeline_mode = #tpu.pipeline_mode<synchronous>, transform_indices = @transform_3, window_bounds = array<i64: 128, 128>}, {pipeline_mode = #tpu.pipeline_mode<synchronous>, transform_indices = @transform_4, window_bounds = array<i64: 1, 128>}, {transform_indices = @transform_5, window_bounds = array<i64: 64, 128>}, {transform_indices = @transform_6, window_bounds = array<i64: 1, 1, 128>}]} {
    %c0 = arith.constant 0 : index
    %c0_0 = arith.constant 0 : index
    %0 = vector.load %arg1[%c0, %c0_0] : memref<64x128xbf16, #tpu.memory_space<vmem>>, vector<64x128xbf16>
    %1 = arith.extf %0 : vector<64x128xbf16> to vector<64x128xf32>
    %c0_1 = arith.constant 0 : index
    %c0_2 = arith.constant 0 : index
    %2 = vector.load %arg2[%c0_1, %c0_2] : memref<1x128xf32, #tpu.memory_space<vmem>>, vector<1x128xf32>
    %3 = vector.broadcast %2 : vector<1x128xf32> to vector<64x128xf32>
    %4 = arith.mulf %1, %3 : vector<64x128xf32>
    %c0_3 = arith.constant 0 : index
    %c0_4 = arith.constant 0 : index
    %5 = vector.load %arg3[%c0_3, %c0_4] : memref<1x128xf32, #tpu.memory_space<vmem>>, vector<1x128xf32>
    %6 = vector.broadcast %5 : vector<1x128xf32> to vector<64x128xf32>
    %7 = arith.addf %4, %6 : vector<64x128xf32>
    %cst = arith.constant 0.000000e+00 : f32
    %8 = vector.broadcast %cst : f32 to vector<64x128xf32>
    %9 = arith.maximumf %7, %8 : vector<64x128xf32>
    %10 = arith.truncf %9 : vector<64x128xf32> to vector<64x128xbf16>
    %c0_5 = arith.constant 0 : index
    %c0_6 = arith.constant 0 : index
    %11 = vector.load %arg6[%c0_5, %c0_6] : memref<64x128xbf16, #tpu.memory_space<vmem>>, vector<64x128xbf16>
    tpu.vector_store %arg6[%c0_5, %c0_6], %10 {strides = array<i32>} : memref<64x128xbf16, #tpu.memory_space<vmem>>, vector<64x128xbf16>,
    %12 = vector.shape_cast %9 : vector<64x128xf32> to vector<1x64x128xf32>
    %cst_7 = arith.constant dense<0.000000e+00> : vector<1x128xf32>
    %13 = vector.multi_reduction <add>, %12, %cst_7 [1] : vector<1x64x128xf32> to vector<1x128xf32>
    %cst_8 = arith.constant 1.562500e-02 : f32
    %14 = vector.broadcast %cst_8 : f32 to vector<1x128xf32>
    %15 = arith.mulf %13, %14 : vector<1x128xf32>
    %16 = arith.truncf %15 : vector<1x128xf32> to vector<1x128xbf16>
    %c0_9 = arith.constant 0 : index
    %c0_10 = arith.constant 0 : index
    %17 = vector.load %arg4[%c0_9, %c0_10] : memref<128x128xbf16, #tpu.memory_space<vmem>>, vector<128x128xbf16>
    %cst_11 = arith.constant dense<0.000000e+00> : vector<1x128xf32>
    %18 = tpu.matmul %16, %17, %cst_11 {dimension_numbers = #tpu.dot_dimension_numbers<[1], [0], [0], [1], [0, 0, 1, 1], [], []>} : vector<1x128xbf16>, vector<128x128xbf16>, vector<1x128xf32> -> vector<1x128xf32>
    %c0_12 = arith.constant 0 : index
    %c0_13 = arith.constant 0 : index
    %19 = vector.load %arg5[%c0_12, %c0_13] : memref<1x128xf32, #tpu.memory_space<vmem>>, vector<1x128xf32>
    %20 = arith.addf %18, %19 : vector<1x128xf32>
    %21 = vector.shape_cast %20 : vector<1x128xf32> to vector<1x1x128xf32>
    %c0_14 = arith.constant 0 : index
    %c0_15 = arith.constant 0 : index
    %c0_16 = arith.constant 0 : index
    %22 = vector.load %arg7[%c0_14, %c0_15, %c0_16] : memref<1x1x128xf32, #tpu.memory_space<vmem>>, vector<1x1x128xf32>
    tpu.vector_store %arg7[%c0_14, %c0_15, %c0_16], %21 {strides = array<i32>} : memref<1x1x128xf32, #tpu.memory_space<vmem>>, vector<1x1x128xf32>,
    return
  }
  func.func @transform_0(%arg0: i32) -> (i32, i32) {
    %c0_i32 = arith.constant 0 : i32
    %c0_i32_0 = arith.constant 0 : i32
    return %arg0, %c0_i32 : i32, i32
  }
  func.func @transform_1(%arg0: i32) -> (i32, i32) {
    %c0_i32 = arith.constant 0 : i32
    %c0_i32_0 = arith.constant 0 : i32
    %c0_i32_1 = arith.constant 0 : i32
    return %c0_i32, %c0_i32_0 : i32, i32
  }
  func.func @transform_2(%arg0: i32) -> (i32, i32) {
    %c0_i32 = arith.constant 0 : i32
    %c0_i32_0 = arith.constant 0 : i32
    %c0_i32_1 = arith.constant 0 : i32
    return %c0_i32, %c0_i32_0 : i32, i32
  }
  func.func @transform_3(%arg0: i32) -> (i32, i32) {
    %c0_i32 = arith.constant 0 : i32
    %c0_i32_0 = arith.constant 0 : i32
    %c0_i32_1 = arith.constant 0 : i32
    return %c0_i32, %c0_i32_0 : i32, i32
  }
  func.func @transform_4(%arg0: i32) -> (i32, i32) {
    %c0_i32 = arith.constant 0 : i32
    %c0_i32_0 = arith.constant 0 : i32
    %c0_i32_1 = arith.constant 0 : i32
    return %c0_i32, %c0_i32_0 : i32, i32
  }
  func.func @transform_5(%arg0: i32) -> (i32, i32) {
    %c0_i32 = arith.constant 0 : i32
    %c0_i32_0 = arith.constant 0 : i32
    return %arg0, %c0_i32 : i32, i32
  }
  func.func @transform_6(%arg0: i32) -> (i32, i32, i32) {
    %c0_i32 = arith.constant 0 : i32
    %c0_i32_0 = arith.constant 0 : i32
    %c0_i32_1 = arith.constant 0 : i32
    return %arg0, %c0_i32, %c0_i32_0 : i32, i32, i32
  }
}

</mosaic_0001>

<llo_original>
// kernel: simkd_forward.6
$region0: #{simkd_forward.6}
  #allocation0 [shape = 'u32[]', space=smem, size = 0x4, offset = 0x4, fixed_abs, tag = 'smem constant byte address 0x4 - core index']
  #allocation1 [shape = 'u32[144,128]{1,0:T(1,128)}', space=vmem, size = 0x12000, scoped, tag = 'internal scratch']
  %s0 = inlined_call_operand.vmem [shape: bf16[128,128], index: 0, kind: input, shape index: {}]
  %s1 = inlined_call_operand.vmem [shape: f32[1,128], index: 1, kind: input, shape index: {}]
  %s2 = inlined_call_operand.vmem [shape: f32[1,128], index: 2, kind: input, shape index: {}]
  %s3 = inlined_call_operand.vmem [shape: bf16[128,128], index: 3, kind: input, shape index: {}]
  %s4 = inlined_call_operand.vmem [shape: bf16[128,128], index: 4, kind: output, shape index: {0}]
  %s5 = inlined_call_operand.vmem [shape: f32[2,2,128], index: 5, kind: output, shape index: {1}]
  %6 = xla_tuple %s4, %s5
  %s7 = sld [smem:[#allocation0]]
  $region57: #{simkd_forward.6} parent=0
    _
  %s9 = ssub.s32 1, %s7
  %s10 = scalar_select 0, %s9, %s7
  loop: start=0, step=1, limit=4
  $region2: #{simkd_forward.6} parent=0 // loop_pre_header
    _
  $region3: #{simkd_forward.6} parent=0 // loop_header
    %s12 = sphi 0, %s16
    %p13 = scmp.ge.s32.totalorder %s12, 4
    %s22 = sphi 0, %s24
    %s25 = sphi 0, %s22
    %s26 = sphi 0, %s25
    %s42 = sphi 0, %s26
    %s46 = sphi 0, %s46
    %s48 = sphi 0, %s46
    %s49 = sphi 0, %s48
    %s63 = sphi 0, %s49
    %s67 = sphi 0, %s67
    %s69 = sphi 0, %s67
    %s70 = sphi 0, %s69
    %s84 = sphi 0, %s70
    %s88 = sphi 0, %s88
    %s90 = sphi 0, %s88
    %s91 = sphi 0, %s90
    %s105 = sphi 0, %s91
    %s111 = sphi 0, %s113
    %s114 = sphi 0, %s111
    %s115 = sphi 0, %s114
    %s131 = sphi 0, %s115
    %s137 = sphi 0, %s139
    %s140 = sphi 0, %s137
    %s141 = sphi 0, %s140
    %s157 = sphi 0, %s141
  $region4: #{simkd_forward.6} parent=0 // loop_header_branch
    %15 = sbr.rel (%p13) target = $region8
  $region5: #{simkd_forward.6} parent=0 // loop_body
    %s17 = ssub.s32 %s12, 1
    %s18 = ssub.s32 %s12, 2
    %s19 = sadd.s32 %s12, 1
    %s20 = ssub.s32 %s12, %s19
    %p21 = scmp.eq.s32.totalorder %s20, 0
    %s23 = sadd.s32 %s22, 1
    %s24 = scalar_select %p21, %s22, %s23
    %p27 = pneg %p21
    %p28 = scmp.eq.s32.totalorder %s12, 1
    %p29 = por %p27, %p28
    %p30 = scmp.ne.s32.totalorder %s22, %s25
    %p31 = scmp.eq.s32.totalorder %s12, 0
    %p32 = por %p30, %p31
    %p33 = scmp.ne.s32.totalorder %s22, %s25
    %p34 = scmp.eq.s32.totalorder %s17, 1
    %p35 = por %p33, %p34
    %p36 = scmp.ne.s32.totalorder %s25, %s26
    %p37 = scmp.eq.s32.totalorder %s17, 0
    %p38 = por %p36, %p37
    %p39 = scmp.ne.s32.totalorder %s25, %s26
    %p40 = scmp.eq.s32.totalorder %s18, 1
    %p41 = por %p39, %p40
    %p43 = scmp.ne.s32.totalorder %s26, %s42
    %p44 = scmp.eq.s32.totalorder %s18, 0
    %p45 = por %p43, %p44
    %s47 = sadd.s32 %s46, 1
    %p50 = scmp.eq.s32.totalorder %s12, 1
    %p51 = scmp.ne.s32.totalorder %s46, %s48
    %p52 = scmp.eq.s32.totalorder %s12, 0
    %p53 = por %p51, %p52
    %p54 = scmp.ne.s32.totalorder %s46, %s48
    %p55 = scmp.eq.s32.totalorder %s17, 1
    %p56 = por %p54, %p55
    %p57 = scmp.ne.s32.totalorder %s48, %s49
    %p58 = scmp.eq.s32.totalorder %s17, 0
    %p59 = por %p57, %p58
    %p60 = scmp.ne.s32.totalorder %s48, %s49
    %p61 = scmp.eq.s32.totalorder %s18, 1
    %p62 = por %p60, %p61
    %p64 = scmp.ne.s32.totalorder %s49, %s63
    %p65 = scmp.eq.s32.totalorder %s18, 0
    %p66 = por %p64, %p65
    %s68 = sadd.s32 %s67, 1
    %p71 = scmp.eq.s32.totalorder %s12, 1
    %p72 = scmp.ne.s32.totalorder %s67, %s69
    %p73 = scmp.eq.s32.totalorder %s12, 0
    %p74 = por %p72, %p73
    %p75 = scmp.ne.s32.totalorder %s67, %s69
    %p76 = scmp.eq.s32.totalorder %s17, 1
    %p77 = por %p75, %p76
    %p78 = scmp.ne.s32.totalorder %s69, %s70
    %p79 = scmp.eq.s32.totalorder %s17, 0
    %p80 = por %p78, %p79
    %p81 = scmp.ne.s32.totalorder %s69, %s70
    %p82 = scmp.eq.s32.totalorder %s18, 1
    %p83 = por %p81, %p82
    %p85 = scmp.ne.s32.totalorder %s70, %s84
    %p86 = scmp.eq.s32.totalorder %s18, 0
    %p87 = por %p85, %p86
    %s89 = sadd.s32 %s88, 1
    %p92 = scmp.eq.s32.totalorder %s12, 1
    %p93 = scmp.ne.s32.totalorder %s88, %s90
    %p94 = scmp.eq.s32.totalorder %s12, 0
    %p95 = por %p93, %p94
    %p96 = scmp.ne.s32.totalorder %s88, %s90
    %p97 = scmp.eq.s32.totalorder %s17, 1
    %p98 = por %p96, %p97
    %p99 = scmp.ne.s32.totalorder %s90, %s91
    %p100 = scmp.eq.s32.totalorder %s17, 0
    %p101 = por %p99, %p100
    %p102 = scmp.ne.s32.totalorder %s90, %s91
    %p103 = scmp.eq.s32.totalorder %s18, 1
    %p104 = por %p102, %p103
    %p106 = scmp.ne.s32.totalorder %s91, %s105
    %p107 = scmp.eq.s32.totalorder %s18, 0
    %p108 = por %p106, %p107
    %s109 = ssub.s32 %s12, %s19
    %p110 = scmp.eq.s32.totalorder %s109, 0
    %s112 = sadd.s32 %s111, 1
    %s113 = scalar_select %p110, %s111, %s112
    %p116 = pneg %p110
    %p117 = scmp.eq.s32.totalorder %s12, 1
    %p118 = por %p116, %p117
    %p119 = scmp.ne.s32.totalorder %s111, %s114
    %p120 = scmp.eq.s32.totalorder %s12, 0
    %p121 = por %p119, %p120
    %p122 = scmp.ne.s32.totalorder %s111, %s114
    %p123 = scmp.eq.s32.totalorder %s17, 1
    %p124 = por %p122, %p123
    %p125 = scmp.ne.s32.totalorder %s114, %s115
    %p126 = scmp.eq.s32.totalorder %s17, 0
    %p127 = por %p125, %p126
    %p128 = scmp.ne.s32.totalorder %s114, %s115
    %p129 = scmp.eq.s32.totalorder %s18, 1
    %p130 = por %p128, %p129
    %p132 = scmp.ne.s32.totalorder %s115, %s131
    %p133 = scmp.eq.s32.totalorder %s18, 0
    %p134 = por %p132, %p133
    %s135 = ssub.s32 %s12, %s19
    %p136 = scmp.eq.s32.totalorder %s135, 0
    %s138 = sadd.s32 %s137, 1
    %s139 = scalar_select %p136, %s137, %s138
    %p142 = pneg %p136
    %p143 = scmp.eq.s32.totalorder %s12, 1
    %p144 = por %p142, %p143
    %p145 = scmp.ne.s32.totalorder %s137, %s140
    %p146 = scmp.eq.s32.totalorder %s12, 0
    %p147 = por %p145, %p146
    %p148 = scmp.ne.s32.totalorder %s137, %s140
    %p149 = scmp.eq.s32.totalorder %s17, 1
    %p150 = por %p148, %p149
    %p151 = scmp.ne.s32.totalorder %s140, %s141
    %p152 = scmp.eq.s32.totalorder %s17, 0
    %p153 = por %p151, %p152
    %p154 = scmp.ne.s32.totalorder %s140, %s141
    %p155 = scmp.eq.s32.totalorder %s18, 1
    %p156 = por %p154, %p155
    %p158 = scmp.ne.s32.totalorder %s141, %s157
    %p159 = scmp.eq.s32.totalorder %s18, 0
    %p160 = por %p158, %p159
    %p161 = scmp.le.s32.totalorder 1, %s12
    %p162 = scmp.lt.s32.totalorder %s12, 3
    %p163 = pnand %p161, %p162
    %p164 = pneg %p163
    // Predicated region
    $region9: #{simkd_forward.6} parent=5 // pred_check
      _
    $region10: #{simkd_forward.6} parent=5 // pred_check_branch
      %166 = sbr.rel (%p163) target = $region12
    $region11: #{simkd_forward.6} parent=5 // pred_region
      %s167 = ssub.s32 %s12, 1
      // Predicated region
      $region13: #{simkd_forward.6} parent=11 // pred_check
        %p168 = pneg %p59
      $region14: #{simkd_forward.6} parent=11 // pred_check_branch
        %170 = sbr.rel (%p168) target = $region16
      $region15: #{simkd_forward.6} parent=11 // pred_region
        _
      $region16: #{simkd_forward.6} parent=11 // pred_fallthru
        _
      // Predicated region
      $region17: #{simkd_forward.6} parent=11 // pred_check
        %p171 = pneg %p80
      $region18: #{simkd_forward.6} parent=11 // pred_check_branch
        %173 = sbr.rel (%p171) target = $region20
      $region19: #{simkd_forward.6} parent=11 // pred_region
        _
      $region20: #{simkd_forward.6} parent=11 // pred_fallthru
        _
      // Predicated region
      $region21: #{simkd_forward.6} parent=11 // pred_check
        %p174 = pneg %p101
      $region22: #{simkd_forward.6} parent=11 // pred_check_branch
        %176 = sbr.rel (%p174) target = $region24
      $region23: #{simkd_forward.6} parent=11 // pred_region
        _
      $region24: #{simkd_forward.6} parent=11 // pred_fallthru
        _
    $region12: #{simkd_forward.6} parent=5 // pred_fallthru
      _
    %p177 = scmp.lt.s32.totalorder %s12, 2
    // Predicated region
    $region25: #{simkd_forward.6} parent=5 // pred_check
      %p178 = pneg %p177
    $region26: #{simkd_forward.6} parent=5 // pred_check_branch
      %180 = sbr.rel (%p178) target = $region28
    $region27: #{simkd_forward.6} parent=5 // pred_region
      // Predicated region
      $region29: #{simkd_forward.6} parent=27 // pred_check
        %p181 = pneg %p32
      $region30: #{simkd_forward.6} parent=27 // pred_check_branch
        %183 = sbr.rel (%p181) target = $region32
      $region31: #{simkd_forward.6} parent=27 // pred_region
        %s184 = smul.u32 8, %s12
        %p185 = scmp.lt.s32.totalorder %s184, 15
        %s186 = scalar_select %p185, %s184, 15
        %s187 = smul.addr %s186, 4
        %s188 = scalar_lea.vmem %s0, %s187
        %s189 = smul.u32 8, %s12
      $region32: #{simkd_forward.6} parent=27 // pred_fallthru
        _
    $region28: #{simkd_forward.6} parent=5 // pred_fallthru
      _
    %p190 = scmp.le.s32.totalorder 1, %s12
    %p191 = scmp.lt.s32.totalorder %s12, 3
    %p192 = pnand %p190, %p191
    %p193 = pneg %p192
    // Predicated region
    $region33: #{simkd_forward.6} parent=5 // pred_check
      _
    $region34: #{simkd_forward.6} parent=5 // pred_check_branch
      %195 = sbr.rel (%p192) target = $region36
    $region35: #{simkd_forward.6} parent=5 // pred_region
      %s196 = ssub.s32 %s12, 1
      %s197 = smul.u32 8, %s17
      %p198 = scmp.lt.s32.totalorder %s197, 15
      %s199 = scalar_select %p198, %s197, 15
      %s200 = smul.addr %s199, 4
      %s201 = scalar_lea.vmem %s0, %s200
      %p202 = pneg %p38
      %p203 = pneg %p35
      %p204 = pneg %p59
      %p205 = pneg %p56
      %p206 = pneg %p80
      %p207 = pneg %p77
      %p208 = pneg %p101
      %p209 = pneg %p98
      %p210 = pneg %p127
      %p211 = pneg %p124
      %s212 = smul.u32 8, %s17
      %p213 = scmp.lt.s32.totalorder %s212, 15
      %s214 = scalar_select %p213, %s212, 15
      %s215 = smul.addr %s214, 4
      %s216 = scalar_lea.vmem %s4, %s215
      %p217 = pneg %p153
      %p218 = pneg %p150
      %p219 = scmp.lt.s32.totalorder %s17, 1
      %s220 = scalar_select %p219, %s17, 1
      %s221 = smul.addr %s220, 2
      %s222 = scalar_lea.vmem %s5, %s221
      %s223 = smul.u32 8, %s17
      %p224 = scmp.lt.s32.totalorder %s223, 15
      %s225 = scalar_select %p224, %s223, 15
      %s226 = smul.addr %s225, 4
      %s227 = scalar_lea.vmem %s0, %s226
      %s228 = smul.u32 8, %s17
      %s229 = smul.u32 8, %s17
      %p230 = scmp.lt.s32.totalorder %s229, 15
      %s231 = scalar_select %p230, %s229, 15
      %s232 = smul.addr %s231, 4
      %s233 = scalar_lea.vmem %s4, %s232
      %s234 = smul.u32 8, %s17
      %p235 = scmp.lt.s32.totalorder %s17, 1
      %s236 = scalar_select %p235, %s17, 1
      %s237 = smul.addr %s236, 2
      %s238 = scalar_lea.vmem %s5, %s237
      %v240 = vld [vmem:[%s227] sm:$0xf]
      %v241 = vld [vmem:[%s227 + $0x4] sm:$0xf]
      %v242 = vld [vmem:[%s227 + $0x8] sm:$0xf]
      %v243 = vld [vmem:[%s227 + $0xc] sm:$0xf]
      %v244 = vld [vmem:[%s227 + $0x10] sm:$0xf]
      %v245 = vld [vmem:[%s227 + $0x14] sm:$0xf]
      %v246 = vld [vmem:[%s227 + $0x18] sm:$0xf]
      %v247 = vld [vmem:[%s227 + $0x1c] sm:$0xf]
      %v248 = vunpack.c.l.bf16 %v240
      %v249 = vunpack.c.l.bf16 %v241
      %v250 = vunpack.c.l.bf16 %v242
      %v251 = vunpack.c.l.bf16 %v243
      %v252 = vunpack.c.l.bf16 %v244
      %v253 = vunpack.c.l.bf16 %v245
      %v254 = vunpack.c.l.bf16 %v246
      %v255 = vunpack.c.l.bf16 %v247
      %v256 = vld [vmem:[%s1] sm:$0x1]
      %v258 = vlaneseq
      %v259 = vshrl.u32 %v258, 7
      %v260 = vsub.s32 0, %v259
      %v261 = vrot.slane %v256, %v260
      %v263 = vmul.f32 %v248, %v261
      %v264 = vmul.f32 %v249, %v261
      %v265 = vmul.f32 %v250, %v261
      %v266 = vmul.f32 %v251, %v261
      %v267 = vmul.f32 %v252, %v261
      %v268 = vmul.f32 %v253, %v261
      %v269 = vmul.f32 %v254, %v261
      %v270 = vmul.f32 %v255, %v261
      %v271 = vld [vmem:[%s2] sm:$0x1]
      %v273 = vlaneseq
      %v274 = vshrl.u32 %v273, 7
      %v275 = vsub.s32 0, %v274
      %v276 = vrot.slane %v271, %v275
      %v278 = vadd.f32 %v263, %v276
      %v279 = vadd.f32 %v264, %v276
      %v280 = vadd.f32 %v265, %v276
      %v281 = vadd.f32 %v266, %v276
      %v282 = vadd.f32 %v267, %v276
      %v283 = vadd.f32 %v268, %v276
      %v284 = vadd.f32 %v269, %v276
      %v285 = vadd.f32 %v270, %v276
      %v286 = vmax.f32 %v278, 0.0
      %v287 = vmax.f32 %v279, 0.0
      %v288 = vmax.f32 %v280, 0.0
      %v289 = vmax.f32 %v281, 0.0
      %v290 = vmax.f32 %v282, 0.0
      %v291 = vmax.f32 %v283, 0.0
      %v292 = vmax.f32 %v284, 0.0
      %v293 = vmax.f32 %v285, 0.0
      %v294 = vpack.c.bf16 %v287, %v286
      %v295 = vpack.c.bf16 %v289, %v288
      %v296 = vpack.c.bf16 %v291, %v290
      %v297 = vpack.c.bf16 %v293, %v292
      %v298 = vld [vmem:[%s3] sm:$0xf]
      %v299 = vld [vmem:[%s3 + $0x4] sm:$0xf]
      %v300 = vld [vmem:[%s3 + $0x8] sm:$0xf]
      %v301 = vld [vmem:[%s3 + $0xc] sm:$0xf]
      %v302 = vld [vmem:[%s3 + $0x10] sm:$0xf]
      %v303 = vld [vmem:[%s3 + $0x14] sm:$0xf]
      %v304 = vld [vmem:[%s3 + $0x18] sm:$0xf]
      %v305 = vld [vmem:[%s3 + $0x1c] sm:$0xf]
      %v306 = vld [vmem:[%s3 + $0x20] sm:$0xf]
      %v307 = vld [vmem:[%s3 + $0x24] sm:$0xf]
      %v308 = vld [vmem:[%s3 + $0x28] sm:$0xf]
      %v309 = vld [vmem:[%s3 + $0x2c] sm:$0xf]
      %v310 = vld [vmem:[%s3 + $0x30] sm:$0xf]
      %v311 = vld [vmem:[%s3 + $0x34] sm:$0xf]
      %v312 = vld [vmem:[%s3 + $0x38] sm:$0xf]
      %v313 = vld [vmem:[%s3 + $0x3c] sm:$0xf]
      %v330 = vunpack.c.l.b16 %v298
      %v331 = vunpack.c.l.b16 %v299
      %v332 = vunpack.c.l.b16 %v300
      %v333 = vunpack.c.l.b16 %v301
      %v334 = vunpack.c.l.b16 %v302
      %v335 = vunpack.c.l.b16 %v303
      %v336 = vunpack.c.l.b16 %v304
      %v337 = vunpack.c.l.b16 %v305
      %v338 = vunpack.c.l.b16 %v306
      %v339 = vunpack.c.l.b16 %v307
      %v340 = vunpack.c.l.b16 %v308
      %v341 = vunpack.c.l.b16 %v309
      %v342 = vunpack.c.l.b16 %v310
      %v343 = vunpack.c.l.b16 %v311
      %v344 = vunpack.c.l.b16 %v312
      %v345 = vunpack.c.l.b16 %v313
      %v346 = vpack.c.b16 %v331, %v330
      %v347 = vpack.c.b16 %v333, %v332
      %v348 = vpack.c.b16 %v335, %v334
      %v349 = vpack.c.b16 %v337, %v336
      %v350 = vpack.c.b16 %v339, %v338
      %v351 = vpack.c.b16 %v341, %v340
      %v352 = vpack.c.b16 %v343, %v342
      %v353 = vpack.c.b16 %v345, %v344
      %362 = vmatprep.subr.bf16.mxu0 0
      %363 = vmatpush1.bf16.msra.mxu0 %v346
      %364 = vmatprep.subr.bf16.mxu0 0
      %365 = vmatpush1.bf16.msra.mxu0 %v347
      %366 = vmatprep.subr.bf16.mxu0 0
      %367 = vmatpush1.bf16.msra.mxu0 %v348
      %368 = vmatprep.subr.bf16.mxu0 0
      %369 = vmatpush1.bf16.msra.mxu0 %v349
      %370 = vmatprep.subr.bf16.mxu0 0
      %371 = vmatpush1.bf16.msra.mxu0 %v350
      %372 = vmatprep.subr.bf16.mxu0 0
      %373 = vmatpush1.bf16.msra.mxu0 %v351
      %374 = vmatprep.subr.bf16.mxu0 0
      %375 = vmatpush1.bf16.msra.mxu0 %v352
      %376 = vmatprep.subr.bf16.mxu0 0
      %377 = vmatpush1.bf16.msra.mxu0 %v353
      %378 = vmatprep.subr.bf16.mxu0 0
      %379 = vmatpush1.bf16.msra.mxu0 0
      %380 = vmatprep.subr.bf16.mxu0 0
      %381 = vmatpush1.bf16.msra.mxu0 0
      %382 = vmatprep.subr.bf16.mxu0 0
      %383 = vmatpush1.bf16.msra.mxu0 0
      %384 = vmatprep.subr.bf16.mxu0 0
      %385 = vmatpush1.bf16.msra.mxu0 0
      %386 = vmatprep.subr.bf16.mxu0 0
      %387 = vmatpush1.bf16.msra.mxu0 0
      %388 = vmatprep.subr.bf16.mxu0 0
      %389 = vmatpush1.bf16.msra.mxu0 0
      %390 = vmatprep.subr.bf16.mxu0 0
      %391 = vmatpush1.bf16.msra.mxu0 0
      %392 = vmatprep.subr.bf16.mxu0 0
      %393 = vmatpush1.bf16.msra.mxu0 0
      %394 = vmatprep.mubr.bf16.mxu0 0
      %395 = vmatmul.mubr.bf16.gmra.mrb[0].mxu0 %v294
      %v396 = vpop.f32.mrb[0].mxu0
      %v397 = vadd.f32 0.0, %v396
      %v398 = vpop.f32.mrb[0].mxu0
      %v399 = vpop.f32.mrb[0].mxu0
      %v400 = vadd.f32 0.0, %v399
      %v401 = vpop.f32.mrb[0].mxu0
      %402 = vmatprep.mubr.bf16.mxu0 0
      %403 = vmatmul.mubr.bf16.gmra.mrb[0].mxu0 %v295
      %v404 = vpop.f32.mrb[0].mxu0
      %v405 = vadd.f32 0.0, %v404
      %v406 = vpop.f32.mrb[0].mxu0
      %v407 = vpop.f32.mrb[0].mxu0
      %v408 = vadd.f32 0.0, %v407
      %v409 = vpop.f32.mrb[0].mxu0
      %410 = vmatprep.mubr.bf16.mxu0 0
      %411 = vmatmul.mubr.bf16.gmra.mrb[0].mxu0 %v296
      %v412 = vpop.f32.mrb[0].mxu0
      %v413 = vadd.f32 0.0, %v412
      %v414 = vpop.f32.mrb[0].mxu0
      %v415 = vpop.f32.mrb[0].mxu0
      %v416 = vadd.f32 0.0, %v415
      %v417 = vpop.f32.mrb[0].mxu0
      %418 = vmatprep.mubr.bf16.mxu0 0
      %419 = vmatmul.mubr.bf16.gmra.mrb[0].mxu0 %v297
      %v420 = vpop.f32.mrb[0].mxu0
      %v421 = vadd.f32 0.0, %v420
      %v422 = vpop.f32.mrb[0].mxu0
      %v423 = vpop.f32.mrb[0].mxu0
      %v424 = vadd.f32 0.0, %v423
      %v425 = vpop.f32.mrb[0].mxu0
      %426 = vdwg.mxu0
      %v427 = vadd.f32 %v397, %v400
      %v428 = vadd.f32 %v427, %v405
      %v429 = vadd.f32 %v428, %v408
      %v430 = vadd.f32 %v429, %v413
      %v431 = vadd.f32 %v430, %v416
      %v432 = vadd.f32 %v431, %v421
      %v433 = vadd.f32 %v432, %v424
      %v434 = vrot.slane %v433, 4
      %v435 = vadd.f32 %v433, %v434
      %v436 = vrot.slane %v435, 2
      %v437 = vadd.f32 %v435, %v436
      %v438 = vrot.slane %v437, 1
      %v439 = vadd.f32 %v437, %v438
      %v440 = vmul.f32 %v397, %v397
      %v441 = vmul.f32 %v400, %v400
      %v442 = vmul.f32 %v405, %v405
      %v443 = vmul.f32 %v408, %v408
      %v444 = vmul.f32 %v413, %v413
      %v445 = vmul.f32 %v416, %v416
      %v446 = vmul.f32 %v421, %v421
      %v447 = vmul.f32 %v424, %v424
      %v448 = vadd.f32 %v440, %v441
      %v449 = vadd.f32 %v448, %v442
      %v450 = vadd.f32 %v449, %v443
      %v451 = vadd.f32 %v450, %v444
      %v452 = vadd.f32 %v451, %v445
      %v453 = vadd.f32 %v452, %v446
      %v454 = vadd.f32 %v453, %v447
      %v455 = vrot.slane %v454, 4
      %v456 = vadd.f32 %v454, %v455
      %v457 = vrot.slane %v456, 2
      %v458 = vadd.f32 %v456, %v457
      %v459 = vrot.slane %v458, 1
      %v460 = vadd.f32 %v458, %v459
      %vm461 = vcmask 1040384
      %v462 = vsel %vm461, %v439, %v460
      %463 = vst [vmem:[%s238] sm:$0x3] %v462
      %v464 = vpack.c.bf16 %v400, %v397
      %v465 = vpack.c.bf16 %v408, %v405
      %v466 = vpack.c.bf16 %v416, %v413
      %v467 = vpack.c.bf16 %v424, %v421
      %v472 = vunpack.c.l.b16 %v464
      %v473 = vunpack.c.h.b16 %v464
      %v474 = vunpack.c.l.b16 %v465
      %v475 = vunpack.c.h.b16 %v465
      %v476 = vunpack.c.l.b16 %v466
      %v477 = vunpack.c.h.b16 %v466
      %v478 = vunpack.c.l.b16 %v467
      %v479 = vunpack.c.h.b16 %v467
      %v480 = vpack.c.b16 %v472, %v472
      %v481 = vpack.c.b16 %v473, %v473
      %v482 = vpack.c.b16 %v474, %v474
      %v483 = vpack.c.b16 %v475, %v475
      %v484 = vpack.c.b16 %v476, %v476
      %v485 = vpack.c.b16 %v477, %v477
      %v486 = vpack.c.b16 %v478, %v478
      %v487 = vpack.c.b16 %v479, %v479
      %496 = vst [vmem:[%s233] sm:$0xf] %v480
      %497 = vst [vmem:[%s233 + $0x4] sm:$0xf] %v481
      %498 = vst [vmem:[%s233 + $0x8] sm:$0xf] %v482
      %499 = vst [vmem:[%s233 + $0xc] sm:$0xf] %v483
      %500 = vst [vmem:[%s233 + $0x10] sm:$0xf] %v484
      %501 = vst [vmem:[%s233 + $0x14] sm:$0xf] %v485
      %502 = vst [vmem:[%s233 + $0x18] sm:$0xf] %v486
      %503 = vst [vmem:[%s233 + $0x1c] sm:$0xf] %v487
      %s504 = smul.u32 8, %s17
      %p505 = scmp.lt.s32.totalorder %s504, 15
      %s506 = scalar_select %p505, %s504, 15
      %s507 = smul.addr %s506, 4
      %s508 = scalar_lea.vmem %s4, %s507
      %p509 = scmp.lt.s32.totalorder %s17, 1
      %s510 = scalar_select %p509, %s17, 1
      %s511 = smul.addr %s510, 2
      %s512 = scalar_lea.vmem %s5, %s511
      // Predicated region
      $region37: #{simkd_forward.6} parent=35 // pred_check
        %p513 = pneg %p124
      $region38: #{simkd_forward.6} parent=35 // pred_check_branch
        %515 = sbr.rel (%p513) target = $region40
      $region39: #{simkd_forward.6} parent=35 // pred_region
        %s516 = smul.u32 8, %s17
      $region40: #{simkd_forward.6} parent=35 // pred_fallthru
        _
      // Predicated region
      $region41: #{simkd_forward.6} parent=35 // pred_check
        %p517 = pneg %p150
      $region42: #{simkd_forward.6} parent=35 // pred_check_branch
        %519 = sbr.rel (%p517) target = $region44
      $region43: #{simkd_forward.6} parent=35 // pred_region
        _
      $region44: #{simkd_forward.6} parent=35 // pred_fallthru
        _
    $region36: #{simkd_forward.6} parent=5 // pred_fallthru
      _
    %p520 = scmp.le.s32.totalorder 2, %s12
    // Predicated region
    $region45: #{simkd_forward.6} parent=5 // pred_check
      %p521 = pneg %p520
    $region46: #{simkd_forward.6} parent=5 // pred_check_branch
      %523 = sbr.rel (%p521) target = $region48
    $region47: #{simkd_forward.6} parent=5 // pred_region
      %s524 = ssub.s32 %s12, 2
      // Predicated region
      $region49: #{simkd_forward.6} parent=47 // pred_check
        %p525 = pneg %p130
      $region50: #{simkd_forward.6} parent=47 // pred_check_branch
        %527 = sbr.rel (%p525) target = $region52
      $region51: #{simkd_forward.6} parent=47 // pred_region
        %s528 = smul.u32 8, %s18
        %p529 = scmp.lt.s32.totalorder %s528, 15
        %s530 = scalar_select %p529, %s528, 15
        %s531 = smul.addr %s530, 4
        %s532 = scalar_lea.vmem %s4, %s531
      $region52: #{simkd_forward.6} parent=47 // pred_fallthru
        _
      // Predicated region
      $region53: #{simkd_forward.6} parent=47 // pred_check
        %p533 = pneg %p156
      $region54: #{simkd_forward.6} parent=47 // pred_check_branch
        %535 = sbr.rel (%p533) target = $region56
      $region55: #{simkd_forward.6} parent=47 // pred_region
        %p536 = scmp.lt.s32.totalorder %s18, 1
        %s537 = scalar_select %p536, %s18, 1
        %s538 = smul.addr %s537, 2
        %s539 = scalar_lea.vmem %s5, %s538
      $region56: #{simkd_forward.6} parent=47 // pred_fallthru
        _
    $region48: #{simkd_forward.6} parent=5 // pred_fallthru
      _
  $region6: #{simkd_forward.6} parent=0 // loop_footer
    %s16 = sadd.s32 1, %s12
  $region7: #{simkd_forward.6} parent=0 // loop_footer_branch
    %11 = sbr.rel target = $region3
  $region8: #{simkd_forward.6} parent=0 // loop_exit
    _

// kernel: simkd_forward.4
$region0: #{simkd_forward.4}
  #allocation0 [shape = 'u32[]', space=smem, size = 0x4, offset = 0x4, fixed_abs, tag = 'smem constant byte address 0x4 - core index']
  #allocation1 [shape = 'u32[144,128]{1,0:T(1,128)}', space=vmem, size = 0x12000, scoped, tag = 'internal scratch']
  %s0 = inlined_call_operand.vmem [shape: bf16[128,128], index: 0, kind: input, shape index: {}]
  %s1 = inlined_call_operand.vmem [shape: bf16[128,128], index: 1, kind: input, shape index: {}]
  %s2 = inlined_call_operand.vmem [shape: bf16[128,128], index: 2, kind: output, shape index: {0}]
  %s3 = inlined_call_operand.vmem [shape: f32[2,2,128], index: 3, kind: output, shape index: {1}]
  %4 = xla_tuple %s2, %s3
  %s5 = sld [smem:[#allocation0]]
  $region49: #{simkd_forward.4} parent=0
    _
  %s7 = ssub.s32 1, %s5
  %s8 = scalar_select 0, %s7, %s5
  loop: start=0, step=1, limit=4
  $region2: #{simkd_forward.4} parent=0 // loop_pre_header
    _
  $region3: #{simkd_forward.4} parent=0 // loop_header
    %s10 = sphi 0, %s14
    %p11 = scmp.ge.s32.totalorder %s10, 4
    %s20 = sphi 0, %s22
    %s23 = sphi 0, %s20
    %s24 = sphi 0, %s23
    %s40 = sphi 0, %s24
    %s44 = sphi 0, %s44
    %s46 = sphi 0, %s44
    %s47 = sphi 0, %s46
    %s61 = sphi 0, %s47
    %s67 = sphi 0, %s69
    %s70 = sphi 0, %s67
    %s71 = sphi 0, %s70
    %s87 = sphi 0, %s71
    %s93 = sphi 0, %s95
    %s96 = sphi 0, %s93
    %s97 = sphi 0, %s96
    %s113 = sphi 0, %s97
  $region4: #{simkd_forward.4} parent=0 // loop_header_branch
    %13 = sbr.rel (%p11) target = $region8
  $region5: #{simkd_forward.4} parent=0 // loop_body
    %s15 = ssub.s32 %s10, 1
    %s16 = ssub.s32 %s10, 2
    %s17 = sadd.s32 %s10, 1
    %s18 = ssub.s32 %s10, %s17
    %p19 = scmp.eq.s32.totalorder %s18, 0
    %s21 = sadd.s32 %s20, 1
    %s22 = scalar_select %p19, %s20, %s21
    %p25 = pneg %p19
    %p26 = scmp.eq.s32.totalorder %s10, 1
    %p27 = por %p25, %p26
    %p28 = scmp.ne.s32.totalorder %s20, %s23
    %p29 = scmp.eq.s32.totalorder %s10, 0
    %p30 = por %p28, %p29
    %p31 = scmp.ne.s32.totalorder %s20, %s23
    %p32 = scmp.eq.s32.totalorder %s15, 1
    %p33 = por %p31, %p32
    %p34 = scmp.ne.s32.totalorder %s23, %s24
    %p35 = scmp.eq.s32.totalorder %s15, 0
    %p36 = por %p34, %p35
    %p37 = scmp.ne.s32.totalorder %s23, %s24
    %p38 = scmp.eq.s32.totalorder %s16, 1
    %p39 = por %p37, %p38
    %p41 = scmp.ne.s32.totalorder %s24, %s40
    %p42 = scmp.eq.s32.totalorder %s16, 0
    %p43 = por %p41, %p42
    %s45 = sadd.s32 %s44, 1
    %p48 = scmp.eq.s32.totalorder %s10, 1
    %p49 = scmp.ne.s32.totalorder %s44, %s46
    %p50 = scmp.eq.s32.totalorder %s10, 0
    %p51 = por %p49, %p50
    %p52 = scmp.ne.s32.totalorder %s44, %s46
    %p53 = scmp.eq.s32.totalorder %s15, 1
    %p54 = por %p52, %p53
    %p55 = scmp.ne.s32.totalorder %s46, %s47
    %p56 = scmp.eq.s32.totalorder %s15, 0
    %p57 = por %p55, %p56
    %p58 = scmp.ne.s32.totalorder %s46, %s47
    %p59 = scmp.eq.s32.totalorder %s16, 1
    %p60 = por %p58, %p59
    %p62 = scmp.ne.s32.totalorder %s47, %s61
    %p63 = scmp.eq.s32.totalorder %s16, 0
    %p64 = por %p62, %p63
    %s65 = ssub.s32 %s10, %s17
    %p66 = scmp.eq.s32.totalorder %s65, 0
    %s68 = sadd.s32 %s67, 1
    %s69 = scalar_select %p66, %s67, %s68
    %p72 = pneg %p66
    %p73 = scmp.eq.s32.totalorder %s10, 1
    %p74 = por %p72, %p73
    %p75 = scmp.ne.s32.totalorder %s67, %s70
    %p76 = scmp.eq.s32.totalorder %s10, 0
    %p77 = por %p75, %p76
    %p78 = scmp.ne.s32.totalorder %s67, %s70
    %p79 = scmp.eq.s32.totalorder %s15, 1
    %p80 = por %p78, %p79
    %p81 = scmp.ne.s32.totalorder %s70, %s71
    %p82 = scmp.eq.s32.totalorder %s15, 0
    %p83 = por %p81, %p82
    %p84 = scmp.ne.s32.totalorder %s70, %s71
    %p85 = scmp.eq.s32.totalorder %s16, 1
    %p86 = por %p84, %p85
    %p88 = scmp.ne.s32.totalorder %s71, %s87
    %p89 = scmp.eq.s32.totalorder %s16, 0
    %p90 = por %p88, %p89
    %s91 = ssub.s32 %s10, %s17
    %p92 = scmp.eq.s32.totalorder %s91, 0
    %s94 = sadd.s32 %s93, 1
    %s95 = scalar_select %p92, %s93, %s94
    %p98 = pneg %p92
    %p99 = scmp.eq.s32.totalorder %s10, 1
    %p100 = por %p98, %p99
    %p101 = scmp.ne.s32.totalorder %s93, %s96
    %p102 = scmp.eq.s32.totalorder %s10, 0
    %p103 = por %p101, %p102
    %p104 = scmp.ne.s32.totalorder %s93, %s96
    %p105 = scmp.eq.s32.totalorder %s15, 1
    %p106 = por %p104, %p105
    %p107 = scmp.ne.s32.totalorder %s96, %s97
    %p108 = scmp.eq.s32.totalorder %s15, 0
    %p109 = por %p107, %p108
    %p110 = scmp.ne.s32.totalorder %s96, %s97
    %p111 = scmp.eq.s32.totalorder %s16, 1
    %p112 = por %p110, %p111
    %p114 = scmp.ne.s32.totalorder %s97, %s113
    %p115 = scmp.eq.s32.totalorder %s16, 0
    %p116 = por %p114, %p115
    %p117 = scmp.le.s32.totalorder 1, %s10
    %p118 = scmp.lt.s32.totalorder %s10, 3
    %p119 = pnand %p117, %p118
    %p120 = pneg %p119
    // Predicated region
    $region9: #{simkd_forward.4} parent=5 // pred_check
      _
    $region10: #{simkd_forward.4} parent=5 // pred_check_branch
      %122 = sbr.rel (%p119) target = $region12
    $region11: #{simkd_forward.4} parent=5 // pred_region
      %s123 = ssub.s32 %s10, 1
      // Predicated region
      $region13: #{simkd_forward.4} parent=11 // pred_check
        %p124 = pneg %p57
      $region14: #{simkd_forward.4} parent=11 // pred_check_branch
        %126 = sbr.rel (%p124) target = $region16
      $region15: #{simkd_forward.4} parent=11 // pred_region
        _
      $region16: #{simkd_forward.4} parent=11 // pred_fallthru
        _
    $region12: #{simkd_forward.4} parent=5 // pred_fallthru
      _
    %p127 = scmp.lt.s32.totalorder %s10, 2
    // Predicated region
    $region17: #{simkd_forward.4} parent=5 // pred_check
      %p128 = pneg %p127
    $region18: #{simkd_forward.4} parent=5 // pred_check_branch
      %130 = sbr.rel (%p128) target = $region20
    $region19: #{simkd_forward.4} parent=5 // pred_region
      // Predicated region
      $region21: #{simkd_forward.4} parent=19 // pred_check
        %p131 = pneg %p30
      $region22: #{simkd_forward.4} parent=19 // pred_check_branch
        %133 = sbr.rel (%p131) target = $region24
      $region23: #{simkd_forward.4} parent=19 // pred_region
        %s134 = smul.u32 8, %s10
        %p135 = scmp.lt.s32.totalorder %s134, 15
        %s136 = scalar_select %p135, %s134, 15
        %s137 = smul.addr %s136, 4
        %s138 = scalar_lea.vmem %s0, %s137
        %s139 = smul.u32 8, %s10
      $region24: #{simkd_forward.4} parent=19 // pred_fallthru
        _
    $region20: #{simkd_forward.4} parent=5 // pred_fallthru
      _
    %p140 = scmp.le.s32.totalorder 1, %s10
    %p141 = scmp.lt.s32.totalorder %s10, 3
    %p142 = pnand %p140, %p141
    %p143 = pneg %p142
    // Predicated region
    $region25: #{simkd_forward.4} parent=5 // pred_check
      _
    $region26: #{simkd_forward.4} parent=5 // pred_check_branch
      %145 = sbr.rel (%p142) target = $region28
    $region27: #{simkd_forward.4} parent=5 // pred_region
      %s146 = ssub.s32 %s10, 1
      %s147 = smul.u32 8, %s15
      %p148 = scmp.lt.s32.totalorder %s147, 15
      %s149 = scalar_select %p148, %s147, 15
      %s150 = smul.addr %s149, 4
      %s151 = scalar_lea.vmem %s0, %s150
      %p152 = pneg %p36
      %p153 = pneg %p33
      %p154 = pneg %p57
      %p155 = pneg %p54
      %p156 = pneg %p83
      %p157 = pneg %p80
      %s158 = smul.u32 8, %s15
      %p159 = scmp.lt.s32.totalorder %s158, 15
      %s160 = scalar_select %p159, %s158, 15
      %s161 = smul.addr %s160, 4
      %s162 = scalar_lea.vmem %s2, %s161
      %p163 = pneg %p109
      %p164 = pneg %p106
      %p165 = scmp.lt.s32.totalorder %s15, 1
      %s166 = scalar_select %p165, %s15, 1
      %s167 = smul.addr %s166, 2
      %s168 = scalar_lea.vmem %s3, %s167
      %s169 = smul.u32 8, %s15
      %p170 = scmp.lt.s32.totalorder %s169, 15
      %s171 = scalar_select %p170, %s169, 15
      %s172 = smul.addr %s171, 4
      %s173 = scalar_lea.vmem %s0, %s172
      %s174 = smul.u32 8, %s15
      %s175 = smul.u32 8, %s15
      %p176 = scmp.lt.s32.totalorder %s175, 15
      %s177 = scalar_select %p176, %s175, 15
      %s178 = smul.addr %s177, 4
      %s179 = scalar_lea.vmem %s2, %s178
      %s180 = smul.u32 8, %s15
      %p181 = scmp.lt.s32.totalorder %s15, 1
      %s182 = scalar_select %p181, %s15, 1
      %s183 = smul.addr %s182, 2
      %s184 = scalar_lea.vmem %s3, %s183
      %v186 = vld [vmem:[%s173] sm:$0xf]
      %v187 = vld [vmem:[%s173 + $0x4] sm:$0xf]
      %v188 = vld [vmem:[%s173 + $0x8] sm:$0xf]
      %v189 = vld [vmem:[%s173 + $0xc] sm:$0xf]
      %v190 = vld [vmem:[%s173 + $0x10] sm:$0xf]
      %v191 = vld [vmem:[%s173 + $0x14] sm:$0xf]
      %v192 = vld [vmem:[%s173 + $0x18] sm:$0xf]
      %v193 = vld [vmem:[%s173 + $0x1c] sm:$0xf]
      %v194 = vld [vmem:[%s1] sm:$0xf]
      %v195 = vld [vmem:[%s1 + $0x4] sm:$0xf]
      %v196 = vld [vmem:[%s1 + $0x8] sm:$0xf]
      %v197 = vld [vmem:[%s1 + $0xc] sm:$0xf]
      %v198 = vld [vmem:[%s1 + $0x10] sm:$0xf]
      %v199 = vld [vmem:[%s1 + $0x14] sm:$0xf]
      %v200 = vld [vmem:[%s1 + $0x18] sm:$0xf]
      %v201 = vld [vmem:[%s1 + $0x1c] sm:$0xf]
      %v202 = vld [vmem:[%s1 + $0x20] sm:$0xf]
      %v203 = vld [vmem:[%s1 + $0x24] sm:$0xf]
      %v204 = vld [vmem:[%s1 + $0x28] sm:$0xf]
      %v205 = vld [vmem:[%s1 + $0x2c] sm:$0xf]
      %v206 = vld [vmem:[%s1 + $0x30] sm:$0xf]
      %v207 = vld [vmem:[%s1 + $0x34] sm:$0xf]
      %v208 = vld [vmem:[%s1 + $0x38] sm:$0xf]
      %v209 = vld [vmem:[%s1 + $0x3c] sm:$0xf]
      %v218 = vunpack.c.l.b16 %v186
      %v219 = vunpack.c.l.b16 %v187
      %v220 = vunpack.c.l.b16 %v188
      %v221 = vunpack.c.l.b16 %v189
      %v222 = vunpack.c.l.b16 %v190
      %v223 = vunpack.c.l.b16 %v191
      %v224 = vunpack.c.l.b16 %v192
      %v225 = vunpack.c.l.b16 %v193
      %v226 = vpack.c.b16 %v219, %v218
      %v227 = vpack.c.b16 %v221, %v220
      %v228 = vpack.c.b16 %v223, %v222
      %v229 = vpack.c.b16 %v225, %v224
      %v250 = vunpack.c.l.b16 %v194
      %v251 = vunpack.c.l.b16 %v195
      %v252 = vunpack.c.l.b16 %v196
      %v253 = vunpack.c.l.b16 %v197
      %v254 = vunpack.c.l.b16 %v198
      %v255 = vunpack.c.l.b16 %v199
      %v256 = vunpack.c.l.b16 %v200
      %v257 = vunpack.c.l.b16 %v201
      %v258 = vunpack.c.l.b16 %v202
      %v259 = vunpack.c.l.b16 %v203
      %v260 = vunpack.c.l.b16 %v204
      %v261 = vunpack.c.l.b16 %v205
      %v262 = vunpack.c.l.b16 %v206
      %v263 = vunpack.c.l.b16 %v207
      %v264 = vunpack.c.l.b16 %v208
      %v265 = vunpack.c.l.b16 %v209
      %v266 = vpack.c.b16 %v251, %v250
      %v267 = vpack.c.b16 %v253, %v252
      %v268 = vpack.c.b16 %v255, %v254
      %v269 = vpack.c.b16 %v257, %v256
      %v270 = vpack.c.b16 %v259, %v258
      %v271 = vpack.c.b16 %v261, %v260
      %v272 = vpack.c.b16 %v263, %v262
      %v273 = vpack.c.b16 %v265, %v264
      %282 = vmatprep.subr.bf16.mxu0 0
      %283 = vmatpush1.bf16.msra.mxu0 %v266
      %284 = vmatprep.subr.bf16.mxu0 0
      %285 = vmatpush1.bf16.msra.mxu0 %v267
      %286 = vmatprep.subr.bf16.mxu0 0
      %287 = vmatpush1.bf16.msra.mxu0 %v268
      %288 = vmatprep.subr.bf16.mxu0 0
      %289 = vmatpush1.bf16.msra.mxu0 %v269
      %290 = vmatprep.subr.bf16.mxu0 0
      %291 = vmatpush1.bf16.msra.mxu0 %v270
      %292 = vmatprep.subr.bf16.mxu0 0
      %293 = vmatpush1.bf16.msra.mxu0 %v271
      %294 = vmatprep.subr.bf16.mxu0 0
      %295 = vmatpush1.bf16.msra.mxu0 %v272
      %296 = vmatprep.subr.bf16.mxu0 0
      %297 = vmatpush1.bf16.msra.mxu0 %v273
      %298 = vmatprep.subr.bf16.mxu0 0
      %299 = vmatpush1.bf16.msra.mxu0 0
      %300 = vmatprep.subr.bf16.mxu0 0
      %301 = vmatpush1.bf16.msra.mxu0 0
      %302 = vmatprep.subr.bf16.mxu0 0
      %303 = vmatpush1.bf16.msra.mxu0 0
      %304 = vmatprep.subr.bf16.mxu0 0
      %305 = vmatpush1.bf16.msra.mxu0 0
      %306 = vmatprep.subr.bf16.mxu0 0
      %307 = vmatpush1.bf16.msra.mxu0 0
      %308 = vmatprep.subr.bf16.mxu0 0
      %309 = vmatpush1.bf16.msra.mxu0 0
      %310 = vmatprep.subr.bf16.mxu0 0
      %311 = vmatpush1.bf16.msra.mxu0 0
      %312 = vmatprep.subr.bf16.mxu0 0
      %313 = vmatpush1.bf16.msra.mxu0 0
      %314 = vmatprep.mubr.bf16.mxu0 0
      %315 = vmatmul.mubr.bf16.gmra.mrb[0].mxu0 %v226
      %v316 = vpop.f32.mrb[0].mxu0
      %v317 = vadd.f32 0.0, %v316
      %v318 = vpop.f32.mrb[0].mxu0
      %v319 = vpop.f32.mrb[0].mxu0
      %v320 = vadd.f32 0.0, %v319
      %v321 = vpop.f32.mrb[0].mxu0
      %322 = vmatprep.mubr.bf16.mxu0 0
      %323 = vmatmul.mubr.bf16.gmra.mrb[0].mxu0 %v227
      %v324 = vpop.f32.mrb[0].mxu0
      %v325 = vadd.f32 0.0, %v324
      %v326 = vpop.f32.mrb[0].mxu0
      %v327 = vpop.f32.mrb[0].mxu0
      %v328 = vadd.f32 0.0, %v327
      %v329 = vpop.f32.mrb[0].mxu0
      %330 = vmatprep.mubr.bf16.mxu0 0
      %331 = vmatmul.mubr.bf16.gmra.mrb[0].mxu0 %v228
      %v332 = vpop.f32.mrb[0].mxu0
      %v333 = vadd.f32 0.0, %v332
      %v334 = vpop.f32.mrb[0].mxu0
      %v335 = vpop.f32.mrb[0].mxu0
      %v336 = vadd.f32 0.0, %v335
      %v337 = vpop.f32.mrb[0].mxu0
      %338 = vmatprep.mubr.bf16.mxu0 0
      %339 = vmatmul.mubr.bf16.gmra.mrb[0].mxu0 %v229
      %v340 = vpop.f32.mrb[0].mxu0
      %v341 = vadd.f32 0.0, %v340
      %v342 = vpop.f32.mrb[0].mxu0
      %v343 = vpop.f32.mrb[0].mxu0
      %v344 = vadd.f32 0.0, %v343
      %v345 = vpop.f32.mrb[0].mxu0
      %346 = vdwg.mxu0
      %v347 = vadd.f32 %v317, %v320
      %v348 = vadd.f32 %v347, %v325
      %v349 = vadd.f32 %v348, %v328
      %v350 = vadd.f32 %v349, %v333
      %v351 = vadd.f32 %v350, %v336
      %v352 = vadd.f32 %v351, %v341
      %v353 = vadd.f32 %v352, %v344
      %v354 = vrot.slane %v353, 4
      %v355 = vadd.f32 %v353, %v354
      %v356 = vrot.slane %v355, 2
      %v357 = vadd.f32 %v355, %v356
      %v358 = vrot.slane %v357, 1
      %v359 = vadd.f32 %v357, %v358
      %v360 = vmul.f32 %v317, %v317
      %v361 = vmul.f32 %v320, %v320
      %v362 = vmul.f32 %v325, %v325
      %v363 = vmul.f32 %v328, %v328
      %v364 = vmul.f32 %v333, %v333
      %v365 = vmul.f32 %v336, %v336
      %v366 = vmul.f32 %v341, %v341
      %v367 = vmul.f32 %v344, %v344
      %v368 = vadd.f32 %v360, %v361
      %v369 = vadd.f32 %v368, %v362
      %v370 = vadd.f32 %v369, %v363
      %v371 = vadd.f32 %v370, %v364
      %v372 = vadd.f32 %v371, %v365
      %v373 = vadd.f32 %v372, %v366
      %v374 = vadd.f32 %v373, %v367
      %v375 = vrot.slane %v374, 4
      %v376 = vadd.f32 %v374, %v375
      %v377 = vrot.slane %v376, 2
      %v378 = vadd.f32 %v376, %v377
      %v379 = vrot.slane %v378, 1
      %v380 = vadd.f32 %v378, %v379
      %vm381 = vcmask 1040384
      %v382 = vsel %vm381, %v359, %v380
      %383 = vst [vmem:[%s184] sm:$0x3] %v382
      %v384 = vpack.c.bf16 %v320, %v317
      %v385 = vpack.c.bf16 %v328, %v325
      %v386 = vpack.c.bf16 %v336, %v333
      %v387 = vpack.c.bf16 %v344, %v341
      %v392 = vunpack.c.l.b16 %v384
      %v393 = vunpack.c.h.b16 %v384
      %v394 = vunpack.c.l.b16 %v385
      %v395 = vunpack.c.h.b16 %v385
      %v396 = vunpack.c.l.b16 %v386
      %v397 = vunpack.c.h.b16 %v386
      %v398 = vunpack.c.l.b16 %v387
      %v399 = vunpack.c.h.b16 %v387
      %v400 = vpack.c.b16 %v392, %v392
      %v401 = vpack.c.b16 %v393, %v393
      %v402 = vpack.c.b16 %v394, %v394
      %v403 = vpack.c.b16 %v395, %v395
      %v404 = vpack.c.b16 %v396, %v396
      %v405 = vpack.c.b16 %v397, %v397
      %v406 = vpack.c.b16 %v398, %v398
      %v407 = vpack.c.b16 %v399, %v399
      %416 = vst [vmem:[%s179] sm:$0xf] %v400
      %417 = vst [vmem:[%s179 + $0x4] sm:$0xf] %v401
      %418 = vst [vmem:[%s179 + $0x8] sm:$0xf] %v402
      %419 = vst [vmem:[%s179 + $0xc] sm:$0xf] %v403
      %420 = vst [vmem:[%s179 + $0x10] sm:$0xf] %v404
      %421 = vst [vmem:[%s179 + $0x14] sm:$0xf] %v405
      %422 = vst [vmem:[%s179 + $0x18] sm:$0xf] %v406
      %423 = vst [vmem:[%s179 + $0x1c] sm:$0xf] %v407
      %s424 = smul.u32 8, %s15
      %p425 = scmp.lt.s32.totalorder %s424, 15
      %s426 = scalar_select %p425, %s424, 15
      %s427 = smul.addr %s426, 4
      %s428 = scalar_lea.vmem %s2, %s427
      %p429 = scmp.lt.s32.totalorder %s15, 1
      %s430 = scalar_select %p429, %s15, 1
      %s431 = smul.addr %s430, 2
      %s432 = scalar_lea.vmem %s3, %s431
      // Predicated region
      $region29: #{simkd_forward.4} parent=27 // pred_check
        %p433 = pneg %p80
      $region30: #{simkd_forward.4} parent=27 // pred_check_branch
        %435 = sbr.rel (%p433) target = $region32
      $region31: #{simkd_forward.4} parent=27 // pred_region
        %s436 = smul.u32 8, %s15
      $region32: #{simkd_forward.4} parent=27 // pred_fallthru
        _
      // Predicated region
      $region33: #{simkd_forward.4} parent=27 // pred_check
        %p437 = pneg %p106
      $region34: #{simkd_forward.4} parent=27 // pred_check_branch
        %439 = sbr.rel (%p437) target = $region36
      $region35: #{simkd_forward.4} parent=27 // pred_region
        _
      $region36: #{simkd_forward.4} parent=27 // pred_fallthru
        _
    $region28: #{simkd_forward.4} parent=5 // pred_fallthru
      _
    %p440 = scmp.le.s32.totalorder 2, %s10
    // Predicated region
    $region37: #{simkd_forward.4} parent=5 // pred_check
      %p441 = pneg %p440
    $region38: #{simkd_forward.4} parent=5 // pred_check_branch
      %443 = sbr.rel (%p441) target = $region40
    $region39: #{simkd_forward.4} parent=5 // pred_region
      %s444 = ssub.s32 %s10, 2
      // Predicated region
      $region41: #{simkd_forward.4} parent=39 // pred_check
        %p445 = pneg %p86
      $region42: #{simkd_forward.4} parent=39 // pred_check_branch
        %447 = sbr.rel (%p445) target = $region44
      $region43: #{simkd_forward.4} parent=39 // pred_region
        %s448 = smul.u32 8, %s16
        %p449 = scmp.lt.s32.totalorder %s448, 15
        %s450 = scalar_select %p449, %s448, 15
        %s451 = smul.addr %s450, 4
        %s452 = scalar_lea.vmem %s2, %s451
      $region44: #{simkd_forward.4} parent=39 // pred_fallthru
        _
      // Predicated region
      $region45: #{simkd_forward.4} parent=39 // pred_check
        %p453 = pneg %p112
      $region46: #{simkd_forward.4} parent=39 // pred_check_branch
        %455 = sbr.rel (%p453) target = $region48
      $region47: #{simkd_forward.4} parent=39 // pred_region
        %p456 = scmp.lt.s32.totalorder %s16, 1
        %s457 = scalar_select %p456, %s16, 1
        %s458 = smul.addr %s457, 2
        %s459 = scalar_lea.vmem %s3, %s458
      $region48: #{simkd_forward.4} parent=39 // pred_fallthru
        _
    $region40: #{simkd_forward.4} parent=5 // pred_fallthru
      _
  $region6: #{simkd_forward.4} parent=0 // loop_footer
    %s14 = sadd.s32 1, %s10
  $region7: #{simkd_forward.4} parent=0 // loop_footer_branch
    %9 = sbr.rel target = $region3
  $region8: #{simkd_forward.4} parent=0 // loop_exit
    _

// kernel: simkd_forward.7
$region0: #{simkd_forward.7}
  #allocation0 [shape = 'u32[]', space=smem, size = 0x4, offset = 0x4, fixed_abs, tag = 'smem constant byte address 0x4 - core index']
  #allocation1 [shape = 'u32[144,128]{1,0:T(1,128)}', space=vmem, size = 0x12000, scoped, tag = 'internal scratch']
  %s0 = inlined_call_operand.vmem [shape: bf16[128,128], index: 0, kind: input, shape index: {}]
  %s1 = inlined_call_operand.vmem [shape: f32[1,128], index: 1, kind: input, shape index: {}]
  %s2 = inlined_call_operand.vmem [shape: f32[1,128], index: 2, kind: input, shape index: {}]
  %s3 = inlined_call_operand.vmem [shape: bf16[128,128], index: 3, kind: input, shape index: {}]
  %s4 = inlined_call_operand.vmem [shape: f32[1,128], index: 4, kind: input, shape index: {}]
  %s5 = inlined_call_operand.vmem [shape: bf16[128,128], index: 5, kind: output, shape index: {0}]
  %s6 = inlined_call_operand.hbm [shape: f32[2,1,128], index: 6, kind: output, shape index: {1}]
  %7 = xla_tuple %s5, %s6
  %s8 = sld [smem:[#allocation0]]
  $region61: #{simkd_forward.7} parent=0
    _
  %s10 = ssub.s32 1, %s8
  %s11 = scalar_select 0, %s10, %s8
  $region1: #{simkd_forward.7} parent=0
    #allocation2 [shape = 'u8[1024]{0}', space=vmem, size = 0x400, scoped, tag = 'output window, operand 1']
    #allocation3 [shape = 's32[2]{0}', space=sflag, size = 0x8, scoped, tag = 'scoped memory for simkd_forward.7']
    %12 = vsyncpa [#allocation3], 0
    %s13 = scalar_lea.sflag [#allocation3], 1
    %14 = vsyncpa %s13, 0
    loop: start=0, step=1, limit=4
    $region2: #{simkd_forward.7} parent=1 // loop_pre_header
      _
    $region3: #{simkd_forward.7} parent=1 // loop_header
      %s16 = sphi 0, %s20
      %p17 = scmp.ge.s32.totalorder %s16, 4
      %s26 = sphi 0, %s28
      %s29 = sphi 0, %s26
      %s30 = sphi 0, %s29
      %s46 = sphi 0, %s30
      %s50 = sphi 0, %s50
      %s52 = sphi 0, %s50
      %s53 = sphi 0, %s52
      %s67 = sphi 0, %s53
      %s71 = sphi 0, %s71
      %s73 = sphi 0, %s71
      %s74 = sphi 0, %s73
      %s88 = sphi 0, %s74
      %s92 = sphi 0, %s92
      %s94 = sphi 0, %s92
      %s95 = sphi 0, %s94
      %s109 = sphi 0, %s95
      %s113 = sphi 0, %s113
      %s115 = sphi 0, %s113
      %s116 = sphi 0, %s115
      %s130 = sphi 0, %s116
      %s136 = sphi 0, %s138
      %s139 = sphi 0, %s136
      %s140 = sphi 0, %s139
      %s156 = sphi 0, %s140
      %s162 = sphi 0, %s164
      %s165 = sphi 0, %s162
      %s166 = sphi 0, %s165
      %s182 = sphi 0, %s166
    $region4: #{simkd_forward.7} parent=1 // loop_header_branch
      %19 = sbr.rel (%p17) target = $region8
    $region5: #{simkd_forward.7} parent=1 // loop_body
      %s21 = ssub.s32 %s16, 1
      %s22 = ssub.s32 %s16, 2
      %s23 = sadd.s32 %s16, 1
      %s24 = ssub.s32 %s16, %s23
      %p25 = scmp.eq.s32.totalorder %s24, 0
      %s27 = sadd.s32 %s26, 1
      %s28 = scalar_select %p25, %s26, %s27
      %p31 = pneg %p25
      %p32 = scmp.eq.s32.totalorder %s16, 1
      %p33 = por %p31, %p32
      %p34 = scmp.ne.s32.totalorder %s26, %s29
      %p35 = scmp.eq.s32.totalorder %s16, 0
      %p36 = por %p34, %p35
      %p37 = scmp.ne.s32.totalorder %s26, %s29
      %p38 = scmp.eq.s32.totalorder %s21, 1
      %p39 = por %p37, %p38
      %p40 = scmp.ne.s32.totalorder %s29, %s30
      %p41 = scmp.eq.s32.totalorder %s21, 0
      %p42 = por %p40, %p41
      %p43 = scmp.ne.s32.totalorder %s29, %s30
      %p44 = scmp.eq.s32.totalorder %s22, 1
      %p45 = por %p43, %p44
      %p47 = scmp.ne.s32.totalorder %s30, %s46
      %p48 = scmp.eq.s32.totalorder %s22, 0
      %p49 = por %p47, %p48
      %s51 = sadd.s32 %s50, 1
      %p54 = scmp.eq.s32.totalorder %s16, 1
      %p55 = scmp.ne.s32.totalorder %s50, %s52
      %p56 = scmp.eq.s32.totalorder %s16, 0
      %p57 = por %p55, %p56
      %p58 = scmp.ne.s32.totalorder %s50, %s52
      %p59 = scmp.eq.s32.totalorder %s21, 1
      %p60 = por %p58, %p59
      %p61 = scmp.ne.s32.totalorder %s52, %s53
      %p62 = scmp.eq.s32.totalorder %s21, 0
      %p63 = por %p61, %p62
      %p64 = scmp.ne.s32.totalorder %s52, %s53
      %p65 = scmp.eq.s32.totalorder %s22, 1
      %p66 = por %p64, %p65
      %p68 = scmp.ne.s32.totalorder %s53, %s67
      %p69 = scmp.eq.s32.totalorder %s22, 0
      %p70 = por %p68, %p69
      %s72 = sadd.s32 %s71, 1
      %p75 = scmp.eq.s32.totalorder %s16, 1
      %p76 = scmp.ne.s32.totalorder %s71, %s73
      %p77 = scmp.eq.s32.totalorder %s16, 0
      %p78 = por %p76, %p77
      %p79 = scmp.ne.s32.totalorder %s71, %s73
      %p80 = scmp.eq.s32.totalorder %s21, 1
      %p81 = por %p79, %p80
      %p82 = scmp.ne.s32.totalorder %s73, %s74
      %p83 = scmp.eq.s32.totalorder %s21, 0
      %p84 = por %p82, %p83
      %p85 = scmp.ne.s32.totalorder %s73, %s74
      %p86 = scmp.eq.s32.totalorder %s22, 1
      %p87 = por %p85, %p86
      %p89 = scmp.ne.s32.totalorder %s74, %s88
      %p90 = scmp.eq.s32.totalorder %s22, 0
      %p91 = por %p89, %p90
      %s93 = sadd.s32 %s92, 1
      %p96 = scmp.eq.s32.totalorder %s16, 1
      %p97 = scmp.ne.s32.totalorder %s92, %s94
      %p98 = scmp.eq.s32.totalorder %s16, 0
      %p99 = por %p97, %p98
      %p100 = scmp.ne.s32.totalorder %s92, %s94
      %p101 = scmp.eq.s32.totalorder %s21, 1
      %p102 = por %p100, %p101
      %p103 = scmp.ne.s32.totalorder %s94, %s95
      %p104 = scmp.eq.s32.totalorder %s21, 0
      %p105 = por %p103, %p104
      %p106 = scmp.ne.s32.totalorder %s94, %s95
      %p107 = scmp.eq.s32.totalorder %s22, 1
      %p108 = por %p106, %p107
      %p110 = scmp.ne.s32.totalorder %s95, %s109
      %p111 = scmp.eq.s32.totalorder %s22, 0
      %p112 = por %p110, %p111
      %s114 = sadd.s32 %s113, 1
      %p117 = scmp.eq.s32.totalorder %s16, 1
      %p118 = scmp.ne.s32.totalorder %s113, %s115
      %p119 = scmp.eq.s32.totalorder %s16, 0
      %p120 = por %p118, %p119
      %p121 = scmp.ne.s32.totalorder %s113, %s115
      %p122 = scmp.eq.s32.totalorder %s21, 1
      %p123 = por %p121, %p122
      %p124 = scmp.ne.s32.totalorder %s115, %s116
      %p125 = scmp.eq.s32.totalorder %s21, 0
      %p126 = por %p124, %p125
      %p127 = scmp.ne.s32.totalorder %s115, %s116
      %p128 = scmp.eq.s32.totalorder %s22, 1
      %p129 = por %p127, %p128
      %p131 = scmp.ne.s32.totalorder %s116, %s130
      %p132 = scmp.eq.s32.totalorder %s22, 0
      %p133 = por %p131, %p132
      %s134 = ssub.s32 %s16, %s23
      %p135 = scmp.eq.s32.totalorder %s134, 0
      %s137 = sadd.s32 %s136, 1
      %s138 = scalar_select %p135, %s136, %s137
      %p141 = pneg %p135
      %p142 = scmp.eq.s32.totalorder %s16, 1
      %p143 = por %p141, %p142
      %p144 = scmp.ne.s32.totalorder %s136, %s139
      %p145 = scmp.eq.s32.totalorder %s16, 0
      %p146 = por %p144, %p145
      %p147 = scmp.ne.s32.totalorder %s136, %s139
      %p148 = scmp.eq.s32.totalorder %s21, 1
      %p149 = por %p147, %p148
      %p150 = scmp.ne.s32.totalorder %s139, %s140
      %p151 = scmp.eq.s32.totalorder %s21, 0
      %p152 = por %p150, %p151
      %p153 = scmp.ne.s32.totalorder %s139, %s140
      %p154 = scmp.eq.s32.totalorder %s22, 1
      %p155 = por %p153, %p154
      %p157 = scmp.ne.s32.totalorder %s140, %s156
      %p158 = scmp.eq.s32.totalorder %s22, 0
      %p159 = por %p157, %p158
      %s160 = ssub.s32 %s16, %s23
      %p161 = scmp.eq.s32.totalorder %s160, 0
      %s163 = sadd.s32 %s162, 1
      %s164 = scalar_select %p161, %s162, %s163
      %p167 = pneg %p161
      %p168 = scmp.eq.s32.totalorder %s16, 1
      %p169 = por %p167, %p168
      %p170 = scmp.ne.s32.totalorder %s162, %s165
      %p171 = scmp.eq.s32.totalorder %s16, 0
      %p172 = por %p170, %p171
      %p173 = scmp.ne.s32.totalorder %s162, %s165
      %p174 = scmp.eq.s32.totalorder %s21, 1
      %p175 = por %p173, %p174
      %p176 = scmp.ne.s32.totalorder %s165, %s166
      %p177 = scmp.eq.s32.totalorder %s21, 0
      %p178 = por %p176, %p177
      %p179 = scmp.ne.s32.totalorder %s165, %s166
      %p180 = scmp.eq.s32.totalorder %s22, 1
      %p181 = por %p179, %p180
      %p183 = scmp.ne.s32.totalorder %s166, %s182
      %p184 = scmp.eq.s32.totalorder %s22, 0
      %p185 = por %p183, %p184
      %p186 = scmp.le.s32.totalorder 1, %s16
      %p187 = scmp.lt.s32.totalorder %s16, 3
      %p188 = pnand %p186, %p187
      %p189 = pneg %p188
      // Predicated region
      $region9: #{simkd_forward.7} parent=5 // pred_check
        _
      $region10: #{simkd_forward.7} parent=5 // pred_check_branch
        %191 = sbr.rel (%p188) target = $region12
      $region11: #{simkd_forward.7} parent=5 // pred_region
        %s192 = ssub.s32 %s16, 1
        // Predicated region
        $region13: #{simkd_forward.7} parent=11 // pred_check
          %p193 = pneg %p63
        $region14: #{simkd_forward.7} parent=11 // pred_check_branch
          %195 = sbr.rel (%p193) target = $region16
        $region15: #{simkd_forward.7} parent=11 // pred_region
          _
        $region16: #{simkd_forward.7} parent=11 // pred_fallthru
          _
        // Predicated region
        $region17: #{simkd_forward.7} parent=11 // pred_check
          %p196 = pneg %p84
        $region18: #{simkd_forward.7} parent=11 // pred_check_branch
          %198 = sbr.rel (%p196) target = $region20
        $region19: #{simkd_forward.7} parent=11 // pred_region
          _
        $region20: #{simkd_forward.7} parent=11 // pred_fallthru
          _
        // Predicated region
        $region21: #{simkd_forward.7} parent=11 // pred_check
          %p199 = pneg %p105
        $region22: #{simkd_forward.7} parent=11 // pred_check_branch
          %201 = sbr.rel (%p199) target = $region24
        $region23: #{simkd_forward.7} parent=11 // pred_region
          _
        $region24: #{simkd_forward.7} parent=11 // pred_fallthru
          _
        // Predicated region
        $region25: #{simkd_forward.7} parent=11 // pred_check
          %p202 = pneg %p126
        $region26: #{simkd_forward.7} parent=11 // pred_check_branch
          %204 = sbr.rel (%p202) target = $region28
        $region27: #{simkd_forward.7} parent=11 // pred_region
          _
        $region28: #{simkd_forward.7} parent=11 // pred_fallthru
          _
      $region12: #{simkd_forward.7} parent=5 // pred_fallthru
        _
      %p205 = scmp.lt.s32.totalorder %s16, 2
      // Predicated region
      $region29: #{simkd_forward.7} parent=5 // pred_check
        %p206 = pneg %p205
      $region30: #{simkd_forward.7} parent=5 // pred_check_branch
        %208 = sbr.rel (%p206) target = $region32
      $region31: #{simkd_forward.7} parent=5 // pred_region
        // Predicated region
        $region33: #{simkd_forward.7} parent=31 // pred_check
          %p209 = pneg %p36
        $region34: #{simkd_forward.7} parent=31 // pred_check_branch
          %211 = sbr.rel (%p209) target = $region36
        $region35: #{simkd_forward.7} parent=31 // pred_region
          %s212 = smul.u32 8, %s16
          %p213 = scmp.lt.s32.totalorder %s212, 15
          %s214 = scalar_select %p213, %s212, 15
          %s215 = smul.addr %s214, 4
          %s216 = scalar_lea.vmem %s0, %s215
          %s217 = smul.u32 8, %s16
        $region36: #{simkd_forward.7} parent=31 // pred_fallthru
          _
      $region32: #{simkd_forward.7} parent=5 // pred_fallthru
        _
      %p218 = scmp.le.s32.totalorder 1, %s16
      %p219 = scmp.lt.s32.totalorder %s16, 3
      %p220 = pnand %p218, %p219
      %p221 = pneg %p220
      // Predicated region
      $region37: #{simkd_forward.7} parent=5 // pred_check
        _
      $region38: #{simkd_forward.7} parent=5 // pred_check_branch
        %223 = sbr.rel (%p220) target = $region40
      $region39: #{simkd_forward.7} parent=5 // pred_region
        %s224 = ssub.s32 %s16, 1
        %s225 = smul.u32 8, %s21
        %p226 = scmp.lt.s32.totalorder %s225, 15
        %s227 = scalar_select %p226, %s225, 15
        %s228 = smul.addr %s227, 4
        %s229 = scalar_lea.vmem %s0, %s228
        %p230 = pneg %p42
        %p231 = pneg %p39
        %p232 = pneg %p63
        %p233 = pneg %p60
        %p234 = pneg %p84
        %p235 = pneg %p81
        %p236 = pneg %p105
        %p237 = pneg %p102
        %p238 = pneg %p126
        %p239 = pneg %p123
        %p240 = pneg %p152
        %p241 = pneg %p149
        %s242 = smul.u32 8, %s21
        %p243 = scmp.lt.s32.totalorder %s242, 15
        %s244 = scalar_select %p243, %s242, 15
        %s245 = smul.addr %s244, 4
        %s246 = scalar_lea.vmem %s5, %s245
        %p247 = pneg %p178
        %p248 = pneg %p175
        %s249 = sand.u32 %s165, 1
        %s250 = scalar_lea.sflag [#allocation3], %s249
        %s251 = sand.u32 %s165, 1
        %s252 = scalar_lea.vmem [#allocation2], %s251
        %s253 = smul.u32 8, %s21
        %p254 = scmp.lt.s32.totalorder %s253, 15
        %s255 = scalar_select %p254, %s253, 15
        %s256 = smul.addr %s255, 4
        %s257 = scalar_lea.vmem %s0, %s256
        %s258 = smul.u32 8, %s21
        %s259 = smul.u32 8, %s21
        %p260 = scmp.lt.s32.totalorder %s259, 15
        %s261 = scalar_select %p260, %s259, 15
        %s262 = smul.addr %s261, 4
        %s263 = scalar_lea.vmem %s5, %s262
        %s264 = smul.u32 8, %s21
        %v266 = vld [vmem:[%s257] sm:$0xf]
        %v267 = vld [vmem:[%s257 + $0x4] sm:$0xf]
        %v268 = vld [vmem:[%s257 + $0x8] sm:$0xf]
        %v269 = vld [vmem:[%s257 + $0xc] sm:$0xf]
        %v270 = vld [vmem:[%s257 + $0x10] sm:$0xf]
        %v271 = vld [vmem:[%s257 + $0x14] sm:$0xf]
        %v272 = vld [vmem:[%s257 + $0x18] sm:$0xf]
        %v273 = vld [vmem:[%s257 + $0x1c] sm:$0xf]
        %v274 = vunpack.c.l.bf16 %v266
        %v275 = vunpack.c.l.bf16 %v267
        %v276 = vunpack.c.l.bf16 %v268
        %v277 = vunpack.c.l.bf16 %v269
        %v278 = vunpack.c.l.bf16 %v270
        %v279 = vunpack.c.l.bf16 %v271
        %v280 = vunpack.c.l.bf16 %v272
        %v281 = vunpack.c.l.bf16 %v273
        %v282 = vld [vmem:[%s1] sm:$0x1]
        %v284 = vlaneseq
        %v285 = vshrl.u32 %v284, 7
        %v286 = vsub.s32 0, %v285
        %v287 = vrot.slane %v282, %v286
        %v289 = vmul.f32 %v274, %v287
        %v290 = vmul.f32 %v275, %v287
        %v291 = vmul.f32 %v276, %v287
        %v292 = vmul.f32 %v277, %v287
        %v293 = vmul.f32 %v278, %v287
        %v294 = vmul.f32 %v279, %v287
        %v295 = vmul.f32 %v280, %v287
        %v296 = vmul.f32 %v281, %v287
        %v297 = vld [vmem:[%s2] sm:$0x1]
        %v299 = vlaneseq
        %v300 = vshrl.u32 %v299, 7
        %v301 = vsub.s32 0, %v300
        %v302 = vrot.slane %v297, %v301
        %v304 = vadd.f32 %v289, %v302
        %v305 = vadd.f32 %v290, %v302
        %v306 = vadd.f32 %v291, %v302
        %v307 = vadd.f32 %v292, %v302
        %v308 = vadd.f32 %v293, %v302
        %v309 = vadd.f32 %v294, %v302
        %v310 = vadd.f32 %v295, %v302
        %v311 = vadd.f32 %v296, %v302
        %v312 = vmax.f32 %v304, 0.0
        %v313 = vmax.f32 %v305, 0.0
        %v314 = vmax.f32 %v306, 0.0
        %v315 = vmax.f32 %v307, 0.0
        %v316 = vmax.f32 %v308, 0.0
        %v317 = vmax.f32 %v309, 0.0
        %v318 = vmax.f32 %v310, 0.0
        %v319 = vmax.f32 %v311, 0.0
        %v320 = vpack.c.bf16 %v313, %v312
        %v321 = vpack.c.bf16 %v315, %v314
        %v322 = vpack.c.bf16 %v317, %v316
        %v323 = vpack.c.bf16 %v319, %v318
        %v328 = vunpack.c.l.b16 %v320
        %v329 = vunpack.c.h.b16 %v320
        %v330 = vunpack.c.l.b16 %v321
        %v331 = vunpack.c.h.b16 %v321
        %v332 = vunpack.c.l.b16 %v322
        %v333 = vunpack.c.h.b16 %v322
        %v334 = vunpack.c.l.b16 %v323
        %v335 = vunpack.c.h.b16 %v323
        %v336 = vpack.c.b16 %v328, %v328
        %v337 = vpack.c.b16 %v329, %v329
        %v338 = vpack.c.b16 %v330, %v330
        %v339 = vpack.c.b16 %v331, %v331
        %v340 = vpack.c.b16 %v332, %v332
        %v341 = vpack.c.b16 %v333, %v333
        %v342 = vpack.c.b16 %v334, %v334
        %v343 = vpack.c.b16 %v335, %v335
        %352 = vst [vmem:[%s263] sm:$0xf] %v336
        %353 = vst [vmem:[%s263 + $0x4] sm:$0xf] %v337
        %354 = vst [vmem:[%s263 + $0x8] sm:$0xf] %v338
        %355 = vst [vmem:[%s263 + $0xc] sm:$0xf] %v339
        %356 = vst [vmem:[%s263 + $0x10] sm:$0xf] %v340
        %357 = vst [vmem:[%s263 + $0x14] sm:$0xf] %v341
        %358 = vst [vmem:[%s263 + $0x18] sm:$0xf] %v342
        %359 = vst [vmem:[%s263 + $0x1c] sm:$0xf] %v343
        %v360 = vadd.f32 %v312, %v313
        %v361 = vadd.f32 %v360, %v314
        %v362 = vadd.f32 %v361, %v315
        %v363 = vadd.f32 %v362, %v316
        %v364 = vadd.f32 %v363, %v317
        %v365 = vadd.f32 %v364, %v318
        %v366 = vadd.f32 %v365, %v319
        %v367 = vrot.slane %v366, 4
        %v368 = vadd.f32 %v366, %v367
        %v369 = vrot.slane %v368, 2
        %v370 = vadd.f32 %v368, %v369
        %v371 = vrot.slane %v370, 1
        %v372 = vadd.f32 %v370, %v371
        %v373 = vmul.f32 %v372, 0.015625
        %v374 = vpack.c.bf16 %v373, %v373
        %v375 = vld [vmem:[%s3] sm:$0xf]
        %v376 = vld [vmem:[%s3 + $0x4] sm:$0xf]
        %v377 = vld [vmem:[%s3 + $0x8] sm:$0xf]
        %v378 = vld [vmem:[%s3 + $0xc] sm:$0xf]
        %v379 = vld [vmem:[%s3 + $0x10] sm:$0xf]
        %v380 = vld [vmem:[%s3 + $0x14] sm:$0xf]
        %v381 = vld [vmem:[%s3 + $0x18] sm:$0xf]
        %v382 = vld [vmem:[%s3 + $0x1c] sm:$0xf]
        %v383 = vld [vmem:[%s3 + $0x20] sm:$0xf]
        %v384 = vld [vmem:[%s3 + $0x24] sm:$0xf]
        %v385 = vld [vmem:[%s3 + $0x28] sm:$0xf]
        %v386 = vld [vmem:[%s3 + $0x2c] sm:$0xf]
        %v387 = vld [vmem:[%s3 + $0x30] sm:$0xf]
        %v388 = vld [vmem:[%s3 + $0x34] sm:$0xf]
        %v389 = vld [vmem:[%s3 + $0x38] sm:$0xf]
        %v390 = vld [vmem:[%s3 + $0x3c] sm:$0xf]
        %v391 = vld [vmem:[%s4] sm:$0x1]
        %v408 = vunpack.c.l.b16 %v375
        %v409 = vunpack.c.l.b16 %v376
        %v410 = vunpack.c.l.b16 %v377
        %v411 = vunpack.c.l.b16 %v378
        %v412 = vunpack.c.l.b16 %v379
        %v413 = vunpack.c.l.b16 %v380
        %v414 = vunpack.c.l.b16 %v381
        %v415 = vunpack.c.l.b16 %v382
        %v416 = vunpack.c.l.b16 %v383
        %v417 = vunpack.c.l.b16 %v384
        %v418 = vunpack.c.l.b16 %v385
        %v419 = vunpack.c.l.b16 %v386
        %v420 = vunpack.c.l.b16 %v387
        %v421 = vunpack.c.l.b16 %v388
        %v422 = vunpack.c.l.b16 %v389
        %v423 = vunpack.c.l.b16 %v390
        %v424 = vpack.c.b16 %v409, %v408
        %v425 = vpack.c.b16 %v411, %v410
        %v426 = vpack.c.b16 %v413, %v412
        %v427 = vpack.c.b16 %v415, %v414
        %v428 = vpack.c.b16 %v417, %v416
        %v429 = vpack.c.b16 %v419, %v418
        %v430 = vpack.c.b16 %v421, %v420
        %v431 = vpack.c.b16 %v423, %v422
        %440 = vmatprep.subr.bf16.mxu0 0
        %441 = vmatpush1.bf16.msra.mxu0 %v424
        %442 = vmatprep.subr.bf16.mxu0 0
        %443 = vmatpush1.bf16.msra.mxu0 %v425
        %444 = vmatprep.subr.bf16.mxu0 0
        %445 = vmatpush1.bf16.msra.mxu0 %v426
        %446 = vmatprep.subr.bf16.mxu0 0
        %447 = vmatpush1.bf16.msra.mxu0 %v427
        %448 = vmatprep.subr.bf16.mxu0 0
        %449 = vmatpush1.bf16.msra.mxu0 %v428
        %450 = vmatprep.subr.bf16.mxu0 0
        %451 = vmatpush1.bf16.msra.mxu0 %v429
        %452 = vmatprep.subr.bf16.mxu0 0
        %453 = vmatpush1.bf16.msra.mxu0 %v430
        %454 = vmatprep.subr.bf16.mxu0 0
        %455 = vmatpush1.bf16.msra.mxu0 %v431
        %456 = vmatprep.subr.bf16.mxu0 0
        %457 = vmatpush1.bf16.msra.mxu0 0
        %458 = vmatprep.subr.bf16.mxu0 0
        %459 = vmatpush1.bf16.msra.mxu0 0
        %460 = vmatprep.subr.bf16.mxu0 0
        %461 = vmatpush1.bf16.msra.mxu0 0
        %462 = vmatprep.subr.bf16.mxu0 0
        %463 = vmatpush1.bf16.msra.mxu0 0
        %464 = vmatprep.subr.bf16.mxu0 0
        %465 = vmatpush1.bf16.msra.mxu0 0
        %466 = vmatprep.subr.bf16.mxu0 0
        %467 = vmatpush1.bf16.msra.mxu0 0
        %468 = vmatprep.subr.bf16.mxu0 0
        %469 = vmatpush1.bf16.msra.mxu0 0
        %470 = vmatprep.subr.bf16.mxu0 0
        %471 = vmatpush1.bf16.msra.mxu0 0
        %472 = vmatprep.mubr.bf16.mxu0 0
        %473 = vmatmul.mubr.bf16.gmra.mrb[0].mxu0 %v374
        %v474 = vpop.f32.mrb[0].mxu0
        %v475 = vadd.f32 %v391, %v474
        %v476 = vpop.f32.mrb[0].mxu0
        %v477 = vpop.f32.mrb[0].mxu0
        %v478 = vpop.f32.mrb[0].mxu0
        %479 = vdwg.mxu0
        %480 = vst [vmem:[%s252] sm:$0x1] %v475
        %s481 = smul.u32 8, %s21
        %p482 = scmp.lt.s32.totalorder %s481, 15
        %s483 = scalar_select %p482, %s481, 15
        %s484 = smul.addr %s483, 4
        %s485 = scalar_lea.vmem %s5, %s484
        %s486 = sand.u32 %s165, 1
        %s487 = scalar_lea.sflag [#allocation3], %s486
        %s488 = sand.u32 %s165, 1
        %s489 = scalar_lea.vmem [#allocation2], %s488
        // Predicated region
        $region41: #{simkd_forward.7} parent=39 // pred_check
          %p490 = pneg %p149
        $region42: #{simkd_forward.7} parent=39 // pred_check_branch
          %492 = sbr.rel (%p490) target = $region44
        $region43: #{simkd_forward.7} parent=39 // pred_region
          %s493 = smul.u32 8, %s21
        $region44: #{simkd_forward.7} parent=39 // pred_fallthru
          _
        // Predicated region
        $region45: #{simkd_forward.7} parent=39 // pred_check
          %p494 = pneg %p175
        $region46: #{simkd_forward.7} parent=39 // pred_check_branch
          %496 = sbr.rel (%p494) target = $region48
        $region47: #{simkd_forward.7} parent=39 // pred_region
          %s498 = ssub.s32 16, 16
          %499 = vsyncadd %s487, %s498
          %s500 = smul.addr %s21, 16
          %s501 = scalar_lea.hbm %s6, %s500
          %s503 = sshll.u32 %s489, 4
          %s504 = int_to_ptr.vmem [resolvable:$true] %s503
          %506 = dma.vmem_to_hbm [thread:$0]  %s504, 16, %s501, %s487
        $region48: #{simkd_forward.7} parent=39 // pred_fallthru
          _
      $region40: #{simkd_forward.7} parent=5 // pred_fallthru
        _
      %p507 = scmp.le.s32.totalorder 2, %s16
      // Predicated region
      $region49: #{simkd_forward.7} parent=5 // pred_check
        %p508 = pneg %p507
      $region50: #{simkd_forward.7} parent=5 // pred_check_branch
        %510 = sbr.rel (%p508) target = $region52
      $region51: #{simkd_forward.7} parent=5 // pred_region
        %s511 = ssub.s32 %s16, 2
        // Predicated region
        $region53: #{simkd_forward.7} parent=51 // pred_check
          %p512 = pneg %p155
        $region54: #{simkd_forward.7} parent=51 // pred_check_branch
          %514 = sbr.rel (%p512) target = $region56
        $region55: #{simkd_forward.7} parent=51 // pred_region
          %s515 = smul.u32 8, %s22
          %p516 = scmp.lt.s32.totalorder %s515, 15
          %s517 = scalar_select %p516, %s515, 15
          %s518 = smul.addr %s517, 4
          %s519 = scalar_lea.vmem %s5, %s518
        $region56: #{simkd_forward.7} parent=51 // pred_fallthru
          _
        // Predicated region
        $region57: #{simkd_forward.7} parent=51 // pred_check
          %p520 = pneg %p181
        $region58: #{simkd_forward.7} parent=51 // pred_check_branch
          %522 = sbr.rel (%p520) target = $region60
        $region59: #{simkd_forward.7} parent=51 // pred_region
          %s523 = sand.u32 %s166, 1
          %s524 = scalar_lea.sflag [#allocation3], %s523
          %s525 = sand.u32 %s166, 1
          %s526 = scalar_lea.vmem [#allocation2], %s525
          %527 = dma.done %s524, 16
        $region60: #{simkd_forward.7} parent=51 // pred_fallthru
          _
      $region52: #{simkd_forward.7} parent=5 // pred_fallthru
        _
    $region6: #{simkd_forward.7} parent=1 // loop_footer
      %s20 = sadd.s32 1, %s16
    $region7: #{simkd_forward.7} parent=1 // loop_footer_branch
      %15 = sbr.rel target = $region3
    $region8: #{simkd_forward.7} parent=1 // loop_exit
      _
    %528 = vsyncpa [#allocation3], 1
    %s529 = scalar_lea.sflag [#allocation3], 1
    %530 = vsyncpa %s529, 1

// kernel: simkd_forward.5
$region0: #{simkd_forward.5}
  #allocation0 [shape = 'u32[]', space=smem, size = 0x4, offset = 0x4, fixed_abs, tag = 'smem constant byte address 0x4 - core index']
  #allocation1 [shape = 'u32[144,128]{1,0:T(1,128)}', space=vmem, size = 0x12000, scoped, tag = 'internal scratch']
  %s0 = inlined_call_operand.vmem [shape: bf16[128,128], index: 0, kind: input, shape index: {}]
  %s1 = inlined_call_operand.vmem [shape: f32[1,128], index: 1, kind: input, shape index: {}]
  %s2 = inlined_call_operand.vmem [shape: f32[1,128], index: 2, kind: input, shape index: {}]
  %s3 = inlined_call_operand.hbm [shape: bf16[3,384,128], index: 3, kind: input, shape index: {}]
  %s4 = inlined_call_operand.vmem [shape: bf16[128,128], index: 4, kind: output, shape index: {0}]
  %s5 = inlined_call_operand.vmem [shape: f32[2,2,128], index: 5, kind: output, shape index: {1}]
  %6 = xla_tuple %s4, %s5
  %s7 = sld [smem:[#allocation0]]
  $region61: #{simkd_forward.5} parent=0
    _
  %s9 = ssub.s32 1, %s7
  %s10 = scalar_select 0, %s9, %s7
  $region1: #{simkd_forward.5} parent=0
    #allocation2 [shape = 'u8[294912]{0}', space=vmem, size = 0x48000, scoped, tag = 'input window, operand 3, single buffered']
    #allocation3 [shape = 's32[2]{0}', space=sflag, size = 0x8, scoped, tag = 'scoped memory for simkd_forward.5']
    %11 = vsyncpa [#allocation3], 0
    loop: start=0, step=1, limit=4
    $region2: #{simkd_forward.5} parent=1 // loop_pre_header
      _
    $region3: #{simkd_forward.5} parent=1 // loop_header
      %s13 = sphi 0, %s17
      %p14 = scmp.ge.s32.totalorder %s13, 4
      %s23 = sphi 0, %s25
      %s26 = sphi 0, %s23
      %s27 = sphi 0, %s26
      %s43 = sphi 0, %s27
      %s47 = sphi 0, %s47
      %s49 = sphi 0, %s47
      %s50 = sphi 0, %s49
      %s64 = sphi 0, %s50
      %s68 = sphi 0, %s68
      %s70 = sphi 0, %s68
      %s71 = sphi 0, %s70
      %s85 = sphi 0, %s71
      %s89 = sphi 0, %s89
      %s91 = sphi 0, %s89
      %s92 = sphi 0, %s91
      %s106 = sphi 0, %s92
      %s112 = sphi 0, %s114
      %s115 = sphi 0, %s112
      %s116 = sphi 0, %s115
      %s132 = sphi 0, %s116
      %s138 = sphi 0, %s140
      %s141 = sphi 0, %s138
      %s142 = sphi 0, %s141
      %s158 = sphi 0, %s142
    $region4: #{simkd_forward.5} parent=1 // loop_header_branch
      %16 = sbr.rel (%p14) target = $region8
    $region5: #{simkd_forward.5} parent=1 // loop_body
      %s18 = ssub.s32 %s13, 1
      %s19 = ssub.s32 %s13, 2
      %s20 = sadd.s32 %s13, 1
      %s21 = ssub.s32 %s13, %s20
      %p22 = scmp.eq.s32.totalorder %s21, 0
      %s24 = sadd.s32 %s23, 1
      %s25 = scalar_select %p22, %s23, %s24
      %p28 = pneg %p22
      %p29 = scmp.eq.s32.totalorder %s13, 1
      %p30 = por %p28, %p29
      %p31 = scmp.ne.s32.totalorder %s23, %s26
      %p32 = scmp.eq.s32.totalorder %s13, 0
      %p33 = por %p31, %p32
      %p34 = scmp.ne.s32.totalorder %s23, %s26
      %p35 = scmp.eq.s32.totalorder %s18, 1
      %p36 = por %p34, %p35
      %p37 = scmp.ne.s32.totalorder %s26, %s27
      %p38 = scmp.eq.s32.totalorder %s18, 0
      %p39 = por %p37, %p38
      %p40 = scmp.ne.s32.totalorder %s26, %s27
      %p41 = scmp.eq.s32.totalorder %s19, 1
      %p42 = por %p40, %p41
      %p44 = scmp.ne.s32.totalorder %s27, %s43
      %p45 = scmp.eq.s32.totalorder %s19, 0
      %p46 = por %p44, %p45
      %s48 = sadd.s32 %s47, 1
      %p51 = scmp.eq.s32.totalorder %s13, 1
      %p52 = scmp.ne.s32.totalorder %s47, %s49
      %p53 = scmp.eq.s32.totalorder %s13, 0
      %p54 = por %p52, %p53
      %p55 = scmp.ne.s32.totalorder %s47, %s49
      %p56 = scmp.eq.s32.totalorder %s18, 1
      %p57 = por %p55, %p56
      %p58 = scmp.ne.s32.totalorder %s49, %s50
      %p59 = scmp.eq.s32.totalorder %s18, 0
      %p60 = por %p58, %p59
      %p61 = scmp.ne.s32.totalorder %s49, %s50
      %p62 = scmp.eq.s32.totalorder %s19, 1
      %p63 = por %p61, %p62
      %p65 = scmp.ne.s32.totalorder %s50, %s64
      %p66 = scmp.eq.s32.totalorder %s19, 0
      %p67 = por %p65, %p66
      %s69 = sadd.s32 %s68, 1
      %p72 = scmp.eq.s32.totalorder %s13, 1
      %p73 = scmp.ne.s32.totalorder %s68, %s70
      %p74 = scmp.eq.s32.totalorder %s13, 0
      %p75 = por %p73, %p74
      %p76 = scmp.ne.s32.totalorder %s68, %s70
      %p77 = scmp.eq.s32.totalorder %s18, 1
      %p78 = por %p76, %p77
      %p79 = scmp.ne.s32.totalorder %s70, %s71
      %p80 = scmp.eq.s32.totalorder %s18, 0
      %p81 = por %p79, %p80
      %p82 = scmp.ne.s32.totalorder %s70, %s71
      %p83 = scmp.eq.s32.totalorder %s19, 1
      %p84 = por %p82, %p83
      %p86 = scmp.ne.s32.totalorder %s71, %s85
      %p87 = scmp.eq.s32.totalorder %s19, 0
      %p88 = por %p86, %p87
      %s90 = sadd.s32 %s89, 1
      %p93 = scmp.eq.s32.totalorder %s13, 1
      %p94 = scmp.ne.s32.totalorder %s89, %s91
      %p95 = scmp.eq.s32.totalorder %s13, 0
      %p96 = por %p94, %p95
      %p97 = scmp.ne.s32.totalorder %s89, %s91
      %p98 = scmp.eq.s32.totalorder %s18, 1
      %p99 = por %p97, %p98
      %p100 = scmp.ne.s32.totalorder %s91, %s92
      %p101 = scmp.eq.s32.totalorder %s18, 0
      %p102 = por %p100, %p101
      %p103 = scmp.ne.s32.totalorder %s91, %s92
      %p104 = scmp.eq.s32.totalorder %s19, 1
      %p105 = por %p103, %p104
      %p107 = scmp.ne.s32.totalorder %s92, %s106
      %p108 = scmp.eq.s32.totalorder %s19, 0
      %p109 = por %p107, %p108
      %s110 = ssub.s32 %s13, %s20
      %p111 = scmp.eq.s32.totalorder %s110, 0
      %s113 = sadd.s32 %s112, 1
      %s114 = scalar_select %p111, %s112, %s113
      %p117 = pneg %p111
      %p118 = scmp.eq.s32.totalorder %s13, 1
      %p119 = por %p117, %p118
      %p120 = scmp.ne.s32.totalorder %s112, %s115
      %p121 = scmp.eq.s32.totalorder %s13, 0
      %p122 = por %p120, %p121
      %p123 = scmp.ne.s32.totalorder %s112, %s115
      %p124 = scmp.eq.s32.totalorder %s18, 1
      %p125 = por %p123, %p124
      %p126 = scmp.ne.s32.totalorder %s115, %s116
      %p127 = scmp.eq.s32.totalorder %s18, 0
      %p128 = por %p126, %p127
      %p129 = scmp.ne.s32.totalorder %s115, %s116
      %p130 = scmp.eq.s32.totalorder %s19, 1
      %p131 = por %p129, %p130
      %p133 = scmp.ne.s32.totalorder %s116, %s132
      %p134 = scmp.eq.s32.totalorder %s19, 0
      %p135 = por %p133, %p134
      %s136 = ssub.s32 %s13, %s20
      %p137 = scmp.eq.s32.totalorder %s136, 0
      %s139 = sadd.s32 %s138, 1
      %s140 = scalar_select %p137, %s138, %s139
      %p143 = pneg %p137
      %p144 = scmp.eq.s32.totalorder %s13, 1
      %p145 = por %p143, %p144
      %p146 = scmp.ne.s32.totalorder %s138, %s141
      %p147 = scmp.eq.s32.totalorder %s13, 0
      %p148 = por %p146, %p147
      %p149 = scmp.ne.s32.totalorder %s138, %s141
      %p150 = scmp.eq.s32.totalorder %s18, 1
      %p151 = por %p149, %p150
      %p152 = scmp.ne.s32.totalorder %s141, %s142
      %p153 = scmp.eq.s32.totalorder %s18, 0
      %p154 = por %p152, %p153
      %p155 = scmp.ne.s32.totalorder %s141, %s142
      %p156 = scmp.eq.s32.totalorder %s19, 1
      %p157 = por %p155, %p156
      %p159 = scmp.ne.s32.totalorder %s142, %s158
      %p160 = scmp.eq.s32.totalorder %s19, 0
      %p161 = por %p159, %p160
      %p162 = scmp.le.s32.totalorder 1, %s13
      %p163 = scmp.lt.s32.totalorder %s13, 3
      %p164 = pnand %p162, %p163
      %p165 = pneg %p164
      // Predicated region
      $region9: #{simkd_forward.5} parent=5 // pred_check
        _
      $region10: #{simkd_forward.5} parent=5 // pred_check_branch
        %167 = sbr.rel (%p164) target = $region12
      $region11: #{simkd_forward.5} parent=5 // pred_region
        %s168 = ssub.s32 %s13, 1
        // Predicated region
        $region13: #{simkd_forward.5} parent=11 // pred_check
          %p169 = pneg %p60
        $region14: #{simkd_forward.5} parent=11 // pred_check_branch
          %171 = sbr.rel (%p169) target = $region16
        $region15: #{simkd_forward.5} parent=11 // pred_region
          _
        $region16: #{simkd_forward.5} parent=11 // pred_fallthru
          _
        // Predicated region
        $region17: #{simkd_forward.5} parent=11 // pred_check
          %p172 = pneg %p81
        $region18: #{simkd_forward.5} parent=11 // pred_check_branch
          %174 = sbr.rel (%p172) target = $region20
        $region19: #{simkd_forward.5} parent=11 // pred_region
          _
        $region20: #{simkd_forward.5} parent=11 // pred_fallthru
          _
        // Predicated region
        $region21: #{simkd_forward.5} parent=11 // pred_check
          %p175 = pneg %p102
        $region22: #{simkd_forward.5} parent=11 // pred_check_branch
          %177 = sbr.rel (%p175) target = $region24
        $region23: #{simkd_forward.5} parent=11 // pred_region
          %s179 = ssub.s32 9216, 9216
          %180 = vsyncadd [#allocation3], %s179
          %s181 = sshll.u32 [#allocation2], 4
          %s182 = int_to_ptr.vmem [resolvable:$true] %s181
          %187 = dma.hbm_to_vmem [thread:$0]  %s3, 9216, %s182, [#allocation3], 64, 64, 4
        $region24: #{simkd_forward.5} parent=11 // pred_fallthru
          _
      $region12: #{simkd_forward.5} parent=5 // pred_fallthru
        _
      %p188 = scmp.lt.s32.totalorder %s13, 2
      // Predicated region
      $region25: #{simkd_forward.5} parent=5 // pred_check
        %p189 = pneg %p188
      $region26: #{simkd_forward.5} parent=5 // pred_check_branch
        %191 = sbr.rel (%p189) target = $region28
      $region27: #{simkd_forward.5} parent=5 // pred_region
        // Predicated region
        $region29: #{simkd_forward.5} parent=27 // pred_check
          %p192 = pneg %p33
        $region30: #{simkd_forward.5} parent=27 // pred_check_branch
          %194 = sbr.rel (%p192) target = $region32
        $region31: #{simkd_forward.5} parent=27 // pred_region
          %s195 = smul.u32 8, %s13
          %p196 = scmp.lt.s32.totalorder %s195, 15
          %s197 = scalar_select %p196, %s195, 15
          %s198 = smul.addr %s197, 4
          %s199 = scalar_lea.vmem %s0, %s198
          %s200 = smul.u32 8, %s13
        $region32: #{simkd_forward.5} parent=27 // pred_fallthru
          _
      $region28: #{simkd_forward.5} parent=5 // pred_fallthru
        _
      %p201 = scmp.le.s32.totalorder 1, %s13
      %p202 = scmp.lt.s32.totalorder %s13, 3
      %p203 = pnand %p201, %p202
      %p204 = pneg %p203
      // Predicated region
      $region33: #{simkd_forward.5} parent=5 // pred_check
        _
      $region34: #{simkd_forward.5} parent=5 // pred_check_branch
        %206 = sbr.rel (%p203) target = $region36
      $region35: #{simkd_forward.5} parent=5 // pred_region
        %s207 = ssub.s32 %s13, 1
        // Predicated region
        $region37: #{simkd_forward.5} parent=35 // pred_check
          %p208 = pneg %p102
        $region38: #{simkd_forward.5} parent=35 // pred_check_branch
          %210 = sbr.rel (%p208) target = $region40
        $region39: #{simkd_forward.5} parent=35 // pred_region
          %211 = dma.done [#allocation3], 9216
        $region40: #{simkd_forward.5} parent=35 // pred_fallthru
          _
        %s212 = smul.u32 8, %s18
        %p213 = scmp.lt.s32.totalorder %s212, 15
        %s214 = scalar_select %p213, %s212, 15
        %s215 = smul.addr %s214, 4
        %s216 = scalar_lea.vmem %s0, %s215
        %p217 = pneg %p39
        %p218 = pneg %p36
        %p219 = pneg %p60
        %p220 = pneg %p57
        %p221 = pneg %p81
        %p222 = pneg %p78
        %p223 = pneg %p102
        %p224 = pneg %p99
        %p225 = pneg %p128
        %p226 = pneg %p125
        %s227 = smul.u32 8, %s18
        %p228 = scmp.lt.s32.totalorder %s227, 15
        %s229 = scalar_select %p228, %s227, 15
        %s230 = smul.addr %s229, 4
        %s231 = scalar_lea.vmem %s4, %s230
        %p232 = pneg %p154
        %p233 = pneg %p151
        %p234 = scmp.lt.s32.totalorder %s18, 1
        %s235 = scalar_select %p234, %s18, 1
        %s236 = smul.addr %s235, 2
        %s237 = scalar_lea.vmem %s5, %s236
        %s238 = smul.u32 8, %s18
        %p239 = scmp.lt.s32.totalorder %s238, 15
        %s240 = scalar_select %p239, %s238, 15
        %s241 = smul.addr %s240, 4
        %s242 = scalar_lea.vmem %s0, %s241
        %s243 = smul.u32 8, %s18
        %s244 = smul.u32 8, %s18
        %p245 = scmp.lt.s32.totalorder %s244, 15
        %s246 = scalar_select %p245, %s244, 15
        %s247 = smul.addr %s246, 4
        %s248 = scalar_lea.vmem %s4, %s247
        %s249 = smul.u32 8, %s18
        %p250 = scmp.lt.s32.totalorder %s18, 1
        %s251 = scalar_select %p250, %s18, 1
        %s252 = smul.addr %s251, 2
        %s253 = scalar_lea.vmem %s5, %s252
        %v255 = vld [vmem:[%s242] sm:$0xf]
        %v256 = vld [vmem:[%s242 + $0x4] sm:$0xf]
        %v257 = vld [vmem:[%s242 + $0x8] sm:$0xf]
        %v258 = vld [vmem:[%s242 + $0xc] sm:$0xf]
        %v259 = vld [vmem:[%s242 + $0x10] sm:$0xf]
        %v260 = vld [vmem:[%s242 + $0x14] sm:$0xf]
        %v261 = vld [vmem:[%s242 + $0x18] sm:$0xf]
        %v262 = vld [vmem:[%s242 + $0x1c] sm:$0xf]
        %v263 = vunpack.c.l.bf16 %v255
        %v264 = vunpack.c.l.bf16 %v256
        %v265 = vunpack.c.l.bf16 %v257
        %v266 = vunpack.c.l.bf16 %v258
        %v267 = vunpack.c.l.bf16 %v259
        %v268 = vunpack.c.l.bf16 %v260
        %v269 = vunpack.c.l.bf16 %v261
        %v270 = vunpack.c.l.bf16 %v262
        %v271 = vld [vmem:[%s1] sm:$0x1]
        %v273 = vlaneseq
        %v274 = vshrl.u32 %v273, 7
        %v275 = vsub.s32 0, %v274
        %v276 = vrot.slane %v271, %v275
        %v278 = vmul.f32 %v263, %v276
        %v279 = vmul.f32 %v264, %v276
        %v280 = vmul.f32 %v265, %v276
        %v281 = vmul.f32 %v266, %v276
        %v282 = vmul.f32 %v267, %v276
        %v283 = vmul.f32 %v268, %v276
        %v284 = vmul.f32 %v269, %v276
        %v285 = vmul.f32 %v270, %v276
        %v286 = vld [vmem:[%s2] sm:$0x1]
        %v288 = vlaneseq
        %v289 = vshrl.u32 %v288, 7
        %v290 = vsub.s32 0, %v289
        %v291 = vrot.slane %v286, %v290
        %v293 = vadd.f32 %v278, %v291
        %v294 = vadd.f32 %v279, %v291
        %v295 = vadd.f32 %v280, %v291
        %v296 = vadd.f32 %v281, %v291
        %v297 = vadd.f32 %v282, %v291
        %v298 = vadd.f32 %v283, %v291
        %v299 = vadd.f32 %v284, %v291
        %v300 = vadd.f32 %v285, %v291
        %v301 = vmax.f32 %v293, 0.0
        %v302 = vmax.f32 %v294, 0.0
        %v303 = vmax.f32 %v295, 0.0
        %v304 = vmax.f32 %v296, 0.0
        %v305 = vmax.f32 %v297, 0.0
        %v306 = vmax.f32 %v298, 0.0
        %v307 = vmax.f32 %v299, 0.0
        %v308 = vmax.f32 %v300, 0.0
        %v309 = vpack.c.bf16 %v302, %v301
        %v310 = vpack.c.bf16 %v304, %v303
        %v311 = vpack.c.bf16 %v306, %v305
        %v312 = vpack.c.bf16 %v308, %v307
        %v317 = vunpack.c.l.b16 %v309
        %v318 = vunpack.c.h.b16 %v309
        %v319 = vunpack.c.l.b16 %v310
        %v320 = vunpack.c.h.b16 %v310
        %v321 = vunpack.c.l.b16 %v311
        %v322 = vunpack.c.h.b16 %v311
        %v323 = vunpack.c.l.b16 %v312
        %v324 = vunpack.c.h.b16 %v312
        %v325 = vpack.c.b16 %v317, %v317
        %v326 = vpack.c.b16 %v318, %v318
        %v327 = vpack.c.b16 %v319, %v319
        %v328 = vpack.c.b16 %v320, %v320
        %v329 = vpack.c.b16 %v321, %v321
        %v330 = vpack.c.b16 %v322, %v322
        %v331 = vpack.c.b16 %v323, %v323
        %v333 = vshrl.u32 0, 16
        %v335 = vrot.slane %v333, 7
        %v336 = vshll.u32 0, 16
        %v338 = vor.u32 %v335, %v336
        %v340 = vshrl.u32 %v325, 16
        %v342 = vrot.slane %v340, 7
        %v343 = vshll.u32 %v325, 16
        %v345 = vor.u32 %v342, %v343
        %v347 = vshrl.u32 %v326, 16
        %v349 = vrot.slane %v347, 7
        %v350 = vshll.u32 %v326, 16
        %v352 = vor.u32 %v349, %v350
        %v354 = vshrl.u32 %v327, 16
        %v356 = vrot.slane %v354, 7
        %v357 = vshll.u32 %v327, 16
        %v359 = vor.u32 %v356, %v357
        %v361 = vshrl.u32 %v328, 16
        %v363 = vrot.slane %v361, 7
        %v364 = vshll.u32 %v328, 16
        %v366 = vor.u32 %v363, %v364
        %v368 = vshrl.u32 %v329, 16
        %v370 = vrot.slane %v368, 7
        %v371 = vshll.u32 %v329, 16
        %v373 = vor.u32 %v370, %v371
        %v375 = vshrl.u32 %v330, 16
        %v377 = vrot.slane %v375, 7
        %v378 = vshll.u32 %v330, 16
        %v380 = vor.u32 %v377, %v378
        %v382 = vshrl.u32 %v331, 16
        %v384 = vrot.slane %v382, 7
        %v385 = vshll.u32 %v331, 16
        %v387 = vor.u32 %v384, %v385
        %vm396 = vcmask 1040384
        %vm397 = vsmask.f32 256
        %vm398 = vmand %vm396, %vm397
        %v399 = vsel %vm398, 0, %v338
        %v400 = vsel %vm398, 0, %v345
        %v401 = vsel %vm398, 0, %v352
        %v402 = vsel %vm398, 0, %v359
        %v403 = vsel %vm398, 0, %v366
        %v404 = vsel %vm398, 0, %v373
        %v405 = vsel %vm398, 0, %v380
        %v406 = vsel %vm398, 0, %v387
        %v407 = vrot.slane %v336, 1
        %v408 = vor.u32 %v333, %v407
        %v409 = vrot.slane %v343, 1
        %v410 = vor.u32 %v340, %v409
        %v411 = vrot.slane %v350, 1
        %v412 = vor.u32 %v347, %v411
        %v413 = vrot.slane %v357, 1
        %v414 = vor.u32 %v354, %v413
        %v415 = vrot.slane %v364, 1
        %v416 = vor.u32 %v361, %v415
        %v417 = vrot.slane %v371, 1
        %v418 = vor.u32 %v368, %v417
        %v419 = vrot.slane %v378, 1
        %v420 = vor.u32 %v375, %v419
        %v421 = vrot.slane %v385, 1
        %v422 = vor.u32 %v382, %v421
        %vm431 = vcmask 1043456
        %vm432 = vsmask.f32 3328
        %vm433 = vmand %vm431, %vm432
        %v434 = vsel %vm433, %v408, 0
        %v435 = vsel %vm433, %v410, 0
        %v436 = vsel %vm433, %v412, 0
        %v437 = vsel %vm433, %v414, 0
        %v438 = vsel %vm433, %v416, 0
        %v439 = vsel %vm433, %v418, 0
        %v440 = vsel %vm433, %v420, 0
        %v441 = vsel %vm433, %v422, 0
        %v459 = vunpack.c.l.b16 %v399
        %v460 = vunpack.c.l.b16 0
        %v461 = vunpack.c.l.b16 %v434
        %v462 = vunpack.c.l.b16 %v400
        %v463 = vunpack.c.l.b16 %v435
        %v464 = vunpack.c.l.b16 %v401
        %v465 = vunpack.c.l.b16 %v436
        %v466 = vunpack.c.l.b16 %v402
        %v467 = vunpack.c.l.b16 %v437
        %v468 = vunpack.c.l.b16 %v403
        %v469 = vunpack.c.l.b16 %v438
        %v470 = vunpack.c.l.b16 %v404
        %v471 = vunpack.c.l.b16 %v439
        %v472 = vunpack.c.l.b16 %v405
        %v473 = vunpack.c.l.b16 %v440
        %v474 = vunpack.c.l.b16 %v406
        %v475 = vunpack.c.l.b16 %v441
        %v476 = vld [vmem:[#allocation2] sm:$0xf]
        %v477 = vld [vmem:[#allocation2 + $0x4] sm:$0xf]
        %v478 = vld [vmem:[#allocation2 + $0x8] sm:$0xf]
        %v479 = vld [vmem:[#allocation2 + $0xc] sm:$0xf]
        %v480 = vld [vmem:[#allocation2 + $0x10] sm:$0xf]
        %v481 = vld [vmem:[#allocation2 + $0x14] sm:$0xf]
        %v482 = vld [vmem:[#allocation2 + $0x18] sm:$0xf]
        %v483 = vld [vmem:[#allocation2 + $0x1c] sm:$0xf]
        %v484 = vld [vmem:[#allocation2 + $0x20] sm:$0xf]
        %v485 = vld [vmem:[#allocation2 + $0x24] sm:$0xf]
        %v486 = vld [vmem:[#allocation2 + $0x28] sm:$0xf]
        %v487 = vld [vmem:[#allocation2 + $0x2c] sm:$0xf]
        %v488 = vld [vmem:[#allocation2 + $0x30] sm:$0xf]
        %v489 = vld [vmem:[#allocation2 + $0x34] sm:$0xf]
        %v490 = vld [vmem:[#allocation2 + $0x38] sm:$0xf]
        %v491 = vld [vmem:[#allocation2 + $0x3c] sm:$0xf]
        %v492 = vld [vmem:[#allocation2 + $0x40] sm:$0xf]
        %v493 = vld [vmem:[#allocation2 + $0x44] sm:$0xf]
        %v494 = vld [vmem:[#allocation2 + $0x48] sm:$0xf]
        %v495 = vld [vmem:[#allocation2 + $0x4c] sm:$0xf]
        %v496 = vld [vmem:[#allocation2 + $0x50] sm:$0xf]
        %v497 = vld [vmem:[#allocation2 + $0x54] sm:$0xf]
        %v498 = vld [vmem:[#allocation2 + $0x58] sm:$0xf]
        %v499 = vld [vmem:[#allocation2 + $0x5c] sm:$0xf]
        %v500 = vld [vmem:[#allocation2 + $0x60] sm:$0xf]
        %v501 = vld [vmem:[#allocation2 + $0x64] sm:$0xf]
        %v502 = vld [vmem:[#allocation2 + $0x68] sm:$0xf]
        %v503 = vld [vmem:[#allocation2 + $0x6c] sm:$0xf]
        %v504 = vld [vmem:[#allocation2 + $0x70] sm:$0xf]
        %v505 = vld [vmem:[#allocation2 + $0x74] sm:$0xf]
        %v506 = vld [vmem:[#allocation2 + $0x78] sm:$0xf]
        %v507 = vld [vmem:[#allocation2 + $0x7c] sm:$0xf]
        %v508 = vld [vmem:[#allocation2 + $0x80] sm:$0xf]
        %v509 = vld [vmem:[#allocation2 + $0x84] sm:$0xf]
        %v510 = vld [vmem:[#allocation2 + $0x88] sm:$0xf]
        %v511 = vld [vmem:[#allocation2 + $0x8c] sm:$0xf]
        %v512 = vld [vmem:[#allocation2 + $0x90] sm:$0xf]
        %v513 = vld [vmem:[#allocation2 + $0x94] sm:$0xf]
        %v514 = vld [vmem:[#allocation2 + $0x98] sm:$0xf]
        %v515 = vld [vmem:[#allocation2 + $0x9c] sm:$0xf]
        %v516 = vld [vmem:[#allocation2 + $0xa0] sm:$0xf]
        %v517 = vld [vmem:[#allocation2 + $0xa4] sm:$0xf]
        %v518 = vld [vmem:[#allocation2 + $0xa8] sm:$0xf]
        %v519 = vld [vmem:[#allocation2 + $0xac] sm:$0xf]
        %v520 = vld [vmem:[#allocation2 + $0xb0] sm:$0xf]
        %v521 = vld [vmem:[#allocation2 + $0xb4] sm:$0xf]
        %v522 = vld [vmem:[#allocation2 + $0xb8] sm:$0xf]
        %v523 = vld [vmem:[#allocation2 + $0xbc] sm:$0xf]
        %v524 = vpack.c.b16 %v324, %v324
        %v526 = vshrl.u32 %v524, 16
        %v528 = vrot.slane %v526, 7
        %v529 = vshll.u32 %v524, 16
        %v531 = vor.u32 %v528, %v529
        %v533 = vsel %vm398, 0, %v531
        %v534 = vrot.slane %v529, 1
        %v535 = vor.u32 %v526, %v534
        %v537 = vsel %vm433, %v535, 0
        %v540 = vunpack.c.l.b16 %v533
        %v541 = vunpack.c.l.b16 %v537
        %s542 = scalar_lea.vmem [#allocation2], 192
        %v543 = vld [vmem:[%s542] sm:$0xf]
        %v544 = vld [vmem:[%s542 + $0x4] sm:$0xf]
        %v545 = vld [vmem:[%s542 + $0x8] sm:$0xf]
        %v546 = vld [vmem:[%s542 + $0xc] sm:$0xf]
        %v547 = vld [vmem:[%s542 + $0x10] sm:$0xf]
        %v548 = vld [vmem:[%s542 + $0x14] sm:$0xf]
        %v549 = vld [vmem:[%s542 + $0x18] sm:$0xf]
        %v550 = vld [vmem:[%s542 + $0x1c] sm:$0xf]
        %v551 = vld [vmem:[%s542 + $0x20] sm:$0xf]
        %v552 = vld [vmem:[%s542 + $0x24] sm:$0xf]
        %v553 = vld [vmem:[%s542 + $0x28] sm:$0xf]
        %v554 = vld [vmem:[%s542 + $0x2c] sm:$0xf]
        %v555 = vld [vmem:[%s542 + $0x30] sm:$0xf]
        %v556 = vld [vmem:[%s542 + $0x34] sm:$0xf]
        %v557 = vld [vmem:[%s542 + $0x38] sm:$0xf]
        %v558 = vld [vmem:[%s542 + $0x3c] sm:$0xf]
        %v559 = vld [vmem:[%s542 + $0x40] sm:$0xf]
        %v560 = vld [vmem:[%s542 + $0x44] sm:$0xf]
        %v561 = vld [vmem:[%s542 + $0x48] sm:$0xf]
        %v562 = vld [vmem:[%s542 + $0x4c] sm:$0xf]
        %v563 = vld [vmem:[%s542 + $0x50] sm:$0xf]
        %v564 = vld [vmem:[%s542 + $0x54] sm:$0xf]
        %v565 = vld [vmem:[%s542 + $0x58] sm:$0xf]
        %v566 = vld [vmem:[%s542 + $0x5c] sm:$0xf]
        %v567 = vld [vmem:[%s542 + $0x60] sm:$0xf]
        %v568 = vld [vmem:[%s542 + $0x64] sm:$0xf]
        %v569 = vld [vmem:[%s542 + $0x68] sm:$0xf]
        %v570 = vld [vmem:[%s542 + $0x6c] sm:$0xf]
        %v571 = vld [vmem:[%s542 + $0x70] sm:$0xf]
        %v572 = vld [vmem:[%s542 + $0x74] sm:$0xf]
        %v573 = vld [vmem:[%s542 + $0x78] sm:$0xf]
        %v574 = vld [vmem:[%s542 + $0x7c] sm:$0xf]
        %v575 = vld [vmem:[%s542 + $0x80] sm:$0xf]
        %v576 = vld [vmem:[%s542 + $0x84] sm:$0xf]
        %v577 = vld [vmem:[%s542 + $0x88] sm:$0xf]
        %v578 = vld [vmem:[%s542 + $0x8c] sm:$0xf]
        %v579 = vld [vmem:[%s542 + $0x90] sm:$0xf]
        %v580 = vld [vmem:[%s542 + $0x94] sm:$0xf]
        %v581 = vld [vmem:[%s542 + $0x98] sm:$0xf]
        %v582 = vld [vmem:[%s542 + $0x9c] sm:$0xf]
        %v583 = vld [vmem:[%s542 + $0xa0] sm:$0xf]
        %v584 = vld [vmem:[%s542 + $0xa4] sm:$0xf]
        %v585 = vld [vmem:[%s542 + $0xa8] sm:$0xf]
        %v586 = vld [vmem:[%s542 + $0xac] sm:$0xf]
        %v587 = vld [vmem:[%s542 + $0xb0] sm:$0xf]
        %v588 = vld [vmem:[%s542 + $0xb4] sm:$0xf]
        %v589 = vld [vmem:[%s542 + $0xb8] sm:$0xf]
        %v590 = vld [vmem:[%s542 + $0xbc] sm:$0xf]
        %v591 = vpack.c.b16 %v464, %v462
        %v592 = vpack.c.b16 %v318, %v317
        %v593 = vpack.c.b16 %v465, %v463
        %v594 = vpack.c.b16 %v468, %v466
        %v595 = vpack.c.b16 %v320, %v319
        %v596 = vpack.c.b16 %v469, %v467
        %v597 = vpack.c.b16 %v472, %v470
        %v598 = vpack.c.b16 %v322, %v321
        %v599 = vpack.c.b16 %v473, %v471
        %v600 = vpack.c.b16 %v540, %v474
        %v601 = vpack.c.b16 %v324, %v323
        %v602 = vpack.c.b16 %v541, %v475
        %v663 = vunpack.c.l.b16 %v543
        %v664 = vunpack.c.l.b16 %v544
        %v665 = vunpack.c.l.b16 %v545
        %v666 = vunpack.c.l.b16 %v546
        %v667 = vunpack.c.l.b16 %v547
        %v668 = vunpack.c.l.b16 %v548
        %v669 = vunpack.c.l.b16 %v549
        %v670 = vunpack.c.l.b16 %v550
        %v671 = vunpack.c.l.b16 %v551
        %v672 = vunpack.c.l.b16 %v552
        %v673 = vunpack.c.l.b16 %v553
        %v674 = vunpack.c.l.b16 %v554
        %v675 = vunpack.c.l.b16 %v555
        %v676 = vunpack.c.l.b16 %v556
        %v677 = vunpack.c.l.b16 %v557
        %v678 = vunpack.c.l.b16 %v558
        %v679 = vunpack.c.l.b16 %v559
        %v680 = vunpack.c.l.b16 %v560
        %v681 = vunpack.c.l.b16 %v561
        %v682 = vunpack.c.l.b16 %v562
        %v683 = vunpack.c.l.b16 %v563
        %v684 = vunpack.c.l.b16 %v564
        %v685 = vunpack.c.l.b16 %v565
        %v686 = vunpack.c.l.b16 %v566
        %v687 = vunpack.c.l.b16 %v567
        %v688 = vunpack.c.l.b16 %v568
        %v689 = vunpack.c.l.b16 %v569
        %v690 = vunpack.c.l.b16 %v570
        %v691 = vunpack.c.l.b16 %v571
        %v692 = vunpack.c.l.b16 %v572
        %v693 = vunpack.c.l.b16 %v573
        %v694 = vunpack.c.l.b16 %v574
        %v695 = vunpack.c.l.b16 %v575
        %v696 = vunpack.c.l.b16 %v576
        %v697 = vunpack.c.l.b16 %v577
        %v698 = vunpack.c.l.b16 %v578
        %v699 = vunpack.c.l.b16 %v579
        %v700 = vunpack.c.l.b16 %v580
        %v701 = vunpack.c.l.b16 %v581
        %v702 = vunpack.c.l.b16 %v582
        %v703 = vunpack.c.l.b16 %v583
        %v704 = vunpack.c.l.b16 %v584
        %v705 = vunpack.c.l.b16 %v585
        %v706 = vunpack.c.l.b16 %v586
        %v707 = vunpack.c.l.b16 %v587
        %v708 = vunpack.c.l.b16 %v588
        %v709 = vunpack.c.l.b16 %v589
        %v710 = vunpack.c.l.b16 %v590
        %v711 = vpack.c.b16 %v664, %v663
        %v712 = vpack.c.b16 %v666, %v665
        %v713 = vpack.c.b16 %v668, %v667
        %v714 = vpack.c.b16 %v670, %v669
        %v715 = vpack.c.b16 %v672, %v671
        %v716 = vpack.c.b16 %v674, %v673
        %v717 = vpack.c.b16 %v676, %v675
        %v718 = vpack.c.b16 %v678, %v677
        %v719 = vpack.c.b16 %v680, %v679
        %v720 = vpack.c.b16 %v682, %v681
        %v721 = vpack.c.b16 %v684, %v683
        %v722 = vpack.c.b16 %v686, %v685
        %v723 = vpack.c.b16 %v688, %v687
        %v724 = vpack.c.b16 %v690, %v689
        %v725 = vpack.c.b16 %v692, %v691
        %v726 = vpack.c.b16 %v694, %v693
        %v727 = vpack.c.b16 %v696, %v695
        %v728 = vpack.c.b16 %v698, %v697
        %v729 = vpack.c.b16 %v700, %v699
        %v730 = vpack.c.b16 %v702, %v701
        %v731 = vpack.c.b16 %v704, %v703
        %v732 = vpack.c.b16 %v706, %v705
        %v733 = vpack.c.b16 %v708, %v707
        %v734 = vpack.c.b16 %v710, %v709
        %759 = vmatprep.subr.bf16.mxu0 0
        %760 = vmatpush1.bf16.msra.mxu0 %v711
        %761 = vmatprep.subr.bf16.mxu0 0
        %762 = vmatpush1.bf16.msra.mxu0 %v712
        %763 = vmatprep.subr.bf16.mxu0 0
        %764 = vmatpush1.bf16.msra.mxu0 %v713
        %765 = vmatprep.subr.bf16.mxu0 0
        %766 = vmatpush1.bf16.msra.mxu0 %v714
        %767 = vmatprep.subr.bf16.mxu0 0
        %768 = vmatpush1.bf16.msra.mxu0 %v715
        %769 = vmatprep.subr.bf16.mxu0 0
        %770 = vmatpush1.bf16.msra.mxu0 %v716
        %771 = vmatprep.subr.bf16.mxu0 0
        %772 = vmatpush1.bf16.msra.mxu0 %v717
        %773 = vmatprep.subr.bf16.mxu0 0
        %774 = vmatpush1.bf16.msra.mxu0 %v718
        %775 = vmatprep.subr.bf16.mxu0 0
        %776 = vmatpush1.bf16.msra.mxu0 %v719
        %777 = vmatprep.subr.bf16.mxu0 0
        %778 = vmatpush1.bf16.msra.mxu0 %v720
        %779 = vmatprep.subr.bf16.mxu0 0
        %780 = vmatpush1.bf16.msra.mxu0 %v721
        %781 = vmatprep.subr.bf16.mxu0 0
        %782 = vmatpush1.bf16.msra.mxu0 %v722
        %783 = vmatprep.subr.bf16.mxu0 0
        %784 = vmatpush1.bf16.msra.mxu0 %v723
        %785 = vmatprep.subr.bf16.mxu0 0
        %786 = vmatpush1.bf16.msra.mxu0 %v724
        %787 = vmatprep.subr.bf16.mxu0 0
        %788 = vmatpush1.bf16.msra.mxu0 %v725
        %789 = vmatprep.subr.bf16.mxu0 0
        %790 = vmatpush1.bf16.msra.mxu0 %v726
        %791 = vmatprep.mubr.bf16.mxu0 %v592
        %792 = vmatmul.mubr.bf16.gmra.mrb[0].mxu0 %v591
        %v793 = vpop.f32.mrb[0].mxu0
        %v794 = vadd.f32 0.0, %v793
        %v795 = vpop.f32.mrb[0].mxu0
        %v796 = vpop.f32.mrb[0].mxu0
        %v797 = vadd.f32 0.0, %v796
        %v798 = vpop.f32.mrb[0].mxu0
        %799 = vmatprep.mubr.bf16.mxu0 %v595
        %800 = vmatmul.mubr.bf16.gmra.mrb[0].mxu0 %v594
        %v801 = vpop.f32.mrb[0].mxu0
        %v802 = vadd.f32 0.0, %v801
        %v803 = vpop.f32.mrb[0].mxu0
        %v804 = vpop.f32.mrb[0].mxu0
        %v805 = vadd.f32 0.0, %v804
        %v806 = vpop.f32.mrb[0].mxu0
        %807 = vmatprep.mubr.bf16.mxu0 %v598
        %808 = vmatmul.mubr.bf16.gmra.mrb[0].mxu0 %v597
        %v809 = vpop.f32.mrb[0].mxu0
        %v810 = vadd.f32 0.0, %v809
        %v811 = vpop.f32.mrb[0].mxu0
        %v812 = vpop.f32.mrb[0].mxu0
        %v813 = vadd.f32 0.0, %v812
        %v814 = vpop.f32.mrb[0].mxu0
        %815 = vmatprep.mubr.bf16.mxu0 %v601
        %816 = vmatmul.mubr.bf16.gmra.mrb[0].mxu0 %v600
        %v817 = vpop.f32.mrb[0].mxu0
        %v818 = vadd.f32 0.0, %v817
        %v819 = vpop.f32.mrb[0].mxu0
        %v820 = vpop.f32.mrb[0].mxu0
        %v821 = vadd.f32 0.0, %v820
        %v822 = vpop.f32.mrb[0].mxu0
        %823 = vdwg.mxu0
        %824 = vmatprep.subr.bf16.mxu0 0
        %825 = vmatpush1.bf16.msra.mxu0 %v727
        %826 = vmatprep.subr.bf16.mxu0 0
        %827 = vmatpush1.bf16.msra.mxu0 %v728
        %828 = vmatprep.subr.bf16.mxu0 0
        %829 = vmatpush1.bf16.msra.mxu0 %v729
        %830 = vmatprep.subr.bf16.mxu0 0
        %831 = vmatpush1.bf16.msra.mxu0 %v730
        %832 = vmatprep.subr.bf16.mxu0 0
        %833 = vmatpush1.bf16.msra.mxu0 %v731
        %834 = vmatprep.subr.bf16.mxu0 0
        %835 = vmatpush1.bf16.msra.mxu0 %v732
        %836 = vmatprep.subr.bf16.mxu0 0
        %837 = vmatpush1.bf16.msra.mxu0 %v733
        %838 = vmatprep.subr.bf16.mxu0 0
        %839 = vmatpush1.bf16.msra.mxu0 %v734
        %840 = vmatprep.subr.bf16.mxu0 0
        %841 = vmatpush1.bf16.msra.mxu0 0
        %842 = vmatprep.subr.bf16.mxu0 0
        %843 = vmatpush1.bf16.msra.mxu0 0
        %844 = vmatprep.subr.bf16.mxu0 0
        %845 = vmatpush1.bf16.msra.mxu0 0
        %846 = vmatprep.subr.bf16.mxu0 0
        %847 = vmatpush1.bf16.msra.mxu0 0
        %848 = vmatprep.subr.bf16.mxu0 0
        %849 = vmatpush1.bf16.msra.mxu0 0
        %850 = vmatprep.subr.bf16.mxu0 0
        %851 = vmatpush1.bf16.msra.mxu0 0
        %852 = vmatprep.subr.bf16.mxu0 0
        %853 = vmatpush1.bf16.msra.mxu0 0
        %854 = vmatprep.subr.bf16.mxu0 0
        %855 = vmatpush1.bf16.msra.mxu0 0
        %856 = vmatprep.mubr.bf16.mxu0 0
        %857 = vmatmul.mubr.bf16.gmra.mrb[0].mxu0 %v593
        %v858 = vpop.f32.mrb[0].mxu0
        %v859 = vadd.f32 %v794, %v858
        %v860 = vpop.f32.mrb[0].mxu0
        %v861 = vpop.f32.mrb[0].mxu0
        %v862 = vadd.f32 %v797, %v861
        %v863 = vpop.f32.mrb[0].mxu0
        %864 = vmatprep.mubr.bf16.mxu0 0
        %865 = vmatmul.mubr.bf16.gmra.mrb[0].mxu0 %v596
        %v866 = vpop.f32.mrb[0].mxu0
        %v867 = vadd.f32 %v802, %v866
        %v868 = vpop.f32.mrb[0].mxu0
        %v869 = vpop.f32.mrb[0].mxu0
        %v870 = vadd.f32 %v805, %v869
        %v871 = vpop.f32.mrb[0].mxu0
        %872 = vmatprep.mubr.bf16.mxu0 0
        %873 = vmatmul.mubr.bf16.gmra.mrb[0].mxu0 %v599
        %v874 = vpop.f32.mrb[0].mxu0
        %v875 = vadd.f32 %v810, %v874
        %v876 = vpop.f32.mrb[0].mxu0
        %v877 = vpop.f32.mrb[0].mxu0
        %v878 = vadd.f32 %v813, %v877
        %v879 = vpop.f32.mrb[0].mxu0
        %880 = vmatprep.mubr.bf16.mxu0 0
        %881 = vmatmul.mubr.bf16.gmra.mrb[0].mxu0 %v602
        %v882 = vpop.f32.mrb[0].mxu0
        %v883 = vadd.f32 %v818, %v882
        %v884 = vpop.f32.mrb[0].mxu0
        %v885 = vpop.f32.mrb[0].mxu0
        %v886 = vadd.f32 %v821, %v885
        %v887 = vpop.f32.mrb[0].mxu0
        %888 = vdwg.mxu0
        %v889 = vpack.c.b16 %v462, %v459
        %v890 = vpack.c.b16 %v317, %v460
        %v891 = vpack.c.b16 %v463, %v461
        %v892 = vpack.c.b16 %v466, %v464
        %v893 = vpack.c.b16 %v319, %v318
        %v894 = vpack.c.b16 %v467, %v465
        %v895 = vpack.c.b16 %v470, %v468
        %v896 = vpack.c.b16 %v321, %v320
        %v897 = vpack.c.b16 %v471, %v469
        %v898 = vpack.c.b16 %v474, %v472
        %v899 = vpack.c.b16 %v323, %v322
        %v900 = vpack.c.b16 %v475, %v473
        %v961 = vunpack.c.l.b16 %v476
        %v962 = vunpack.c.l.b16 %v477
        %v963 = vunpack.c.l.b16 %v478
        %v964 = vunpack.c.l.b16 %v479
        %v965 = vunpack.c.l.b16 %v480
        %v966 = vunpack.c.l.b16 %v481
        %v967 = vunpack.c.l.b16 %v482
        %v968 = vunpack.c.l.b16 %v483
        %v969 = vunpack.c.l.b16 %v484
        %v970 = vunpack.c.l.b16 %v485
        %v971 = vunpack.c.l.b16 %v486
        %v972 = vunpack.c.l.b16 %v487
        %v973 = vunpack.c.l.b16 %v488
        %v974 = vunpack.c.l.b16 %v489
        %v975 = vunpack.c.l.b16 %v490
        %v976 = vunpack.c.l.b16 %v491
        %v977 = vunpack.c.l.b16 %v492
        %v978 = vunpack.c.l.b16 %v493
        %v979 = vunpack.c.l.b16 %v494
        %v980 = vunpack.c.l.b16 %v495
        %v981 = vunpack.c.l.b16 %v496
        %v982 = vunpack.c.l.b16 %v497
        %v983 = vunpack.c.l.b16 %v498
        %v984 = vunpack.c.l.b16 %v499
        %v985 = vunpack.c.l.b16 %v500
        %v986 = vunpack.c.l.b16 %v501
        %v987 = vunpack.c.l.b16 %v502
        %v988 = vunpack.c.l.b16 %v503
        %v989 = vunpack.c.l.b16 %v504
        %v990 = vunpack.c.l.b16 %v505
        %v991 = vunpack.c.l.b16 %v506
        %v992 = vunpack.c.l.b16 %v507
        %v993 = vunpack.c.l.b16 %v508
        %v994 = vunpack.c.l.b16 %v509
        %v995 = vunpack.c.l.b16 %v510
        %v996 = vunpack.c.l.b16 %v511
        %v997 = vunpack.c.l.b16 %v512
        %v998 = vunpack.c.l.b16 %v513
        %v999 = vunpack.c.l.b16 %v514
        %v1000 = vunpack.c.l.b16 %v515
        %v1001 = vunpack.c.l.b16 %v516
        %v1002 = vunpack.c.l.b16 %v517
        %v1003 = vunpack.c.l.b16 %v518
        %v1004 = vunpack.c.l.b16 %v519
        %v1005 = vunpack.c.l.b16 %v520
        %v1006 = vunpack.c.l.b16 %v521
        %v1007 = vunpack.c.l.b16 %v522
        %v1008 = vunpack.c.l.b16 %v523
        %v1009 = vpack.c.b16 %v962, %v961
        %v1010 = vpack.c.b16 %v964, %v963
        %v1011 = vpack.c.b16 %v966, %v965
        %v1012 = vpack.c.b16 %v968, %v967
        %v1013 = vpack.c.b16 %v970, %v969
        %v1014 = vpack.c.b16 %v972, %v971
        %v1015 = vpack.c.b16 %v974, %v973
        %v1016 = vpack.c.b16 %v976, %v975
        %v1017 = vpack.c.b16 %v978, %v977
        %v1018 = vpack.c.b16 %v980, %v979
        %v1019 = vpack.c.b16 %v982, %v981
        %v1020 = vpack.c.b16 %v984, %v983
        %v1021 = vpack.c.b16 %v986, %v985
        %v1022 = vpack.c.b16 %v988, %v987
        %v1023 = vpack.c.b16 %v990, %v989
        %v1024 = vpack.c.b16 %v992, %v991
        %v1025 = vpack.c.b16 %v994, %v993
        %v1026 = vpack.c.b16 %v996, %v995
        %v1027 = vpack.c.b16 %v998, %v997
        %v1028 = vpack.c.b16 %v1000, %v999
        %v1029 = vpack.c.b16 %v1002, %v1001
        %v1030 = vpack.c.b16 %v1004, %v1003
        %v1031 = vpack.c.b16 %v1006, %v1005
        %v1032 = vpack.c.b16 %v1008, %v1007
        %1057 = vmatprep.subr.bf16.mxu0 0
        %1058 = vmatpush1.bf16.msra.mxu0 %v1009
        %1059 = vmatprep.subr.bf16.mxu0 0
        %1060 = vmatpush1.bf16.msra.mxu0 %v1010
        %1061 = vmatprep.subr.bf16.mxu0 0
        %1062 = vmatpush1.bf16.msra.mxu0 %v1011
        %1063 = vmatprep.subr.bf16.mxu0 0
        %1064 = vmatpush1.bf16.msra.mxu0 %v1012
        %1065 = vmatprep.subr.bf16.mxu0 0
        %1066 = vmatpush1.bf16.msra.mxu0 %v1013
        %1067 = vmatprep.subr.bf16.mxu0 0
        %1068 = vmatpush1.bf16.msra.mxu0 %v1014
        %1069 = vmatprep.subr.bf16.mxu0 0
        %1070 = vmatpush1.bf16.msra.mxu0 %v1015
        %1071 = vmatprep.subr.bf16.mxu0 0
        %1072 = vmatpush1.bf16.msra.mxu0 %v1016
        %1073 = vmatprep.subr.bf16.mxu0 0
        %1074 = vmatpush1.bf16.msra.mxu0 %v1017
        %1075 = vmatprep.subr.bf16.mxu0 0
        %1076 = vmatpush1.bf16.msra.mxu0 %v1018
        %1077 = vmatprep.subr.bf16.mxu0 0
        %1078 = vmatpush1.bf16.msra.mxu0 %v1019
        %1079 = vmatprep.subr.bf16.mxu0 0
        %1080 = vmatpush1.bf16.msra.mxu0 %v1020
        %1081 = vmatprep.subr.bf16.mxu0 0
        %1082 = vmatpush1.bf16.msra.mxu0 %v1021
        %1083 = vmatprep.subr.bf16.mxu0 0
        %1084 = vmatpush1.bf16.msra.mxu0 %v1022
        %1085 = vmatprep.subr.bf16.mxu0 0
        %1086 = vmatpush1.bf16.msra.mxu0 %v1023
        %1087 = vmatprep.subr.bf16.mxu0 0
        %1088 = vmatpush1.bf16.msra.mxu0 %v1024
        %1089 = vmatprep.mubr.bf16.mxu0 %v890
        %1090 = vmatmul.mubr.bf16.gmra.mrb[0].mxu0 %v889
        %v1091 = vpop.f32.mrb[0].mxu0
        %v1092 = vadd.f32 %v859, %v1091
        %v1093 = vpop.f32.mrb[0].mxu0
        %v1094 = vpop.f32.mrb[0].mxu0
        %v1095 = vadd.f32 %v862, %v1094
        %v1096 = vpop.f32.mrb[0].mxu0
        %1097 = vmatprep.mubr.bf16.mxu0 %v893
        %1098 = vmatmul.mubr.bf16.gmra.mrb[0].mxu0 %v892
        %v1099 = vpop.f32.mrb[0].mxu0
        %v1100 = vadd.f32 %v867, %v1099
        %v1101 = vpop.f32.mrb[0].mxu0
        %v1102 = vpop.f32.mrb[0].mxu0
        %v1103 = vadd.f32 %v870, %v1102
        %v1104 = vpop.f32.mrb[0].mxu0
        %1105 = vmatprep.mubr.bf16.mxu0 %v896
        %1106 = vmatmul.mubr.bf16.gmra.mrb[0].mxu0 %v895
        %v1107 = vpop.f32.mrb[0].mxu0
        %v1108 = vadd.f32 %v875, %v1107
        %v1109 = vpop.f32.mrb[0].mxu0
        %v1110 = vpop.f32.mrb[0].mxu0
        %v1111 = vadd.f32 %v878, %v1110
        %v1112 = vpop.f32.mrb[0].mxu0
        %1113 = vmatprep.mubr.bf16.mxu0 %v899
        %1114 = vmatmul.mubr.bf16.gmra.mrb[0].mxu0 %v898
        %v1115 = vpop.f32.mrb[0].mxu0
        %v1116 = vadd.f32 %v883, %v1115
        %v1117 = vpop.f32.mrb[0].mxu0
        %v1118 = vpop.f32.mrb[0].mxu0
        %v1119 = vadd.f32 %v886, %v1118
        %v1120 = vpop.f32.mrb[0].mxu0
        %1121 = vdwg.mxu0
        %1122 = vmatprep.subr.bf16.mxu0 0
        %1123 = vmatpush1.bf16.msra.mxu0 %v1025
        %1124 = vmatprep.subr.bf16.mxu0 0
        %1125 = vmatpush1.bf16.msra.mxu0 %v1026
        %1126 = vmatprep.subr.bf16.mxu0 0
        %1127 = vmatpush1.bf16.msra.mxu0 %v1027
        %1128 = vmatprep.subr.bf16.mxu0 0
        %1129 = vmatpush1.bf16.msra.mxu0 %v1028
        %1130 = vmatprep.subr.bf16.mxu0 0
        %1131 = vmatpush1.bf16.msra.mxu0 %v1029
        %1132 = vmatprep.subr.bf16.mxu0 0
        %1133 = vmatpush1.bf16.msra.mxu0 %v1030
        %1134 = vmatprep.subr.bf16.mxu0 0
        %1135 = vmatpush1.bf16.msra.mxu0 %v1031
        %1136 = vmatprep.subr.bf16.mxu0 0
        %1137 = vmatpush1.bf16.msra.mxu0 %v1032
        %1138 = vmatprep.subr.bf16.mxu0 0
        %1139 = vmatpush1.bf16.msra.mxu0 0
        %1140 = vmatprep.subr.bf16.mxu0 0
        %1141 = vmatpush1.bf16.msra.mxu0 0
        %1142 = vmatprep.subr.bf16.mxu0 0
        %1143 = vmatpush1.bf16.msra.mxu0 0
        %1144 = vmatprep.subr.bf16.mxu0 0
        %1145 = vmatpush1.bf16.msra.mxu0 0
        %1146 = vmatprep.subr.bf16.mxu0 0
        %1147 = vmatpush1.bf16.msra.mxu0 0
        %1148 = vmatprep.subr.bf16.mxu0 0
        %1149 = vmatpush1.bf16.msra.mxu0 0
        %1150 = vmatprep.subr.bf16.mxu0 0
        %1151 = vmatpush1.bf16.msra.mxu0 0
        %1152 = vmatprep.subr.bf16.mxu0 0
        %1153 = vmatpush1.bf16.msra.mxu0 0
        %1154 = vmatprep.mubr.bf16.mxu0 0
        %1155 = vmatmul.mubr.bf16.gmra.mrb[0].mxu0 %v891
        %v1156 = vpop.f32.mrb[0].mxu0
        %v1157 = vadd.f32 %v1092, %v1156
        %v1158 = vpop.f32.mrb[0].mxu0
        %v1159 = vpop.f32.mrb[0].mxu0
        %v1160 = vadd.f32 %v1095, %v1159
        %v1161 = vpop.f32.mrb[0].mxu0
        %1162 = vmatprep.mubr.bf16.mxu0 0
        %1163 = vmatmul.mubr.bf16.gmra.mrb[0].mxu0 %v894
        %v1164 = vpop.f32.mrb[0].mxu0
        %v1165 = vadd.f32 %v1100, %v1164
        %v1166 = vpop.f32.mrb[0].mxu0
        %v1167 = vpop.f32.mrb[0].mxu0
        %v1168 = vadd.f32 %v1103, %v1167
        %v1169 = vpop.f32.mrb[0].mxu0
        %1170 = vmatprep.mubr.bf16.mxu0 0
        %1171 = vmatmul.mubr.bf16.gmra.mrb[0].mxu0 %v897
        %v1172 = vpop.f32.mrb[0].mxu0
        %v1173 = vadd.f32 %v1108, %v1172
        %v1174 = vpop.f32.mrb[0].mxu0
        %v1175 = vpop.f32.mrb[0].mxu0
        %v1176 = vadd.f32 %v1111, %v1175
        %v1177 = vpop.f32.mrb[0].mxu0
        %1178 = vmatprep.mubr.bf16.mxu0 0
        %1179 = vmatmul.mubr.bf16.gmra.mrb[0].mxu0 %v900
        %v1180 = vpop.f32.mrb[0].mxu0
        %v1181 = vadd.f32 %v1116, %v1180
        %v1182 = vpop.f32.mrb[0].mxu0
        %v1183 = vpop.f32.mrb[0].mxu0
        %v1184 = vadd.f32 %v1119, %v1183
        %v1185 = vpop.f32.mrb[0].mxu0
        %1186 = vdwg.mxu0
        %v1187 = vpack.c.b16 %v460, %v460
        %v1189 = vshrl.u32 %v1187, 16
        %v1191 = vrot.slane %v1189, 7
        %v1192 = vshll.u32 %v1187, 16
        %v1194 = vor.u32 %v1191, %v1192
        %v1196 = vsel %vm398, 0, %v1194
        %v1197 = vrot.slane %v1192, 1
        %v1198 = vor.u32 %v1189, %v1197
        %v1200 = vsel %vm433, %v1198, 0
        %v1203 = vunpack.c.l.b16 %v1196
        %v1204 = vunpack.c.l.b16 %v1200
        %s1205 = scalar_lea.vmem [#allocation2], 384
        %v1206 = vld [vmem:[%s1205] sm:$0xf]
        %v1207 = vld [vmem:[%s1205 + $0x4] sm:$0xf]
        %v1208 = vld [vmem:[%s1205 + $0x8] sm:$0xf]
        %v1209 = vld [vmem:[%s1205 + $0xc] sm:$0xf]
        %v1210 = vld [vmem:[%s1205 + $0x10] sm:$0xf]
        %v1211 = vld [vmem:[%s1205 + $0x14] sm:$0xf]
        %v1212 = vld [vmem:[%s1205 + $0x18] sm:$0xf]
        %v1213 = vld [vmem:[%s1205 + $0x1c] sm:$0xf]
        %v1214 = vld [vmem:[%s1205 + $0x20] sm:$0xf]
        %v1215 = vld [vmem:[%s1205 + $0x24] sm:$0xf]
        %v1216 = vld [vmem:[%s1205 + $0x28] sm:$0xf]
        %v1217 = vld [vmem:[%s1205 + $0x2c] sm:$0xf]
        %v1218 = vld [vmem:[%s1205 + $0x30] sm:$0xf]
        %v1219 = vld [vmem:[%s1205 + $0x34] sm:$0xf]
        %v1220 = vld [vmem:[%s1205 + $0x38] sm:$0xf]
        %v1221 = vld [vmem:[%s1205 + $0x3c] sm:$0xf]
        %v1222 = vld [vmem:[%s1205 + $0x40] sm:$0xf]
        %v1223 = vld [vmem:[%s1205 + $0x44] sm:$0xf]
        %v1224 = vld [vmem:[%s1205 + $0x48] sm:$0xf]
        %v1225 = vld [vmem:[%s1205 + $0x4c] sm:$0xf]
        %v1226 = vld [vmem:[%s1205 + $0x50] sm:$0xf]
        %v1227 = vld [vmem:[%s1205 + $0x54] sm:$0xf]
        %v1228 = vld [vmem:[%s1205 + $0x58] sm:$0xf]
        %v1229 = vld [vmem:[%s1205 + $0x5c] sm:$0xf]
        %v1230 = vld [vmem:[%s1205 + $0x60] sm:$0xf]
        %v1231 = vld [vmem:[%s1205 + $0x64] sm:$0xf]
        %v1232 = vld [vmem:[%s1205 + $0x68] sm:$0xf]
        %v1233 = vld [vmem:[%s1205 + $0x6c] sm:$0xf]
        %v1234 = vld [vmem:[%s1205 + $0x70] sm:$0xf]
        %v1235 = vld [vmem:[%s1205 + $0x74] sm:$0xf]
        %v1236 = vld [vmem:[%s1205 + $0x78] sm:$0xf]
        %v1237 = vld [vmem:[%s1205 + $0x7c] sm:$0xf]
        %v1238 = vld [vmem:[%s1205 + $0x80] sm:$0xf]
        %v1239 = vld [vmem:[%s1205 + $0x84] sm:$0xf]
        %v1240 = vld [vmem:[%s1205 + $0x88] sm:$0xf]
        %v1241 = vld [vmem:[%s1205 + $0x8c] sm:$0xf]
        %v1242 = vld [vmem:[%s1205 + $0x90] sm:$0xf]
        %v1243 = vld [vmem:[%s1205 + $0x94] sm:$0xf]
        %v1244 = vld [vmem:[%s1205 + $0x98] sm:$0xf]
        %v1245 = vld [vmem:[%s1205 + $0x9c] sm:$0xf]
        %v1246 = vld [vmem:[%s1205 + $0xa0] sm:$0xf]
        %v1247 = vld [vmem:[%s1205 + $0xa4] sm:$0xf]
        %v1248 = vld [vmem:[%s1205 + $0xa8] sm:$0xf]
        %v1249 = vld [vmem:[%s1205 + $0xac] sm:$0xf]
        %v1250 = vld [vmem:[%s1205 + $0xb0] sm:$0xf]
        %v1251 = vld [vmem:[%s1205 + $0xb4] sm:$0xf]
        %v1252 = vld [vmem:[%s1205 + $0xb8] sm:$0xf]
        %v1253 = vld [vmem:[%s1205 + $0xbc] sm:$0xf]
        %v1254 = vpack.c.b16 %v1203, %v540
        %v1255 = vpack.c.b16 %v460, %v324
        %v1256 = vpack.c.b16 %v1204, %v541
        %v1308 = vunpack.c.l.b16 %v1206
        %v1309 = vunpack.c.l.b16 %v1207
        %v1310 = vunpack.c.l.b16 %v1208
        %v1311 = vunpack.c.l.b16 %v1209
        %v1312 = vunpack.c.l.b16 %v1210
        %v1313 = vunpack.c.l.b16 %v1211
        %v1314 = vunpack.c.l.b16 %v1212
        %v1315 = vunpack.c.l.b16 %v1213
        %v1316 = vunpack.c.l.b16 %v1214
        %v1317 = vunpack.c.l.b16 %v1215
        %v1318 = vunpack.c.l.b16 %v1216
        %v1319 = vunpack.c.l.b16 %v1217
        %v1320 = vunpack.c.l.b16 %v1218
        %v1321 = vunpack.c.l.b16 %v1219
        %v1322 = vunpack.c.l.b16 %v1220
        %v1323 = vunpack.c.l.b16 %v1221
        %v1324 = vunpack.c.l.b16 %v1222
        %v1325 = vunpack.c.l.b16 %v1223
        %v1326 = vunpack.c.l.b16 %v1224
        %v1327 = vunpack.c.l.b16 %v1225
        %v1328 = vunpack.c.l.b16 %v1226
        %v1329 = vunpack.c.l.b16 %v1227
        %v1330 = vunpack.c.l.b16 %v1228
        %v1331 = vunpack.c.l.b16 %v1229
        %v1332 = vunpack.c.l.b16 %v1230
        %v1333 = vunpack.c.l.b16 %v1231
        %v1334 = vunpack.c.l.b16 %v1232
        %v1335 = vunpack.c.l.b16 %v1233
        %v1336 = vunpack.c.l.b16 %v1234
        %v1337 = vunpack.c.l.b16 %v1235
        %v1338 = vunpack.c.l.b16 %v1236
        %v1339 = vunpack.c.l.b16 %v1237
        %v1340 = vunpack.c.l.b16 %v1238
        %v1341 = vunpack.c.l.b16 %v1239
        %v1342 = vunpack.c.l.b16 %v1240
        %v1343 = vunpack.c.l.b16 %v1241
        %v1344 = vunpack.c.l.b16 %v1242
        %v1345 = vunpack.c.l.b16 %v1243
        %v1346 = vunpack.c.l.b16 %v1244
        %v1347 = vunpack.c.l.b16 %v1245
        %v1348 = vunpack.c.l.b16 %v1246
        %v1349 = vunpack.c.l.b16 %v1247
        %v1350 = vunpack.c.l.b16 %v1248
        %v1351 = vunpack.c.l.b16 %v1249
        %v1352 = vunpack.c.l.b16 %v1250
        %v1353 = vunpack.c.l.b16 %v1251
        %v1354 = vunpack.c.l.b16 %v1252
        %v1355 = vunpack.c.l.b16 %v1253
        %v1356 = vpack.c.b16 %v1309, %v1308
        %v1357 = vpack.c.b16 %v1311, %v1310
        %v1358 = vpack.c.b16 %v1313, %v1312
        %v1359 = vpack.c.b16 %v1315, %v1314
        %v1360 = vpack.c.b16 %v1317, %v1316
        %v1361 = vpack.c.b16 %v1319, %v1318
        %v1362 = vpack.c.b16 %v1321, %v1320
        %v1363 = vpack.c.b16 %v1323, %v1322
        %v1364 = vpack.c.b16 %v1325, %v1324
        %v1365 = vpack.c.b16 %v1327, %v1326
        %v1366 = vpack.c.b16 %v1329, %v1328
        %v1367 = vpack.c.b16 %v1331, %v1330
        %v1368 = vpack.c.b16 %v1333, %v1332
        %v1369 = vpack.c.b16 %v1335, %v1334
        %v1370 = vpack.c.b16 %v1337, %v1336
        %v1371 = vpack.c.b16 %v1339, %v1338
        %v1372 = vpack.c.b16 %v1341, %v1340
        %v1373 = vpack.c.b16 %v1343, %v1342
        %v1374 = vpack.c.b16 %v1345, %v1344
        %v1375 = vpack.c.b16 %v1347, %v1346
        %v1376 = vpack.c.b16 %v1349, %v1348
        %v1377 = vpack.c.b16 %v1351, %v1350
        %v1378 = vpack.c.b16 %v1353, %v1352
        %v1379 = vpack.c.b16 %v1355, %v1354
        %1404 = vmatprep.subr.bf16.mxu0 0
        %1405 = vmatpush1.bf16.msra.mxu0 %v1356
        %1406 = vmatprep.subr.bf16.mxu0 0
        %1407 = vmatpush1.bf16.msra.mxu0 %v1357
        %1408 = vmatprep.subr.bf16.mxu0 0
        %1409 = vmatpush1.bf16.msra.mxu0 %v1358
        %1410 = vmatprep.subr.bf16.mxu0 0
        %1411 = vmatpush1.bf16.msra.mxu0 %v1359
        %1412 = vmatprep.subr.bf16.mxu0 0
        %1413 = vmatpush1.bf16.msra.mxu0 %v1360
        %1414 = vmatprep.subr.bf16.mxu0 0
        %1415 = vmatpush1.bf16.msra.mxu0 %v1361
        %1416 = vmatprep.subr.bf16.mxu0 0
        %1417 = vmatpush1.bf16.msra.mxu0 %v1362
        %1418 = vmatprep.subr.bf16.mxu0 0
        %1419 = vmatpush1.bf16.msra.mxu0 %v1363
        %1420 = vmatprep.subr.bf16.mxu0 0
        %1421 = vmatpush1.bf16.msra.mxu0 %v1364
        %1422 = vmatprep.subr.bf16.mxu0 0
        %1423 = vmatpush1.bf16.msra.mxu0 %v1365
        %1424 = vmatprep.subr.bf16.mxu0 0
        %1425 = vmatpush1.bf16.msra.mxu0 %v1366
        %1426 = vmatprep.subr.bf16.mxu0 0
        %1427 = vmatpush1.bf16.msra.mxu0 %v1367
        %1428 = vmatprep.subr.bf16.mxu0 0
        %1429 = vmatpush1.bf16.msra.mxu0 %v1368
        %1430 = vmatprep.subr.bf16.mxu0 0
        %1431 = vmatpush1.bf16.msra.mxu0 %v1369
        %1432 = vmatprep.subr.bf16.mxu0 0
        %1433 = vmatpush1.bf16.msra.mxu0 %v1370
        %1434 = vmatprep.subr.bf16.mxu0 0
        %1435 = vmatpush1.bf16.msra.mxu0 %v1371
        %1436 = vmatprep.mubr.bf16.mxu0 %v893
        %1437 = vmatmul.mubr.bf16.gmra.mrb[0].mxu0 %v892
        %v1438 = vpop.f32.mrb[0].mxu0
        %v1439 = vadd.f32 0.0, %v1438
        %v1440 = vpop.f32.mrb[0].mxu0
        %v1441 = vpop.f32.mrb[0].mxu0
        %v1442 = vadd.f32 0.0, %v1441
        %v1443 = vpop.f32.mrb[0].mxu0
        %1444 = vmatprep.mubr.bf16.mxu0 %v896
        %1445 = vmatmul.mubr.bf16.gmra.mrb[0].mxu0 %v895
        %v1446 = vpop.f32.mrb[0].mxu0
        %v1447 = vadd.f32 0.0, %v1446
        %v1448 = vpop.f32.mrb[0].mxu0
        %v1449 = vpop.f32.mrb[0].mxu0
        %v1450 = vadd.f32 0.0, %v1449
        %v1451 = vpop.f32.mrb[0].mxu0
        %1452 = vmatprep.mubr.bf16.mxu0 %v899
        %1453 = vmatmul.mubr.bf16.gmra.mrb[0].mxu0 %v898
        %v1454 = vpop.f32.mrb[0].mxu0
        %v1455 = vadd.f32 0.0, %v1454
        %v1456 = vpop.f32.mrb[0].mxu0
        %v1457 = vpop.f32.mrb[0].mxu0
        %v1458 = vadd.f32 0.0, %v1457
        %v1459 = vpop.f32.mrb[0].mxu0
        %1460 = vmatprep.mubr.bf16.mxu0 %v1255
        %1461 = vmatmul.mubr.bf16.gmra.mrb[0].mxu0 %v1254
        %v1462 = vpop.f32.mrb[0].mxu0
        %v1463 = vadd.f32 0.0, %v1462
        %v1464 = vpop.f32.mrb[0].mxu0
        %v1465 = vpop.f32.mrb[0].mxu0
        %v1466 = vadd.f32 0.0, %v1465
        %v1467 = vpop.f32.mrb[0].mxu0
        %1468 = vdwg.mxu0
        %1469 = vmatprep.subr.bf16.mxu0 0
        %1470 = vmatpush1.bf16.msra.mxu0 %v1372
        %1471 = vmatprep.subr.bf16.mxu0 0
        %1472 = vmatpush1.bf16.msra.mxu0 %v1373
        %1473 = vmatprep.subr.bf16.mxu0 0
        %1474 = vmatpush1.bf16.msra.mxu0 %v1374
        %1475 = vmatprep.subr.bf16.mxu0 0
        %1476 = vmatpush1.bf16.msra.mxu0 %v1375
        %1477 = vmatprep.subr.bf16.mxu0 0
        %1478 = vmatpush1.bf16.msra.mxu0 %v1376
        %1479 = vmatprep.subr.bf16.mxu0 0
        %1480 = vmatpush1.bf16.msra.mxu0 %v1377
        %1481 = vmatprep.subr.bf16.mxu0 0
        %1482 = vmatpush1.bf16.msra.mxu0 %v1378
        %1483 = vmatprep.subr.bf16.mxu0 0
        %1484 = vmatpush1.bf16.msra.mxu0 %v1379
        %1485 = vmatprep.subr.bf16.mxu0 0
        %1486 = vmatpush1.bf16.msra.mxu0 0
        %1487 = vmatprep.subr.bf16.mxu0 0
        %1488 = vmatpush1.bf16.msra.mxu0 0
        %1489 = vmatprep.subr.bf16.mxu0 0
        %1490 = vmatpush1.bf16.msra.mxu0 0
        %1491 = vmatprep.subr.bf16.mxu0 0
        %1492 = vmatpush1.bf16.msra.mxu0 0
        %1493 = vmatprep.subr.bf16.mxu0 0
        %1494 = vmatpush1.bf16.msra.mxu0 0
        %1495 = vmatprep.subr.bf16.mxu0 0
        %1496 = vmatpush1.bf16.msra.mxu0 0
        %1497 = vmatprep.subr.bf16.mxu0 0
        %1498 = vmatpush1.bf16.msra.mxu0 0
        %1499 = vmatprep.subr.bf16.mxu0 0
        %1500 = vmatpush1.bf16.msra.mxu0 0
        %1501 = vmatprep.mubr.bf16.mxu0 0
        %1502 = vmatmul.mubr.bf16.gmra.mrb[0].mxu0 %v894
        %v1503 = vpop.f32.mrb[0].mxu0
        %v1504 = vadd.f32 %v1439, %v1503
        %v1505 = vpop.f32.mrb[0].mxu0
        %v1506 = vpop.f32.mrb[0].mxu0
        %v1507 = vadd.f32 %v1442, %v1506
        %v1508 = vpop.f32.mrb[0].mxu0
        %1509 = vmatprep.mubr.bf16.mxu0 0
        %1510 = vmatmul.mubr.bf16.gmra.mrb[0].mxu0 %v897
        %v1511 = vpop.f32.mrb[0].mxu0
        %v1512 = vadd.f32 %v1447, %v1511
        %v1513 = vpop.f32.mrb[0].mxu0
        %v1514 = vpop.f32.mrb[0].mxu0
        %v1515 = vadd.f32 %v1450, %v1514
        %v1516 = vpop.f32.mrb[0].mxu0
        %1517 = vmatprep.mubr.bf16.mxu0 0
        %1518 = vmatmul.mubr.bf16.gmra.mrb[0].mxu0 %v900
        %v1519 = vpop.f32.mrb[0].mxu0
        %v1520 = vadd.f32 %v1455, %v1519
        %v1521 = vpop.f32.mrb[0].mxu0
        %v1522 = vpop.f32.mrb[0].mxu0
        %v1523 = vadd.f32 %v1458, %v1522
        %v1524 = vpop.f32.mrb[0].mxu0
        %1525 = vmatprep.mubr.bf16.mxu0 0
        %1526 = vmatmul.mubr.bf16.gmra.mrb[0].mxu0 %v1256
        %v1527 = vpop.f32.mrb[0].mxu0
        %v1528 = vadd.f32 %v1463, %v1527
        %v1529 = vpop.f32.mrb[0].mxu0
        %v1530 = vpop.f32.mrb[0].mxu0
        %v1531 = vadd.f32 %v1466, %v1530
        %v1532 = vpop.f32.mrb[0].mxu0
        %1533 = vdwg.mxu0
        %v1534 = vadd.f32 %v1157, %v1504
        %v1535 = vadd.f32 %v1160, %v1507
        %v1536 = vadd.f32 %v1165, %v1512
        %v1537 = vadd.f32 %v1168, %v1515
        %v1538 = vadd.f32 %v1173, %v1520
        %v1539 = vadd.f32 %v1176, %v1523
        %v1540 = vadd.f32 %v1181, %v1528
        %v1541 = vadd.f32 %v1184, %v1531
        %v1542 = vadd.f32 %v1534, %v1535
        %v1543 = vadd.f32 %v1542, %v1536
        %v1544 = vadd.f32 %v1543, %v1537
        %v1545 = vadd.f32 %v1544, %v1538
        %v1546 = vadd.f32 %v1545, %v1539
        %v1547 = vadd.f32 %v1546, %v1540
        %v1548 = vadd.f32 %v1547, %v1541
        %v1549 = vrot.slane %v1548, 4
        %v1550 = vadd.f32 %v1548, %v1549
        %v1551 = vrot.slane %v1550, 2
        %v1552 = vadd.f32 %v1550, %v1551
        %v1553 = vrot.slane %v1552, 1
        %v1554 = vadd.f32 %v1552, %v1553
        %v1555 = vmul.f32 %v1534, %v1534
        %v1556 = vmul.f32 %v1535, %v1535
        %v1557 = vmul.f32 %v1536, %v1536
        %v1558 = vmul.f32 %v1537, %v1537
        %v1559 = vmul.f32 %v1538, %v1538
        %v1560 = vmul.f32 %v1539, %v1539
        %v1561 = vmul.f32 %v1540, %v1540
        %v1562 = vmul.f32 %v1541, %v1541
        %v1563 = vadd.f32 %v1555, %v1556
        %v1564 = vadd.f32 %v1563, %v1557
        %v1565 = vadd.f32 %v1564, %v1558
        %v1566 = vadd.f32 %v1565, %v1559
        %v1567 = vadd.f32 %v1566, %v1560
        %v1568 = vadd.f32 %v1567, %v1561
        %v1569 = vadd.f32 %v1568, %v1562
        %v1570 = vrot.slane %v1569, 4
        %v1571 = vadd.f32 %v1569, %v1570
        %v1572 = vrot.slane %v1571, 2
        %v1573 = vadd.f32 %v1571, %v1572
        %v1574 = vrot.slane %v1573, 1
        %v1575 = vadd.f32 %v1573, %v1574
        %vm1576 = vcmask 1040384
        %v1577 = vsel %vm1576, %v1554, %v1575
        %1578 = vst [vmem:[%s253] sm:$0x3] %v1577
        %v1579 = vpack.c.bf16 %v1535, %v1534
        %v1580 = vpack.c.bf16 %v1537, %v1536
        %v1581 = vpack.c.bf16 %v1539, %v1538
        %v1582 = vpack.c.bf16 %v1541, %v1540
        %v1587 = vunpack.c.l.b16 %v1579
        %v1588 = vunpack.c.h.b16 %v1579
        %v1589 = vunpack.c.l.b16 %v1580
        %v1590 = vunpack.c.h.b16 %v1580
        %v1591 = vunpack.c.l.b16 %v1581
        %v1592 = vunpack.c.h.b16 %v1581
        %v1593 = vunpack.c.l.b16 %v1582
        %v1594 = vunpack.c.h.b16 %v1582
        %v1595 = vpack.c.b16 %v1587, %v1587
        %v1596 = vpack.c.b16 %v1588, %v1588
        %v1597 = vpack.c.b16 %v1589, %v1589
        %v1598 = vpack.c.b16 %v1590, %v1590
        %v1599 = vpack.c.b16 %v1591, %v1591
        %v1600 = vpack.c.b16 %v1592, %v1592
        %v1601 = vpack.c.b16 %v1593, %v1593
        %v1602 = vpack.c.b16 %v1594, %v1594
        %1611 = vst [vmem:[%s248] sm:$0xf] %v1595
        %1612 = vst [vmem:[%s248 + $0x4] sm:$0xf] %v1596
        %1613 = vst [vmem:[%s248 + $0x8] sm:$0xf] %v1597
        %1614 = vst [vmem:[%s248 + $0xc] sm:$0xf] %v1598
        %1615 = vst [vmem:[%s248 + $0x10] sm:$0xf] %v1599
        %1616 = vst [vmem:[%s248 + $0x14] sm:$0xf] %v1600
        %1617 = vst [vmem:[%s248 + $0x18] sm:$0xf] %v1601
        %1618 = vst [vmem:[%s248 + $0x1c] sm:$0xf] %v1602
        %s1619 = smul.u32 8, %s18
        %p1620 = scmp.lt.s32.totalorder %s1619, 15
        %s1621 = scalar_select %p1620, %s1619, 15
        %s1622 = smul.addr %s1621, 4
        %s1623 = scalar_lea.vmem %s4, %s1622
        %p1624 = scmp.lt.s32.totalorder %s18, 1
        %s1625 = scalar_select %p1624, %s18, 1
        %s1626 = smul.addr %s1625, 2
        %s1627 = scalar_lea.vmem %s5, %s1626
        // Predicated region
        $region41: #{simkd_forward.5} parent=35 // pred_check
          %p1628 = pneg %p125
        $region42: #{simkd_forward.5} parent=35 // pred_check_branch
          %1630 = sbr.rel (%p1628) target = $region44
        $region43: #{simkd_forward.5} parent=35 // pred_region
          %s1631 = smul.u32 8, %s18
        $region44: #{simkd_forward.5} parent=35 // pred_fallthru
          _
        // Predicated region
        $region45: #{simkd_forward.5} parent=35 // pred_check
          %p1632 = pneg %p151
        $region46: #{simkd_forward.5} parent=35 // pred_check_branch
          %1634 = sbr.rel (%p1632) target = $region48
        $region47: #{simkd_forward.5} parent=35 // pred_region
          _
        $region48: #{simkd_forward.5} parent=35 // pred_fallthru
          _
      $region36: #{simkd_forward.5} parent=5 // pred_fallthru
        _
      %p1635 = scmp.le.s32.totalorder 2, %s13
      // Predicated region
      $region49: #{simkd_forward.5} parent=5 // pred_check
        %p1636 = pneg %p1635
      $region50: #{simkd_forward.5} parent=5 // pred_check_branch
        %1638 = sbr.rel (%p1636) target = $region52
      $region51: #{simkd_forward.5} parent=5 // pred_region
        %s1639 = ssub.s32 %s13, 2
        // Predicated region
        $region53: #{simkd_forward.5} parent=51 // pred_check
          %p1640 = pneg %p131
        $region54: #{simkd_forward.5} parent=51 // pred_check_branch
          %1642 = sbr.rel (%p1640) target = $region56
        $region55: #{simkd_forward.5} parent=51 // pred_region
          %s1643 = smul.u32 8, %s19
          %p1644 = scmp.lt.s32.totalorder %s1643, 15
          %s1645 = scalar_select %p1644, %s1643, 15
          %s1646 = smul.addr %s1645, 4
          %s1647 = scalar_lea.vmem %s4, %s1646
        $region56: #{simkd_forward.5} parent=51 // pred_fallthru
          _
        // Predicated region
        $region57: #{simkd_forward.5} parent=51 // pred_check
          %p1648 = pneg %p157
        $region58: #{simkd_forward.5} parent=51 // pred_check_branch
          %1650 = sbr.rel (%p1648) target = $region60
        $region59: #{simkd_forward.5} parent=51 // pred_region
          %p1651 = scmp.lt.s32.totalorder %s19, 1
          %s1652 = scalar_select %p1651, %s19, 1
          %s1653 = smul.addr %s1652, 2
          %s1654 = scalar_lea.vmem %s5, %s1653
        $region60: #{simkd_forward.5} parent=51 // pred_fallthru
          _
      $region52: #{simkd_forward.5} parent=5 // pred_fallthru
        _
    $region6: #{simkd_forward.5} parent=1 // loop_footer
      %s17 = sadd.s32 1, %s13
    $region7: #{simkd_forward.5} parent=1 // loop_footer_branch
      %12 = sbr.rel target = $region3
    $region8: #{simkd_forward.5} parent=1 // loop_exit
      _
    %1655 = vsyncpa [#allocation3], 1
    %s1656 = scalar_lea.sflag [#allocation3], 1
    %1657 = vsyncpa %s1656, 1

</llo_original>
